<compile_context>
chip_gen: v7x
topology: tpu7x:2x2x1
jax: 0.10.0
libtpu: 0.0.40
codegen_flags: <defaults>
</compile_context>

<pallas_src>
import functools
import math

import jax
import jax.numpy as jnp
from jax import lax
from jax.experimental import pallas as pl
from jax.experimental.pallas import tpu as pltpu

LN_EPS = 1e-5          # torch.nn.LayerNorm default eps
MASK_NEG = 100000.0    # matches `attn * mask - 100000.0 * ~mask`


def cross_attention_kernel(x_ref, y_ref, mask_ref,
                           ln_g_ref, ln_b_ref,
                           wq_ref, bq_ref, wk_ref, bk_ref, wv_ref, bv_ref,
                           wo_ref, bo_ref,
                           out_ref, *, num_head):
    TB, S, H = x_ref.shape
    _, T, _ = y_ref.shape
    A = wq_ref.shape[1]
    hd = A // num_head
    scale = 1.0 / math.sqrt(hd)
    bf16 = jnp.bfloat16
    f32 = jnp.float32

    # ---- LayerNorm(y) in f32, single-pass statistics. ----------------------
    y = y_ref[...].reshape(TB * T, H).astype(f32)
    mu = jnp.mean(y, axis=-1, keepdims=True)
    var = jnp.mean(y * y, axis=-1, keepdims=True) - mu * mu
    y_ln = (y - mu) * lax.rsqrt(var + LN_EPS) * ln_g_ref[...] + ln_b_ref[...]

    x2 = x_ref[...].reshape(TB * S, H)

    # ---- Q/K/V projections: bf16 operands on the MXU, f32 accumulation. ----
    q = jnp.dot(x2.astype(bf16), wq_ref[...],
                preferred_element_type=f32) + bq_ref[...]          # (TB*S, A)
    k = jnp.dot(y_ln.astype(bf16), wk_ref[...],
                preferred_element_type=f32) + bk_ref[...]          # (TB*T, A)
    v = jnp.dot(y_ln.astype(bf16), wv_ref[...],
                preferred_element_type=f32) + bv_ref[...]          # (TB*T, A)

    q = q.astype(bf16)
    k = k.astype(bf16)
    v = v.astype(bf16)

    mask = mask_ref[...].astype(f32)                               # (TB, 1, T)

    # ---- Per (batch, head) attention; static loops fully unrolled. ---------
    for b in range(TB):
        m_b = mask[b]                                              # (1, T)
        q_b = q[b * S:(b + 1) * S, :]                              # (S, A)
        k_b = k[b * T:(b + 1) * T, :]                              # (T, A)
        v_b = v[b * T:(b + 1) * T, :]                              # (T, A)
        acc = jnp.zeros((S, H), f32)
        for h in range(num_head):
            lo, hi = h * hd, (h + 1) * hd
            qh = q_b[:, lo:hi]                                     # (S, hd)
            kh = k_b[:, lo:hi]                                     # (T, hd)
            vh = v_b[:, lo:hi]                                     # (T, hd)
            # scores = q @ k^T / sqrt(hd)  (contract on hd of both operands)
            s = lax.dot_general(qh, kh, (((1,), (1,)), ((), ())),
                                preferred_element_type=f32) * scale     # (S, T)
            s = s * m_b - MASK_NEG * (1.0 - m_b)
            s = s - jnp.max(s, axis=-1, keepdims=True)
            e = jnp.exp(s)
            p = e / jnp.sum(e, axis=-1, keepdims=True)
            oh = jnp.dot(p.astype(bf16), vh,
                         preferred_element_type=f32)               # (S, hd)
            # Fold the head into the output projection (no lane concat).
            acc = acc + jnp.dot(oh.astype(bf16), wo_ref[lo:hi, :],
                                preferred_element_type=f32)        # (S, H)
        out_ref[b] = (acc + bo_ref[...]).astype(out_ref.dtype)


def cross_attention_forward(x, y, mask, params, *, num_head, batch_tile=None):
    B, S, H = x.shape
    _, T, _ = y.shape
    A = params["wq_t"].shape[1]
    assert A % num_head == 0

    if batch_tile is None:
        # >1 batch element per grid step (amortize per-step overhead, grow MXU
        # M) while keeping the grid extent even for v7x's two TensorCores.
        batch_tile = 2 if (B % 2 == 0 and B >= 4) else 1
    TB = batch_tile
    assert B % TB == 0
    grid = (B // TB,)

    mask3 = mask.astype(jnp.float32)[:, None, :]                   # (B, 1, T)

    # bf16 weights for the MXU; biases / LN params stay f32.
    wq = params["wq_t"].astype(jnp.bfloat16)
    wk = params["wk_t"].astype(jnp.bfloat16)
    wv = params["wv_t"].astype(jnp.bfloat16)
    wo = params["wo_t"].astype(jnp.bfloat16)

    def const(shape):
        return pl.BlockSpec(shape, lambda b: (0,) * len(shape))

    kernel = pl.pallas_call(
        functools.partial(cross_attention_kernel, num_head=num_head),
        out_shape=jax.ShapeDtypeStruct((B, S, H), jnp.float32),
        grid_spec=pltpu.PrefetchScalarGridSpec(
            num_scalar_prefetch=0,
            grid=grid,
            in_specs=[
                pl.BlockSpec((TB, S, H), lambda b: (b, 0, 0)),     # x
                pl.BlockSpec((TB, T, H), lambda b: (b, 0, 0)),     # y
                pl.BlockSpec((TB, 1, T), lambda b: (b, 0, 0)),     # mask
                const((1, H)), const((1, H)),                      # LN gamma/beta
                const((H, A)), const((1, A)),                      # Wq^T, bq
                const((H, A)), const((1, A)),                      # Wk^T, bk
                const((H, A)), const((1, A)),                      # Wv^T, bv
                const((A, H)), const((1, H)),                      # Wo^T, bo
            ],
            out_specs=pl.BlockSpec((TB, S, H), lambda b: (b, 0, 0)),
        ),
        compiler_params=pltpu.CompilerParams(
            dimension_semantics=("parallel",)),
    )
    return kernel(x, y, mask3,
                  params["ln_g"], params["ln_b"],
                  wq, params["bq"], wk, params["bk"], wv, params["bv"],
                  wo, params["bo"])


def init_params(key, hidden, attention):
    ks = jax.random.split(key, 10)

    def nrm(k, shape, scale):
        return (scale * jax.random.normal(k, shape)).astype(jnp.float32)

    return dict(
        ln_g=1.0 + nrm(ks[0], (1, hidden), 0.05),
        ln_b=nrm(ks[1], (1, hidden), 0.05),
        wq_t=nrm(ks[2], (hidden, attention), 0.05),
        bq=nrm(ks[3], (1, attention), 0.05),
        wk_t=nrm(ks[4], (hidden, attention), 0.05),
        bk=nrm(ks[5], (1, attention), 0.05),
        wv_t=nrm(ks[6], (hidden, attention), 0.05),
        bv=nrm(ks[7], (1, attention), 0.05),
        wo_t=nrm(ks[8], (attention, hidden), 0.05),
        bo=nrm(ks[9], (1, hidden), 0.05),
    )


def reference_forward(x, y, mask, p, *, num_head):
    """Pure-JAX f32 reference mirroring the PyTorch CrossAttention forward."""
    B, S, H = x.shape
    _, T, _ = y.shape
    A = p["wq_t"].shape[1]
    hd = A // num_head

    mu = y.mean(-1, keepdims=True)
    var = ((y - mu) ** 2).mean(-1, keepdims=True)
    y_ln = (y - mu) / jnp.sqrt(var + LN_EPS) * p["ln_g"][0] + p["ln_b"][0]

    q = x @ p["wq_t"] + p["bq"][0]
    k = y_ln @ p["wk_t"] + p["bk"][0]
    v = y_ln @ p["wv_t"] + p["bv"][0]

    q = q.reshape(B, S, num_head, hd).transpose(0, 2, 1, 3)
    k = k.reshape(B, T, num_head, hd).transpose(0, 2, 1, 3)
    v = v.reshape(B, T, num_head, hd).transpose(0, 2, 1, 3)

    attn = jnp.einsum("bnsh,bnth->bnst", q, k) / math.sqrt(hd)
    m = mask.astype(jnp.float32)[:, None, None, :]
    attn = attn * m - MASK_NEG * (1.0 - m)
    attn = jax.nn.softmax(attn, axis=-1)
    o = jnp.einsum("bnst,bnth->bnsh", attn, v)
    o = o.transpose(0, 2, 1, 3).reshape(B, S, A)
    return o @ p["wo_t"] + p["bo"][0]


if __name__ == "__main__":
    B, SRC, TGT = 4, 8, 16
    HIDDEN, ATTENTION, NUM_HEAD = 128, 128, 4

    key = jax.random.PRNGKey(0)
    kx, ky, kp = jax.random.split(key, 3)
    x = jax.random.normal(kx, (B, SRC, HIDDEN), dtype=jnp.float32)
    y = jax.random.normal(ky, (B, TGT, HIDDEN), dtype=jnp.float32)
    lens = jnp.array([TGT, TGT - 5, 3, TGT - 1])
    mask = (jnp.arange(TGT)[None, :] < lens[:, None]).astype(jnp.float32)

    params = init_params(kp, HIDDEN, ATTENTION)

    out = cross_attention_forward(x, y, mask, params, num_head=NUM_HEAD)
    jax.block_until_ready(out)

    ref = reference_forward(x, y, mask, params, num_head=NUM_HEAD)
    assert out.shape == (B, SRC, HIDDEN)
    assert jnp.allclose(out, ref, atol=2e-2, rtol=2e-2), \
        float(jnp.max(jnp.abs(out - ref)))

    print("KERNEL_OK")
</pallas_src>

<mosaic_0001>
module attributes {stable_mosaic.version = 11 : i64} {
  func.func @cross_attention_kernel(%arg0: i32, %arg1: memref<2x8x128xf32, #tpu.memory_space<vmem>>, %arg2: memref<2x16x128xf32, #tpu.memory_space<vmem>>, %arg3: memref<2x1x16xf32, #tpu.memory_space<vmem>>, %arg4: memref<1x128xf32, #tpu.memory_space<vmem>>, %arg5: memref<1x128xf32, #tpu.memory_space<vmem>>, %arg6: memref<128x128xbf16, #tpu.memory_space<vmem>>, %arg7: memref<1x128xf32, #tpu.memory_space<vmem>>, %arg8: memref<128x128xbf16, #tpu.memory_space<vmem>>, %arg9: memref<1x128xf32, #tpu.memory_space<vmem>>, %arg10: memref<128x128xbf16, #tpu.memory_space<vmem>>, %arg11: memref<1x128xf32, #tpu.memory_space<vmem>>, %arg12: memref<128x128xbf16, #tpu.memory_space<vmem>>, %arg13: memref<1x128xf32, #tpu.memory_space<vmem>>, %arg14: memref<2x8x128xf32, #tpu.memory_space<vmem>>) attributes {dimension_semantics = [#tpu.dimension_semantics<parallel>], iteration_bounds = array<i64: 2>, scalar_prefetch = 0 : i64, scratch_operands = 0 : i64, tpu.core_type = #tpu.core_type<tc>, window_params = [{transform_indices = @transform_0, window_bounds = array<i64: 2, 8, 128>}, {transform_indices = @transform_1, window_bounds = array<i64: 2, 16, 128>}, {transform_indices = @transform_2, window_bounds = array<i64: 2, 1, 16>}, {pipeline_mode = #tpu.pipeline_mode<synchronous>, transform_indices = @transform_3, window_bounds = array<i64: 1, 128>}, {pipeline_mode = #tpu.pipeline_mode<synchronous>, transform_indices = @transform_4, window_bounds = array<i64: 1, 128>}, {pipeline_mode = #tpu.pipeline_mode<synchronous>, transform_indices = @transform_5, window_bounds = array<i64: 128, 128>}, {pipeline_mode = #tpu.pipeline_mode<synchronous>, transform_indices = @transform_6, window_bounds = array<i64: 1, 128>}, {pipeline_mode = #tpu.pipeline_mode<synchronous>, transform_indices = @transform_7, window_bounds = array<i64: 128, 128>}, {pipeline_mode = #tpu.pipeline_mode<synchronous>, transform_indices = @transform_8, window_bounds = array<i64: 1, 128>}, {pipeline_mode = #tpu.pipeline_mode<synchronous>, transform_indices = @transform_9, window_bounds = array<i64: 128, 128>}, {pipeline_mode = #tpu.pipeline_mode<synchronous>, transform_indices = @transform_10, window_bounds = array<i64: 1, 128>}, {pipeline_mode = #tpu.pipeline_mode<synchronous>, transform_indices = @transform_11, window_bounds = array<i64: 128, 128>}, {pipeline_mode = #tpu.pipeline_mode<synchronous>, transform_indices = @transform_12, window_bounds = array<i64: 1, 128>}, {transform_indices = @transform_13, window_bounds = array<i64: 2, 8, 128>}]} {
    %c0 = arith.constant 0 : index
    %c0_0 = arith.constant 0 : index
    %c0_1 = arith.constant 0 : index
    %0 = vector.load %arg2[%c0, %c0_0, %c0_1] : memref<2x16x128xf32, #tpu.memory_space<vmem>>, vector<2x16x128xf32>
    %1 = vector.shape_cast %0 : vector<2x16x128xf32> to vector<32x128xf32>
    %cst = arith.constant dense<0.000000e+00> : vector<32xf32>
    %2 = vector.multi_reduction <add>, %1, %cst [1] : vector<32x128xf32> to vector<32xf32>
    %3 = vector.shape_cast %2 : vector<32xf32> to vector<32x1xf32>
    %cst_2 = arith.constant 1.280000e+02 : f32
    %4 = vector.broadcast %cst_2 : f32 to vector<32x1xf32>
    %5 = arith.divf %3, %4 : vector<32x1xf32>
    %6 = arith.mulf %1, %1 : vector<32x128xf32>
    %cst_3 = arith.constant dense<0.000000e+00> : vector<32xf32>
    %7 = vector.multi_reduction <add>, %6, %cst_3 [1] : vector<32x128xf32> to vector<32xf32>
    %8 = vector.shape_cast %7 : vector<32xf32> to vector<32x1xf32>
    %cst_4 = arith.constant 1.280000e+02 : f32
    %9 = vector.broadcast %cst_4 : f32 to vector<32x1xf32>
    %10 = arith.divf %8, %9 : vector<32x1xf32>
    %11 = arith.mulf %5, %5 : vector<32x1xf32>
    %12 = arith.subf %10, %11 : vector<32x1xf32>
    %13 = vector.broadcast %5 : vector<32x1xf32> to vector<32x128xf32>
    %14 = arith.subf %1, %13 : vector<32x128xf32>
    %cst_5 = arith.constant 9.99999974E-6 : f32
    %15 = vector.broadcast %cst_5 : f32 to vector<32x1xf32>
    %16 = arith.addf %12, %15 : vector<32x1xf32>
    %17 = math.rsqrt %16 : vector<32x1xf32>
    %18 = vector.broadcast %17 : vector<32x1xf32> to vector<32x128xf32>
    %19 = arith.mulf %14, %18 : vector<32x128xf32>
    %c0_6 = arith.constant 0 : index
    %c0_7 = arith.constant 0 : index
    %20 = vector.load %arg4[%c0_6, %c0_7] : memref<1x128xf32, #tpu.memory_space<vmem>>, vector<1x128xf32>
    %21 = vector.broadcast %20 : vector<1x128xf32> to vector<32x128xf32>
    %22 = arith.mulf %19, %21 : vector<32x128xf32>
    %c0_8 = arith.constant 0 : index
    %c0_9 = arith.constant 0 : index
    %23 = vector.load %arg5[%c0_8, %c0_9] : memref<1x128xf32, #tpu.memory_space<vmem>>, vector<1x128xf32>
    %24 = vector.broadcast %23 : vector<1x128xf32> to vector<32x128xf32>
    %25 = arith.addf %22, %24 : vector<32x128xf32>
    %c0_10 = arith.constant 0 : index
    %c0_11 = arith.constant 0 : index
    %c0_12 = arith.constant 0 : index
    %26 = vector.load %arg1[%c0_10, %c0_11, %c0_12] : memref<2x8x128xf32, #tpu.memory_space<vmem>>, vector<2x8x128xf32>
    %27 = vector.shape_cast %26 : vector<2x8x128xf32> to vector<16x128xf32>
    %28 = arith.truncf %27 : vector<16x128xf32> to vector<16x128xbf16>
    %c0_13 = arith.constant 0 : index
    %c0_14 = arith.constant 0 : index
    %29 = vector.load %arg6[%c0_13, %c0_14] : memref<128x128xbf16, #tpu.memory_space<vmem>>, vector<128x128xbf16>
    %cst_15 = arith.constant dense<0.000000e+00> : vector<16x128xf32>
    %30 = tpu.matmul %28, %29, %cst_15 {dimension_numbers = #tpu.dot_dimension_numbers<[1], [0], [0], [1], [0, 0, 1, 1], [], []>} : vector<16x128xbf16>, vector<128x128xbf16>, vector<16x128xf32> -> vector<16x128xf32>
    %c0_16 = arith.constant 0 : index
    %c0_17 = arith.constant 0 : index
    %31 = vector.load %arg7[%c0_16, %c0_17] : memref<1x128xf32, #tpu.memory_space<vmem>>, vector<1x128xf32>
    %32 = vector.broadcast %31 : vector<1x128xf32> to vector<16x128xf32>
    %33 = arith.addf %30, %32 : vector<16x128xf32>
    %34 = arith.truncf %25 : vector<32x128xf32> to vector<32x128xbf16>
    %c0_18 = arith.constant 0 : index
    %c0_19 = arith.constant 0 : index
    %35 = vector.load %arg8[%c0_18, %c0_19] : memref<128x128xbf16, #tpu.memory_space<vmem>>, vector<128x128xbf16>
    %cst_20 = arith.constant dense<0.000000e+00> : vector<32x128xf32>
    %36 = tpu.matmul %34, %35, %cst_20 {dimension_numbers = #tpu.dot_dimension_numbers<[1], [0], [0], [1], [0, 0, 1, 1], [], []>} : vector<32x128xbf16>, vector<128x128xbf16>, vector<32x128xf32> -> vector<32x128xf32>
    %c0_21 = arith.constant 0 : index
    %c0_22 = arith.constant 0 : index
    %37 = vector.load %arg9[%c0_21, %c0_22] : memref<1x128xf32, #tpu.memory_space<vmem>>, vector<1x128xf32>
    %38 = vector.broadcast %37 : vector<1x128xf32> to vector<32x128xf32>
    %39 = arith.addf %36, %38 : vector<32x128xf32>
    %40 = arith.truncf %25 : vector<32x128xf32> to vector<32x128xbf16>
    %c0_23 = arith.constant 0 : index
    %c0_24 = arith.constant 0 : index
    %41 = vector.load %arg10[%c0_23, %c0_24] : memref<128x128xbf16, #tpu.memory_space<vmem>>, vector<128x128xbf16>
    %cst_25 = arith.constant dense<0.000000e+00> : vector<32x128xf32>
    %42 = tpu.matmul %40, %41, %cst_25 {dimension_numbers = #tpu.dot_dimension_numbers<[1], [0], [0], [1], [0, 0, 1, 1], [], []>} : vector<32x128xbf16>, vector<128x128xbf16>, vector<32x128xf32> -> vector<32x128xf32>
    %c0_26 = arith.constant 0 : index
    %c0_27 = arith.constant 0 : index
    %43 = vector.load %arg11[%c0_26, %c0_27] : memref<1x128xf32, #tpu.memory_space<vmem>>, vector<1x128xf32>
    %44 = vector.broadcast %43 : vector<1x128xf32> to vector<32x128xf32>
    %45 = arith.addf %42, %44 : vector<32x128xf32>
    %46 = arith.truncf %33 : vector<16x128xf32> to vector<16x128xbf16>
    %47 = arith.truncf %39 : vector<32x128xf32> to vector<32x128xbf16>
    %48 = arith.truncf %45 : vector<32x128xf32> to vector<32x128xbf16>
    %c0_28 = arith.constant 0 : index
    %c0_29 = arith.constant 0 : index
    %c0_30 = arith.constant 0 : index
    %49 = vector.load %arg3[%c0_28, %c0_29, %c0_30] : memref<2x1x16xf32, #tpu.memory_space<vmem>>, vector<2x1x16xf32>
    %50 = vector.extract_strided_slice %49 {offsets = [0, 0, 0], sizes = [1, 1, 16], strides = [1, 1, 1]} : vector<2x1x16xf32> to vector<1x1x16xf32>
    %51 = vector.shape_cast %50 : vector<1x1x16xf32> to vector<1x16xf32>
    %52 = vector.extract_strided_slice %46 {offsets = [0, 0], sizes = [8, 128], strides = [1, 1]} : vector<16x128xbf16> to vector<8x128xbf16>
    %53 = vector.extract_strided_slice %47 {offsets = [0, 0], sizes = [16, 128], strides = [1, 1]} : vector<32x128xbf16> to vector<16x128xbf16>
    %54 = vector.extract_strided_slice %48 {offsets = [0, 0], sizes = [16, 128], strides = [1, 1]} : vector<32x128xbf16> to vector<16x128xbf16>
    %cst_31 = arith.constant 0.000000e+00 : f32
    %55 = vector.broadcast %cst_31 : f32 to vector<8x128xf32>
    %56 = vector.extract_strided_slice %52 {offsets = [0, 0], sizes = [8, 32], strides = [1, 1]} : vector<8x128xbf16> to vector<8x32xbf16>
    %57 = vector.extract_strided_slice %53 {offsets = [0, 0], sizes = [16, 32], strides = [1, 1]} : vector<16x128xbf16> to vector<16x32xbf16>
    %58 = vector.extract_strided_slice %54 {offsets = [0, 0], sizes = [16, 32], strides = [1, 1]} : vector<16x128xbf16> to vector<16x32xbf16>
    %cst_32 = arith.constant dense<0.000000e+00> : vector<8x16xf32>
    %59 = tpu.matmul %56, %57, %cst_32 {dimension_numbers = #tpu.dot_dimension_numbers<[1], [1], [0], [0], [0, 0, 1, 0], [], []>} : vector<8x32xbf16>, vector<16x32xbf16>, vector<8x16xf32> -> vector<8x16xf32>
    %cst_33 = arith.constant 0.176776692 : f32
    %60 = vector.broadcast %cst_33 : f32 to vector<8x16xf32>
    %61 = arith.mulf %59, %60 : vector<8x16xf32>
    %62 = vector.broadcast %51 : vector<1x16xf32> to vector<8x16xf32>
    %63 = arith.mulf %61, %62 : vector<8x16xf32>
    %cst_34 = arith.constant 1.000000e+00 : f32
    %64 = vector.broadcast %cst_34 : f32 to vector<1x16xf32>
    %65 = arith.subf %64, %51 : vector<1x16xf32>
    %cst_35 = arith.constant 1.000000e+05 : f32
    %66 = vector.broadcast %cst_35 : f32 to vector<1x16xf32>
    %67 = arith.mulf %66, %65 : vector<1x16xf32>
    %68 = vector.broadcast %67 : vector<1x16xf32> to vector<8x16xf32>
    %69 = arith.subf %63, %68 : vector<8x16xf32>
    %cst_36 = arith.constant dense<0xFF800000> : vector<8xf32>
    %70 = vector.multi_reduction <maximumf>, %69, %cst_36 [1] : vector<8x16xf32> to vector<8xf32>
    %71 = vector.shape_cast %70 : vector<8xf32> to vector<8x1xf32>
    %72 = vector.broadcast %71 : vector<8x1xf32> to vector<8x16xf32>
    %73 = arith.subf %69, %72 : vector<8x16xf32>
    %74 = math.exp %73 : vector<8x16xf32>
    %cst_37 = arith.constant dense<0.000000e+00> : vector<8xf32>
    %75 = vector.multi_reduction <add>, %74, %cst_37 [1] : vector<8x16xf32> to vector<8xf32>
    %76 = vector.shape_cast %75 : vector<8xf32> to vector<8x1xf32>
    %77 = vector.broadcast %76 : vector<8x1xf32> to vector<8x16xf32>
    %78 = arith.divf %74, %77 : vector<8x16xf32>
    %79 = arith.truncf %78 : vector<8x16xf32> to vector<8x16xbf16>
    %cst_38 = arith.constant dense<0.000000e+00> : vector<8x32xf32>
    %80 = tpu.matmul %79, %58, %cst_38 {dimension_numbers = #tpu.dot_dimension_numbers<[1], [0], [0], [1], [0, 0, 1, 1], [], []>} : vector<8x16xbf16>, vector<16x32xbf16>, vector<8x32xf32> -> vector<8x32xf32>
    %81 = arith.truncf %80 : vector<8x32xf32> to vector<8x32xbf16>
    %c0_39 = arith.constant 0 : index
    %c0_40 = arith.constant 0 : index
    %82 = vector.load %arg12[%c0_39, %c0_40] : memref<128x128xbf16, #tpu.memory_space<vmem>>, vector<32x128xbf16>
    %cst_41 = arith.constant dense<0.000000e+00> : vector<8x128xf32>
    %83 = tpu.matmul %81, %82, %cst_41 {dimension_numbers = #tpu.dot_dimension_numbers<[1], [0], [0], [1], [0, 0, 1, 1], [], []>} : vector<8x32xbf16>, vector<32x128xbf16>, vector<8x128xf32> -> vector<8x128xf32>
    %84 = arith.addf %55, %83 : vector<8x128xf32>
    %85 = vector.extract_strided_slice %52 {offsets = [0, 32], sizes = [8, 32], strides = [1, 1]} : vector<8x128xbf16> to vector<8x32xbf16>
    %86 = vector.extract_strided_slice %53 {offsets = [0, 32], sizes = [16, 32], strides = [1, 1]} : vector<16x128xbf16> to vector<16x32xbf16>
    %87 = vector.extract_strided_slice %54 {offsets = [0, 32], sizes = [16, 32], strides = [1, 1]} : vector<16x128xbf16> to vector<16x32xbf16>
    %cst_42 = arith.constant dense<0.000000e+00> : vector<8x16xf32>
    %88 = tpu.matmul %85, %86, %cst_42 {dimension_numbers = #tpu.dot_dimension_numbers<[1], [1], [0], [0], [0, 0, 1, 0], [], []>} : vector<8x32xbf16>, vector<16x32xbf16>, vector<8x16xf32> -> vector<8x16xf32>
    %cst_43 = arith.constant 0.176776692 : f32
    %89 = vector.broadcast %cst_43 : f32 to vector<8x16xf32>
    %90 = arith.mulf %88, %89 : vector<8x16xf32>
    %91 = vector.broadcast %51 : vector<1x16xf32> to vector<8x16xf32>
    %92 = arith.mulf %90, %91 : vector<8x16xf32>
    %cst_44 = arith.constant 1.000000e+00 : f32
    %93 = vector.broadcast %cst_44 : f32 to vector<1x16xf32>
    %94 = arith.subf %93, %51 : vector<1x16xf32>
    %cst_45 = arith.constant 1.000000e+05 : f32
    %95 = vector.broadcast %cst_45 : f32 to vector<1x16xf32>
    %96 = arith.mulf %95, %94 : vector<1x16xf32>
    %97 = vector.broadcast %96 : vector<1x16xf32> to vector<8x16xf32>
    %98 = arith.subf %92, %97 : vector<8x16xf32>
    %cst_46 = arith.constant dense<0xFF800000> : vector<8xf32>
    %99 = vector.multi_reduction <maximumf>, %98, %cst_46 [1] : vector<8x16xf32> to vector<8xf32>
    %100 = vector.shape_cast %99 : vector<8xf32> to vector<8x1xf32>
    %101 = vector.broadcast %100 : vector<8x1xf32> to vector<8x16xf32>
    %102 = arith.subf %98, %101 : vector<8x16xf32>
    %103 = math.exp %102 : vector<8x16xf32>
    %cst_47 = arith.constant dense<0.000000e+00> : vector<8xf32>
    %104 = vector.multi_reduction <add>, %103, %cst_47 [1] : vector<8x16xf32> to vector<8xf32>
    %105 = vector.shape_cast %104 : vector<8xf32> to vector<8x1xf32>
    %106 = vector.broadcast %105 : vector<8x1xf32> to vector<8x16xf32>
    %107 = arith.divf %103, %106 : vector<8x16xf32>
    %108 = arith.truncf %107 : vector<8x16xf32> to vector<8x16xbf16>
    %cst_48 = arith.constant dense<0.000000e+00> : vector<8x32xf32>
    %109 = tpu.matmul %108, %87, %cst_48 {dimension_numbers = #tpu.dot_dimension_numbers<[1], [0], [0], [1], [0, 0, 1, 1], [], []>} : vector<8x16xbf16>, vector<16x32xbf16>, vector<8x32xf32> -> vector<8x32xf32>
    %110 = arith.truncf %109 : vector<8x32xf32> to vector<8x32xbf16>
    %c32 = arith.constant 32 : index
    %c0_49 = arith.constant 0 : index
    %111 = vector.load %arg12[%c32, %c0_49] : memref<128x128xbf16, #tpu.memory_space<vmem>>, vector<32x128xbf16>
    %cst_50 = arith.constant dense<0.000000e+00> : vector<8x128xf32>
    %112 = tpu.matmul %110, %111, %cst_50 {dimension_numbers = #tpu.dot_dimension_numbers<[1], [0], [0], [1], [0, 0, 1, 1], [], []>} : vector<8x32xbf16>, vector<32x128xbf16>, vector<8x128xf32> -> vector<8x128xf32>
    %113 = arith.addf %84, %112 : vector<8x128xf32>
    %114 = vector.extract_strided_slice %52 {offsets = [0, 64], sizes = [8, 32], strides = [1, 1]} : vector<8x128xbf16> to vector<8x32xbf16>
    %115 = vector.extract_strided_slice %53 {offsets = [0, 64], sizes = [16, 32], strides = [1, 1]} : vector<16x128xbf16> to vector<16x32xbf16>
    %116 = vector.extract_strided_slice %54 {offsets = [0, 64], sizes = [16, 32], strides = [1, 1]} : vector<16x128xbf16> to vector<16x32xbf16>
    %cst_51 = arith.constant dense<0.000000e+00> : vector<8x16xf32>
    %117 = tpu.matmul %114, %115, %cst_51 {dimension_numbers = #tpu.dot_dimension_numbers<[1], [1], [0], [0], [0, 0, 1, 0], [], []>} : vector<8x32xbf16>, vector<16x32xbf16>, vector<8x16xf32> -> vector<8x16xf32>
    %cst_52 = arith.constant 0.176776692 : f32
    %118 = vector.broadcast %cst_52 : f32 to vector<8x16xf32>
    %119 = arith.mulf %117, %118 : vector<8x16xf32>
    %120 = vector.broadcast %51 : vector<1x16xf32> to vector<8x16xf32>
    %121 = arith.mulf %119, %120 : vector<8x16xf32>
    %cst_53 = arith.constant 1.000000e+00 : f32
    %122 = vector.broadcast %cst_53 : f32 to vector<1x16xf32>
    %123 = arith.subf %122, %51 : vector<1x16xf32>
    %cst_54 = arith.constant 1.000000e+05 : f32
    %124 = vector.broadcast %cst_54 : f32 to vector<1x16xf32>
    %125 = arith.mulf %124, %123 : vector<1x16xf32>
    %126 = vector.broadcast %125 : vector<1x16xf32> to vector<8x16xf32>
    %127 = arith.subf %121, %126 : vector<8x16xf32>
    %cst_55 = arith.constant dense<0xFF800000> : vector<8xf32>
    %128 = vector.multi_reduction <maximumf>, %127, %cst_55 [1] : vector<8x16xf32> to vector<8xf32>
    %129 = vector.shape_cast %128 : vector<8xf32> to vector<8x1xf32>
    %130 = vector.broadcast %129 : vector<8x1xf32> to vector<8x16xf32>
    %131 = arith.subf %127, %130 : vector<8x16xf32>
    %132 = math.exp %131 : vector<8x16xf32>
    %cst_56 = arith.constant dense<0.000000e+00> : vector<8xf32>
    %133 = vector.multi_reduction <add>, %132, %cst_56 [1] : vector<8x16xf32> to vector<8xf32>
    %134 = vector.shape_cast %133 : vector<8xf32> to vector<8x1xf32>
    %135 = vector.broadcast %134 : vector<8x1xf32> to vector<8x16xf32>
    %136 = arith.divf %132, %135 : vector<8x16xf32>
    %137 = arith.truncf %136 : vector<8x16xf32> to vector<8x16xbf16>
    %cst_57 = arith.constant dense<0.000000e+00> : vector<8x32xf32>
    %138 = tpu.matmul %137, %116, %cst_57 {dimension_numbers = #tpu.dot_dimension_numbers<[1], [0], [0], [1], [0, 0, 1, 1], [], []>} : vector<8x16xbf16>, vector<16x32xbf16>, vector<8x32xf32> -> vector<8x32xf32>
    %139 = arith.truncf %138 : vector<8x32xf32> to vector<8x32xbf16>
    %c64 = arith.constant 64 : index
    %c0_58 = arith.constant 0 : index
    %140 = vector.load %arg12[%c64, %c0_58] : memref<128x128xbf16, #tpu.memory_space<vmem>>, vector<32x128xbf16>
    %cst_59 = arith.constant dense<0.000000e+00> : vector<8x128xf32>
    %141 = tpu.matmul %139, %140, %cst_59 {dimension_numbers = #tpu.dot_dimension_numbers<[1], [0], [0], [1], [0, 0, 1, 1], [], []>} : vector<8x32xbf16>, vector<32x128xbf16>, vector<8x128xf32> -> vector<8x128xf32>
    %142 = arith.addf %113, %141 : vector<8x128xf32>
    %143 = vector.extract_strided_slice %52 {offsets = [0, 96], sizes = [8, 32], strides = [1, 1]} : vector<8x128xbf16> to vector<8x32xbf16>
    %144 = vector.extract_strided_slice %53 {offsets = [0, 96], sizes = [16, 32], strides = [1, 1]} : vector<16x128xbf16> to vector<16x32xbf16>
    %145 = vector.extract_strided_slice %54 {offsets = [0, 96], sizes = [16, 32], strides = [1, 1]} : vector<16x128xbf16> to vector<16x32xbf16>
    %cst_60 = arith.constant dense<0.000000e+00> : vector<8x16xf32>
    %146 = tpu.matmul %143, %144, %cst_60 {dimension_numbers = #tpu.dot_dimension_numbers<[1], [1], [0], [0], [0, 0, 1, 0], [], []>} : vector<8x32xbf16>, vector<16x32xbf16>, vector<8x16xf32> -> vector<8x16xf32>
    %cst_61 = arith.constant 0.176776692 : f32
    %147 = vector.broadcast %cst_61 : f32 to vector<8x16xf32>
    %148 = arith.mulf %146, %147 : vector<8x16xf32>
    %149 = vector.broadcast %51 : vector<1x16xf32> to vector<8x16xf32>
    %150 = arith.mulf %148, %149 : vector<8x16xf32>
    %cst_62 = arith.constant 1.000000e+00 : f32
    %151 = vector.broadcast %cst_62 : f32 to vector<1x16xf32>
    %152 = arith.subf %151, %51 : vector<1x16xf32>
    %cst_63 = arith.constant 1.000000e+05 : f32
    %153 = vector.broadcast %cst_63 : f32 to vector<1x16xf32>
    %154 = arith.mulf %153, %152 : vector<1x16xf32>
    %155 = vector.broadcast %154 : vector<1x16xf32> to vector<8x16xf32>
    %156 = arith.subf %150, %155 : vector<8x16xf32>
    %cst_64 = arith.constant dense<0xFF800000> : vector<8xf32>
    %157 = vector.multi_reduction <maximumf>, %156, %cst_64 [1] : vector<8x16xf32> to vector<8xf32>
    %158 = vector.shape_cast %157 : vector<8xf32> to vector<8x1xf32>
    %159 = vector.broadcast %158 : vector<8x1xf32> to vector<8x16xf32>
    %160 = arith.subf %156, %159 : vector<8x16xf32>
    %161 = math.exp %160 : vector<8x16xf32>
    %cst_65 = arith.constant dense<0.000000e+00> : vector<8xf32>
    %162 = vector.multi_reduction <add>, %161, %cst_65 [1] : vector<8x16xf32> to vector<8xf32>
    %163 = vector.shape_cast %162 : vector<8xf32> to vector<8x1xf32>
    %164 = vector.broadcast %163 : vector<8x1xf32> to vector<8x16xf32>
    %165 = arith.divf %161, %164 : vector<8x16xf32>
    %166 = arith.truncf %165 : vector<8x16xf32> to vector<8x16xbf16>
    %cst_66 = arith.constant dense<0.000000e+00> : vector<8x32xf32>
    %167 = tpu.matmul %166, %145, %cst_66 {dimension_numbers = #tpu.dot_dimension_numbers<[1], [0], [0], [1], [0, 0, 1, 1], [], []>} : vector<8x16xbf16>, vector<16x32xbf16>, vector<8x32xf32> -> vector<8x32xf32>
    %168 = arith.truncf %167 : vector<8x32xf32> to vector<8x32xbf16>
    %c96 = arith.constant 96 : index
    %c0_67 = arith.constant 0 : index
    %169 = vector.load %arg12[%c96, %c0_67] : memref<128x128xbf16, #tpu.memory_space<vmem>>, vector<32x128xbf16>
    %cst_68 = arith.constant dense<0.000000e+00> : vector<8x128xf32>
    %170 = tpu.matmul %168, %169, %cst_68 {dimension_numbers = #tpu.dot_dimension_numbers<[1], [0], [0], [1], [0, 0, 1, 1], [], []>} : vector<8x32xbf16>, vector<32x128xbf16>, vector<8x128xf32> -> vector<8x128xf32>
    %171 = arith.addf %142, %170 : vector<8x128xf32>
    %c0_69 = arith.constant 0 : index
    %c0_70 = arith.constant 0 : index
    %172 = vector.load %arg13[%c0_69, %c0_70] : memref<1x128xf32, #tpu.memory_space<vmem>>, vector<1x128xf32>
    %173 = vector.broadcast %172 : vector<1x128xf32> to vector<8x128xf32>
    %174 = arith.addf %171, %173 : vector<8x128xf32>
    %c0_71 = arith.constant 0 : index
    %c0_72 = arith.constant 0 : index
    %c0_73 = arith.constant 0 : index
    %175 = vector.load %arg14[%c0_71, %c0_72, %c0_73] : memref<2x8x128xf32, #tpu.memory_space<vmem>>, vector<1x8x128xf32>
    %176 = vector.shape_cast %175 : vector<1x8x128xf32> to vector<8x128xf32>
    %177 = vector.shape_cast %174 : vector<8x128xf32> to vector<1x8x128xf32>
    tpu.vector_store %arg14[%c0_71, %c0_72, %c0_73], %177 {strides = array<i32>} : memref<2x8x128xf32, #tpu.memory_space<vmem>>, vector<1x8x128xf32>,
    %178 = vector.extract_strided_slice %49 {offsets = [1, 0, 0], sizes = [1, 1, 16], strides = [1, 1, 1]} : vector<2x1x16xf32> to vector<1x1x16xf32>
    %179 = vector.shape_cast %178 : vector<1x1x16xf32> to vector<1x16xf32>
    %180 = vector.extract_strided_slice %46 {offsets = [8, 0], sizes = [8, 128], strides = [1, 1]} : vector<16x128xbf16> to vector<8x128xbf16>
    %181 = vector.extract_strided_slice %47 {offsets = [16, 0], sizes = [16, 128], strides = [1, 1]} : vector<32x128xbf16> to vector<16x128xbf16>
    %182 = vector.extract_strided_slice %48 {offsets = [16, 0], sizes = [16, 128], strides = [1, 1]} : vector<32x128xbf16> to vector<16x128xbf16>
    %cst_74 = arith.constant 0.000000e+00 : f32
    %183 = vector.broadcast %cst_74 : f32 to vector<8x128xf32>
    %184 = vector.extract_strided_slice %180 {offsets = [0, 0], sizes = [8, 32], strides = [1, 1]} : vector<8x128xbf16> to vector<8x32xbf16>
    %185 = vector.extract_strided_slice %181 {offsets = [0, 0], sizes = [16, 32], strides = [1, 1]} : vector<16x128xbf16> to vector<16x32xbf16>
    %186 = vector.extract_strided_slice %182 {offsets = [0, 0], sizes = [16, 32], strides = [1, 1]} : vector<16x128xbf16> to vector<16x32xbf16>
    %cst_75 = arith.constant dense<0.000000e+00> : vector<8x16xf32>
    %187 = tpu.matmul %184, %185, %cst_75 {dimension_numbers = #tpu.dot_dimension_numbers<[1], [1], [0], [0], [0, 0, 1, 0], [], []>} : vector<8x32xbf16>, vector<16x32xbf16>, vector<8x16xf32> -> vector<8x16xf32>
    %cst_76 = arith.constant 0.176776692 : f32
    %188 = vector.broadcast %cst_76 : f32 to vector<8x16xf32>
    %189 = arith.mulf %187, %188 : vector<8x16xf32>
    %190 = vector.broadcast %179 : vector<1x16xf32> to vector<8x16xf32>
    %191 = arith.mulf %189, %190 : vector<8x16xf32>
    %cst_77 = arith.constant 1.000000e+00 : f32
    %192 = vector.broadcast %cst_77 : f32 to vector<1x16xf32>
    %193 = arith.subf %192, %179 : vector<1x16xf32>
    %cst_78 = arith.constant 1.000000e+05 : f32
    %194 = vector.broadcast %cst_78 : f32 to vector<1x16xf32>
    %195 = arith.mulf %194, %193 : vector<1x16xf32>
    %196 = vector.broadcast %195 : vector<1x16xf32> to vector<8x16xf32>
    %197 = arith.subf %191, %196 : vector<8x16xf32>
    %cst_79 = arith.constant dense<0xFF800000> : vector<8xf32>
    %198 = vector.multi_reduction <maximumf>, %197, %cst_79 [1] : vector<8x16xf32> to vector<8xf32>
    %199 = vector.shape_cast %198 : vector<8xf32> to vector<8x1xf32>
    %200 = vector.broadcast %199 : vector<8x1xf32> to vector<8x16xf32>
    %201 = arith.subf %197, %200 : vector<8x16xf32>
    %202 = math.exp %201 : vector<8x16xf32>
    %cst_80 = arith.constant dense<0.000000e+00> : vector<8xf32>
    %203 = vector.multi_reduction <add>, %202, %cst_80 [1] : vector<8x16xf32> to vector<8xf32>
    %204 = vector.shape_cast %203 : vector<8xf32> to vector<8x1xf32>
    %205 = vector.broadcast %204 : vector<8x1xf32> to vector<8x16xf32>
    %206 = arith.divf %202, %205 : vector<8x16xf32>
    %207 = arith.truncf %206 : vector<8x16xf32> to vector<8x16xbf16>
    %cst_81 = arith.constant dense<0.000000e+00> : vector<8x32xf32>
    %208 = tpu.matmul %207, %186, %cst_81 {dimension_numbers = #tpu.dot_dimension_numbers<[1], [0], [0], [1], [0, 0, 1, 1], [], []>} : vector<8x16xbf16>, vector<16x32xbf16>, vector<8x32xf32> -> vector<8x32xf32>
    %209 = arith.truncf %208 : vector<8x32xf32> to vector<8x32xbf16>
    %c0_82 = arith.constant 0 : index
    %c0_83 = arith.constant 0 : index
    %210 = vector.load %arg12[%c0_82, %c0_83] : memref<128x128xbf16, #tpu.memory_space<vmem>>, vector<32x128xbf16>
    %cst_84 = arith.constant dense<0.000000e+00> : vector<8x128xf32>
    %211 = tpu.matmul %209, %210, %cst_84 {dimension_numbers = #tpu.dot_dimension_numbers<[1], [0], [0], [1], [0, 0, 1, 1], [], []>} : vector<8x32xbf16>, vector<32x128xbf16>, vector<8x128xf32> -> vector<8x128xf32>
    %212 = arith.addf %183, %211 : vector<8x128xf32>
    %213 = vector.extract_strided_slice %180 {offsets = [0, 32], sizes = [8, 32], strides = [1, 1]} : vector<8x128xbf16> to vector<8x32xbf16>
    %214 = vector.extract_strided_slice %181 {offsets = [0, 32], sizes = [16, 32], strides = [1, 1]} : vector<16x128xbf16> to vector<16x32xbf16>
    %215 = vector.extract_strided_slice %182 {offsets = [0, 32], sizes = [16, 32], strides = [1, 1]} : vector<16x128xbf16> to vector<16x32xbf16>
    %cst_85 = arith.constant dense<0.000000e+00> : vector<8x16xf32>
    %216 = tpu.matmul %213, %214, %cst_85 {dimension_numbers = #tpu.dot_dimension_numbers<[1], [1], [0], [0], [0, 0, 1, 0], [], []>} : vector<8x32xbf16>, vector<16x32xbf16>, vector<8x16xf32> -> vector<8x16xf32>
    %cst_86 = arith.constant 0.176776692 : f32
    %217 = vector.broadcast %cst_86 : f32 to vector<8x16xf32>
    %218 = arith.mulf %216, %217 : vector<8x16xf32>
    %219 = vector.broadcast %179 : vector<1x16xf32> to vector<8x16xf32>
    %220 = arith.mulf %218, %219 : vector<8x16xf32>
    %cst_87 = arith.constant 1.000000e+00 : f32
    %221 = vector.broadcast %cst_87 : f32 to vector<1x16xf32>
    %222 = arith.subf %221, %179 : vector<1x16xf32>
    %cst_88 = arith.constant 1.000000e+05 : f32
    %223 = vector.broadcast %cst_88 : f32 to vector<1x16xf32>
    %224 = arith.mulf %223, %222 : vector<1x16xf32>
    %225 = vector.broadcast %224 : vector<1x16xf32> to vector<8x16xf32>
    %226 = arith.subf %220, %225 : vector<8x16xf32>
    %cst_89 = arith.constant dense<0xFF800000> : vector<8xf32>
    %227 = vector.multi_reduction <maximumf>, %226, %cst_89 [1] : vector<8x16xf32> to vector<8xf32>
    %228 = vector.shape_cast %227 : vector<8xf32> to vector<8x1xf32>
    %229 = vector.broadcast %228 : vector<8x1xf32> to vector<8x16xf32>
    %230 = arith.subf %226, %229 : vector<8x16xf32>
    %231 = math.exp %230 : vector<8x16xf32>
    %cst_90 = arith.constant dense<0.000000e+00> : vector<8xf32>
    %232 = vector.multi_reduction <add>, %231, %cst_90 [1] : vector<8x16xf32> to vector<8xf32>
    %233 = vector.shape_cast %232 : vector<8xf32> to vector<8x1xf32>
    %234 = vector.broadcast %233 : vector<8x1xf32> to vector<8x16xf32>
    %235 = arith.divf %231, %234 : vector<8x16xf32>
    %236 = arith.truncf %235 : vector<8x16xf32> to vector<8x16xbf16>
    %cst_91 = arith.constant dense<0.000000e+00> : vector<8x32xf32>
    %237 = tpu.matmul %236, %215, %cst_91 {dimension_numbers = #tpu.dot_dimension_numbers<[1], [0], [0], [1], [0, 0, 1, 1], [], []>} : vector<8x16xbf16>, vector<16x32xbf16>, vector<8x32xf32> -> vector<8x32xf32>
    %238 = arith.truncf %237 : vector<8x32xf32> to vector<8x32xbf16>
    %c32_92 = arith.constant 32 : index
    %c0_93 = arith.constant 0 : index
    %239 = vector.load %arg12[%c32_92, %c0_93] : memref<128x128xbf16, #tpu.memory_space<vmem>>, vector<32x128xbf16>
    %cst_94 = arith.constant dense<0.000000e+00> : vector<8x128xf32>
    %240 = tpu.matmul %238, %239, %cst_94 {dimension_numbers = #tpu.dot_dimension_numbers<[1], [0], [0], [1], [0, 0, 1, 1], [], []>} : vector<8x32xbf16>, vector<32x128xbf16>, vector<8x128xf32> -> vector<8x128xf32>
    %241 = arith.addf %212, %240 : vector<8x128xf32>
    %242 = vector.extract_strided_slice %180 {offsets = [0, 64], sizes = [8, 32], strides = [1, 1]} : vector<8x128xbf16> to vector<8x32xbf16>
    %243 = vector.extract_strided_slice %181 {offsets = [0, 64], sizes = [16, 32], strides = [1, 1]} : vector<16x128xbf16> to vector<16x32xbf16>
    %244 = vector.extract_strided_slice %182 {offsets = [0, 64], sizes = [16, 32], strides = [1, 1]} : vector<16x128xbf16> to vector<16x32xbf16>
    %cst_95 = arith.constant dense<0.000000e+00> : vector<8x16xf32>
    %245 = tpu.matmul %242, %243, %cst_95 {dimension_numbers = #tpu.dot_dimension_numbers<[1], [1], [0], [0], [0, 0, 1, 0], [], []>} : vector<8x32xbf16>, vector<16x32xbf16>, vector<8x16xf32> -> vector<8x16xf32>
    %cst_96 = arith.constant 0.176776692 : f32
    %246 = vector.broadcast %cst_96 : f32 to vector<8x16xf32>
    %247 = arith.mulf %245, %246 : vector<8x16xf32>
    %248 = vector.broadcast %179 : vector<1x16xf32> to vector<8x16xf32>
    %249 = arith.mulf %247, %248 : vector<8x16xf32>
    %cst_97 = arith.constant 1.000000e+00 : f32
    %250 = vector.broadcast %cst_97 : f32 to vector<1x16xf32>
    %251 = arith.subf %250, %179 : vector<1x16xf32>
    %cst_98 = arith.constant 1.000000e+05 : f32
    %252 = vector.broadcast %cst_98 : f32 to vector<1x16xf32>
    %253 = arith.mulf %252, %251 : vector<1x16xf32>
    %254 = vector.broadcast %253 : vector<1x16xf32> to vector<8x16xf32>
    %255 = arith.subf %249, %254 : vector<8x16xf32>
    %cst_99 = arith.constant dense<0xFF800000> : vector<8xf32>
    %256 = vector.multi_reduction <maximumf>, %255, %cst_99 [1] : vector<8x16xf32> to vector<8xf32>
    %257 = vector.shape_cast %256 : vector<8xf32> to vector<8x1xf32>
    %258 = vector.broadcast %257 : vector<8x1xf32> to vector<8x16xf32>
    %259 = arith.subf %255, %258 : vector<8x16xf32>
    %260 = math.exp %259 : vector<8x16xf32>
    %cst_100 = arith.constant dense<0.000000e+00> : vector<8xf32>
    %261 = vector.multi_reduction <add>, %260, %cst_100 [1] : vector<8x16xf32> to vector<8xf32>
    %262 = vector.shape_cast %261 : vector<8xf32> to vector<8x1xf32>
    %263 = vector.broadcast %262 : vector<8x1xf32> to vector<8x16xf32>
    %264 = arith.divf %260, %263 : vector<8x16xf32>
    %265 = arith.truncf %264 : vector<8x16xf32> to vector<8x16xbf16>
    %cst_101 = arith.constant dense<0.000000e+00> : vector<8x32xf32>
    %266 = tpu.matmul %265, %244, %cst_101 {dimension_numbers = #tpu.dot_dimension_numbers<[1], [0], [0], [1], [0, 0, 1, 1], [], []>} : vector<8x16xbf16>, vector<16x32xbf16>, vector<8x32xf32> -> vector<8x32xf32>
    %267 = arith.truncf %266 : vector<8x32xf32> to vector<8x32xbf16>
    %c64_102 = arith.constant 64 : index
    %c0_103 = arith.constant 0 : index
    %268 = vector.load %arg12[%c64_102, %c0_103] : memref<128x128xbf16, #tpu.memory_space<vmem>>, vector<32x128xbf16>
    %cst_104 = arith.constant dense<0.000000e+00> : vector<8x128xf32>
    %269 = tpu.matmul %267, %268, %cst_104 {dimension_numbers = #tpu.dot_dimension_numbers<[1], [0], [0], [1], [0, 0, 1, 1], [], []>} : vector<8x32xbf16>, vector<32x128xbf16>, vector<8x128xf32> -> vector<8x128xf32>
    %270 = arith.addf %241, %269 : vector<8x128xf32>
    %271 = vector.extract_strided_slice %180 {offsets = [0, 96], sizes = [8, 32], strides = [1, 1]} : vector<8x128xbf16> to vector<8x32xbf16>
    %272 = vector.extract_strided_slice %181 {offsets = [0, 96], sizes = [16, 32], strides = [1, 1]} : vector<16x128xbf16> to vector<16x32xbf16>
    %273 = vector.extract_strided_slice %182 {offsets = [0, 96], sizes = [16, 32], strides = [1, 1]} : vector<16x128xbf16> to vector<16x32xbf16>
    %cst_105 = arith.constant dense<0.000000e+00> : vector<8x16xf32>
    %274 = tpu.matmul %271, %272, %cst_105 {dimension_numbers = #tpu.dot_dimension_numbers<[1], [1], [0], [0], [0, 0, 1, 0], [], []>} : vector<8x32xbf16>, vector<16x32xbf16>, vector<8x16xf32> -> vector<8x16xf32>
    %cst_106 = arith.constant 0.176776692 : f32
    %275 = vector.broadcast %cst_106 : f32 to vector<8x16xf32>
    %276 = arith.mulf %274, %275 : vector<8x16xf32>
    %277 = vector.broadcast %179 : vector<1x16xf32> to vector<8x16xf32>
    %278 = arith.mulf %276, %277 : vector<8x16xf32>
    %cst_107 = arith.constant 1.000000e+00 : f32
    %279 = vector.broadcast %cst_107 : f32 to vector<1x16xf32>
    %280 = arith.subf %279, %179 : vector<1x16xf32>
    %cst_108 = arith.constant 1.000000e+05 : f32
    %281 = vector.broadcast %cst_108 : f32 to vector<1x16xf32>
    %282 = arith.mulf %281, %280 : vector<1x16xf32>
    %283 = vector.broadcast %282 : vector<1x16xf32> to vector<8x16xf32>
    %284 = arith.subf %278, %283 : vector<8x16xf32>
    %cst_109 = arith.constant dense<0xFF800000> : vector<8xf32>
    %285 = vector.multi_reduction <maximumf>, %284, %cst_109 [1] : vector<8x16xf32> to vector<8xf32>
    %286 = vector.shape_cast %285 : vector<8xf32> to vector<8x1xf32>
    %287 = vector.broadcast %286 : vector<8x1xf32> to vector<8x16xf32>
    %288 = arith.subf %284, %287 : vector<8x16xf32>
    %289 = math.exp %288 : vector<8x16xf32>
    %cst_110 = arith.constant dense<0.000000e+00> : vector<8xf32>
    %290 = vector.multi_reduction <add>, %289, %cst_110 [1] : vector<8x16xf32> to vector<8xf32>
    %291 = vector.shape_cast %290 : vector<8xf32> to vector<8x1xf32>
    %292 = vector.broadcast %291 : vector<8x1xf32> to vector<8x16xf32>
    %293 = arith.divf %289, %292 : vector<8x16xf32>
    %294 = arith.truncf %293 : vector<8x16xf32> to vector<8x16xbf16>
    %cst_111 = arith.constant dense<0.000000e+00> : vector<8x32xf32>
    %295 = tpu.matmul %294, %273, %cst_111 {dimension_numbers = #tpu.dot_dimension_numbers<[1], [0], [0], [1], [0, 0, 1, 1], [], []>} : vector<8x16xbf16>, vector<16x32xbf16>, vector<8x32xf32> -> vector<8x32xf32>
    %296 = arith.truncf %295 : vector<8x32xf32> to vector<8x32xbf16>
    %c96_112 = arith.constant 96 : index
    %c0_113 = arith.constant 0 : index
    %297 = vector.load %arg12[%c96_112, %c0_113] : memref<128x128xbf16, #tpu.memory_space<vmem>>, vector<32x128xbf16>
    %cst_114 = arith.constant dense<0.000000e+00> : vector<8x128xf32>
    %298 = tpu.matmul %296, %297, %cst_114 {dimension_numbers = #tpu.dot_dimension_numbers<[1], [0], [0], [1], [0, 0, 1, 1], [], []>} : vector<8x32xbf16>, vector<32x128xbf16>, vector<8x128xf32> -> vector<8x128xf32>
    %299 = arith.addf %270, %298 : vector<8x128xf32>
    %c0_115 = arith.constant 0 : index
    %c0_116 = arith.constant 0 : index
    %300 = vector.load %arg13[%c0_115, %c0_116] : memref<1x128xf32, #tpu.memory_space<vmem>>, vector<1x128xf32>
    %301 = vector.broadcast %300 : vector<1x128xf32> to vector<8x128xf32>
    %302 = arith.addf %299, %301 : vector<8x128xf32>
    %c1 = arith.constant 1 : index
    %c0_117 = arith.constant 0 : index
    %c0_118 = arith.constant 0 : index
    %303 = vector.load %arg14[%c1, %c0_117, %c0_118] : memref<2x8x128xf32, #tpu.memory_space<vmem>>, vector<1x8x128xf32>
    %304 = vector.shape_cast %303 : vector<1x8x128xf32> to vector<8x128xf32>
    %305 = vector.shape_cast %302 : vector<8x128xf32> to vector<1x8x128xf32>
    tpu.vector_store %arg14[%c1, %c0_117, %c0_118], %305 {strides = array<i32>} : memref<2x8x128xf32, #tpu.memory_space<vmem>>, vector<1x8x128xf32>,
    return
  }
  func.func @transform_0(%arg0: i32) -> (i32, i32, i32) {
    %c0_i32 = arith.constant 0 : i32
    %c0_i32_0 = arith.constant 0 : i32
    %c0_i32_1 = arith.constant 0 : i32
    return %arg0, %c0_i32, %c0_i32_0 : i32, i32, i32
  }
  func.func @transform_1(%arg0: i32) -> (i32, i32, i32) {
    %c0_i32 = arith.constant 0 : i32
    %c0_i32_0 = arith.constant 0 : i32
    %c0_i32_1 = arith.constant 0 : i32
    return %arg0, %c0_i32, %c0_i32_0 : i32, i32, i32
  }
  func.func @transform_2(%arg0: i32) -> (i32, i32, i32) {
    %c0_i32 = arith.constant 0 : i32
    %c0_i32_0 = arith.constant 0 : i32
    %c0_i32_1 = arith.constant 0 : i32
    return %arg0, %c0_i32, %c0_i32_0 : i32, i32, i32
  }
  func.func @transform_3(%arg0: i32) -> (i32, i32) {
    %c0_i32 = arith.constant 0 : i32
    %c0_i32_0 = arith.constant 0 : i32
    %c0_i32_1 = arith.constant 0 : i32
    return %c0_i32, %c0_i32_0 : i32, i32
  }
  func.func @transform_4(%arg0: i32) -> (i32, i32) {
    %c0_i32 = arith.constant 0 : i32
    %c0_i32_0 = arith.constant 0 : i32
    %c0_i32_1 = arith.constant 0 : i32
    return %c0_i32, %c0_i32_0 : i32, i32
  }
  func.func @transform_5(%arg0: i32) -> (i32, i32) {
    %c0_i32 = arith.constant 0 : i32
    %c0_i32_0 = arith.constant 0 : i32
    %c0_i32_1 = arith.constant 0 : i32
    return %c0_i32, %c0_i32_0 : i32, i32
  }
  func.func @transform_6(%arg0: i32) -> (i32, i32) {
    %c0_i32 = arith.constant 0 : i32
    %c0_i32_0 = arith.constant 0 : i32
    %c0_i32_1 = arith.constant 0 : i32
    return %c0_i32, %c0_i32_0 : i32, i32
  }
  func.func @transform_7(%arg0: i32) -> (i32, i32) {
    %c0_i32 = arith.constant 0 : i32
    %c0_i32_0 = arith.constant 0 : i32
    %c0_i32_1 = arith.constant 0 : i32
    return %c0_i32, %c0_i32_0 : i32, i32
  }
  func.func @transform_8(%arg0: i32) -> (i32, i32) {
    %c0_i32 = arith.constant 0 : i32
    %c0_i32_0 = arith.constant 0 : i32
    %c0_i32_1 = arith.constant 0 : i32
    return %c0_i32, %c0_i32_0 : i32, i32
  }
  func.func @transform_9(%arg0: i32) -> (i32, i32) {
    %c0_i32 = arith.constant 0 : i32
    %c0_i32_0 = arith.constant 0 : i32
    %c0_i32_1 = arith.constant 0 : i32
    return %c0_i32, %c0_i32_0 : i32, i32
  }
  func.func @transform_10(%arg0: i32) -> (i32, i32) {
    %c0_i32 = arith.constant 0 : i32
    %c0_i32_0 = arith.constant 0 : i32
    %c0_i32_1 = arith.constant 0 : i32
    return %c0_i32, %c0_i32_0 : i32, i32
  }
  func.func @transform_11(%arg0: i32) -> (i32, i32) {
    %c0_i32 = arith.constant 0 : i32
    %c0_i32_0 = arith.constant 0 : i32
    %c0_i32_1 = arith.constant 0 : i32
    return %c0_i32, %c0_i32_0 : i32, i32
  }
  func.func @transform_12(%arg0: i32) -> (i32, i32) {
    %c0_i32 = arith.constant 0 : i32
    %c0_i32_0 = arith.constant 0 : i32
    %c0_i32_1 = arith.constant 0 : i32
    return %c0_i32, %c0_i32_0 : i32, i32
  }
  func.func @transform_13(%arg0: i32) -> (i32, i32, i32) {
    %c0_i32 = arith.constant 0 : i32
    %c0_i32_0 = arith.constant 0 : i32
    %c0_i32_1 = arith.constant 0 : i32
    return %arg0, %c0_i32, %c0_i32_0 : i32, i32, i32
  }
}

</mosaic_0001>

<llo_original>
// kernel: tpu_custom_call.1
$region0: #{tpu_custom_call.1}
  #allocation0 [shape = 'u32[]', space=smem, size = 0x4, offset = 0x4, fixed_abs, tag = 'smem constant byte address 0x4 - core index']
  #allocation1 [shape = 'u32[144,128]{1,0:T(1,128)}', space=vmem, size = 0x12000, scoped, tag = 'internal scratch']
  %s0 = inlined_call_operand.hbm [shape: f32[4,8,128], index: 0, kind: input, shape index: {}]
  %s1 = inlined_call_operand.hbm [shape: f32[4,16,128], index: 1, kind: input, shape index: {}]
  %s2 = inlined_call_operand.vmem [shape: f32[4,1,16], index: 2, kind: input, shape index: {}]
  %s3 = inlined_call_operand.vmem [shape: f32[1,128], index: 3, kind: input, shape index: {}]
  %s4 = inlined_call_operand.vmem [shape: f32[1,128], index: 4, kind: input, shape index: {}]
  %s5 = inlined_call_operand.hbm [shape: bf16[128,128], index: 5, kind: input, shape index: {}]
  %s6 = inlined_call_operand.vmem [shape: f32[1,128], index: 6, kind: input, shape index: {}]
  %s7 = inlined_call_operand.hbm [shape: bf16[128,128], index: 7, kind: input, shape index: {}]
  %s8 = inlined_call_operand.vmem [shape: f32[1,128], index: 8, kind: input, shape index: {}]
  %s9 = inlined_call_operand.hbm [shape: bf16[128,128], index: 9, kind: input, shape index: {}]
  %s10 = inlined_call_operand.vmem [shape: f32[1,128], index: 10, kind: input, shape index: {}]
  %s11 = inlined_call_operand.hbm [shape: bf16[128,128], index: 11, kind: input, shape index: {}]
  %s12 = inlined_call_operand.vmem [shape: f32[1,128], index: 12, kind: input, shape index: {}]
  %s13 = inlined_call_operand.hbm [shape: f32[4,8,128], index: 13, kind: output, shape index: {}]
  %s14 = sld [smem:[#allocation0]]
  $region109: #{tpu_custom_call.1} parent=0
    _
  %s16 = ssub.s32 1, %s14
  %s17 = scalar_select 0, %s16, %s14
  $region1: #{tpu_custom_call.1} parent=0
    #allocation2 [shape = 'u8[16384]{0}', space=vmem, size = 0x4000, scoped, tag = 'input window, operand 0']
    #allocation3 [shape = 's32[2]{0}', space=sflag, size = 0x8, scoped, tag = 'scoped memory for tpu_custom_call.1']
    #allocation4 [shape = 's32[2]{0}', space=sflag, size = 0x8, scoped, tag = 'scoped memory for tpu_custom_call.1']
    #allocation5 [shape = 'u8[32768]{0}', space=vmem, size = 0x8000, scoped, tag = 'input window, operand 1']
    #allocation6 [shape = 's32[2]{0}', space=sflag, size = 0x8, scoped, tag = 'scoped memory for tpu_custom_call.1']
    #allocation7 [shape = 'u8[32768]{0}', space=vmem, size = 0x8000, scoped, tag = 'input window, operand 5, single buffered']
    #allocation8 [shape = 'u8[32768]{0}', space=vmem, size = 0x8000, scoped, tag = 'input window, operand 7, single buffered']
    #allocation9 [shape = 's32[1]{0}', space=sflag, size = 0x4, scoped, tag = 'scoped memory for tpu_custom_call.1']
    #allocation10 [shape = 'u8[32768]{0}', space=vmem, size = 0x8000, scoped, tag = 'input window, operand 9, single buffered']
    #allocation11 [shape = 'u8[32768]{0}', space=vmem, size = 0x8000, scoped, tag = 'input window, operand 11, single buffered']
    #allocation12 [shape = 's32[1]{0}', space=sflag, size = 0x4, scoped, tag = 'scoped memory for tpu_custom_call.1']
    #allocation13 [shape = 'u8[16384]{0}', space=vmem, size = 0x4000, scoped, tag = 'output window, operand 0']
    %18 = vsyncpa [#allocation3], 0
    %s19 = scalar_lea.sflag [#allocation3], 1
    %20 = vsyncpa %s19, 0
    %21 = vsyncpa [#allocation6], 0
    %s22 = scalar_lea.sflag [#allocation6], 1
    %23 = vsyncpa %s22, 0
    %24 = vsyncpa [#allocation9], 0
    %25 = vsyncpa [#allocation12], 0
    %26 = vsyncpa [#allocation4], 0
    %s27 = scalar_lea.sflag [#allocation4], 1
    %28 = vsyncpa %s27, 0
    loop: start=0, step=1, limit=4
    $region2: #{tpu_custom_call.1} parent=1 // loop_pre_header
      _
    $region3: #{tpu_custom_call.1} parent=1 // loop_header
      %s30 = sphi 0, %s34
      %p31 = scmp.ge.s32.totalorder %s30, 4
      %s40 = sphi 0, %s42
      %s43 = sphi 0, %s40
      %s44 = sphi 0, %s43
      %s60 = sphi 0, %s44
      %s66 = sphi 0, %s68
      %s69 = sphi 0, %s66
      %s70 = sphi 0, %s69
      %s86 = sphi 0, %s70
      %s92 = sphi 0, %s94
      %s95 = sphi 0, %s92
      %s96 = sphi 0, %s95
      %s112 = sphi 0, %s96
      %s116 = sphi 0, %s116
      %s118 = sphi 0, %s116
      %s119 = sphi 0, %s118
      %s133 = sphi 0, %s119
      %s137 = sphi 0, %s137
      %s139 = sphi 0, %s137
      %s140 = sphi 0, %s139
      %s154 = sphi 0, %s140
      %s158 = sphi 0, %s158
      %s160 = sphi 0, %s158
      %s161 = sphi 0, %s160
      %s175 = sphi 0, %s161
      %s179 = sphi 0, %s179
      %s181 = sphi 0, %s179
      %s182 = sphi 0, %s181
      %s196 = sphi 0, %s182
      %s200 = sphi 0, %s200
      %s202 = sphi 0, %s200
      %s203 = sphi 0, %s202
      %s217 = sphi 0, %s203
      %s221 = sphi 0, %s221
      %s223 = sphi 0, %s221
      %s224 = sphi 0, %s223
      %s238 = sphi 0, %s224
      %s242 = sphi 0, %s242
      %s244 = sphi 0, %s242
      %s245 = sphi 0, %s244
      %s259 = sphi 0, %s245
      %s263 = sphi 0, %s263
      %s265 = sphi 0, %s263
      %s266 = sphi 0, %s265
      %s280 = sphi 0, %s266
      %s284 = sphi 0, %s284
      %s286 = sphi 0, %s284
      %s287 = sphi 0, %s286
      %s301 = sphi 0, %s287
      %s305 = sphi 0, %s305
      %s307 = sphi 0, %s305
      %s308 = sphi 0, %s307
      %s322 = sphi 0, %s308
      %s328 = sphi 0, %s330
      %s331 = sphi 0, %s328
      %s332 = sphi 0, %s331
      %s348 = sphi 0, %s332
    $region4: #{tpu_custom_call.1} parent=1 // loop_header_branch
      %33 = sbr.rel (%p31) target = $region8
    $region5: #{tpu_custom_call.1} parent=1 // loop_body
      %s35 = ssub.s32 %s30, 1
      %s36 = ssub.s32 %s30, 2
      %s37 = sadd.s32 %s30, 1
      %s38 = ssub.s32 %s30, %s37
      %p39 = scmp.eq.s32.totalorder %s38, 0
      %s41 = sadd.s32 %s40, 1
      %s42 = scalar_select %p39, %s40, %s41
      %p45 = pneg %p39
      %p46 = scmp.eq.s32.totalorder %s30, 1
      %p47 = por %p45, %p46
      %p48 = scmp.ne.s32.totalorder %s40, %s43
      %p49 = scmp.eq.s32.totalorder %s30, 0
      %p50 = por %p48, %p49
      %p51 = scmp.ne.s32.totalorder %s40, %s43
      %p52 = scmp.eq.s32.totalorder %s35, 1
      %p53 = por %p51, %p52
      %p54 = scmp.ne.s32.totalorder %s43, %s44
      %p55 = scmp.eq.s32.totalorder %s35, 0
      %p56 = por %p54, %p55
      %p57 = scmp.ne.s32.totalorder %s43, %s44
      %p58 = scmp.eq.s32.totalorder %s36, 1
      %p59 = por %p57, %p58
      %p61 = scmp.ne.s32.totalorder %s44, %s60
      %p62 = scmp.eq.s32.totalorder %s36, 0
      %p63 = por %p61, %p62
      %s64 = ssub.s32 %s30, %s37
      %p65 = scmp.eq.s32.totalorder %s64, 0
      %s67 = sadd.s32 %s66, 1
      %s68 = scalar_select %p65, %s66, %s67
      %p71 = pneg %p65
      %p72 = scmp.eq.s32.totalorder %s30, 1
      %p73 = por %p71, %p72
      %p74 = scmp.ne.s32.totalorder %s66, %s69
      %p75 = scmp.eq.s32.totalorder %s30, 0
      %p76 = por %p74, %p75
      %p77 = scmp.ne.s32.totalorder %s66, %s69
      %p78 = scmp.eq.s32.totalorder %s35, 1
      %p79 = por %p77, %p78
      %p80 = scmp.ne.s32.totalorder %s69, %s70
      %p81 = scmp.eq.s32.totalorder %s35, 0
      %p82 = por %p80, %p81
      %p83 = scmp.ne.s32.totalorder %s69, %s70
      %p84 = scmp.eq.s32.totalorder %s36, 1
      %p85 = por %p83, %p84
      %p87 = scmp.ne.s32.totalorder %s70, %s86
      %p88 = scmp.eq.s32.totalorder %s36, 0
      %p89 = por %p87, %p88
      %s90 = ssub.s32 %s30, %s37
      %p91 = scmp.eq.s32.totalorder %s90, 0
      %s93 = sadd.s32 %s92, 1
      %s94 = scalar_select %p91, %s92, %s93
      %p97 = pneg %p91
      %p98 = scmp.eq.s32.totalorder %s30, 1
      %p99 = por %p97, %p98
      %p100 = scmp.ne.s32.totalorder %s92, %s95
      %p101 = scmp.eq.s32.totalorder %s30, 0
      %p102 = por %p100, %p101
      %p103 = scmp.ne.s32.totalorder %s92, %s95
      %p104 = scmp.eq.s32.totalorder %s35, 1
      %p105 = por %p103, %p104
      %p106 = scmp.ne.s32.totalorder %s95, %s96
      %p107 = scmp.eq.s32.totalorder %s35, 0
      %p108 = por %p106, %p107
      %p109 = scmp.ne.s32.totalorder %s95, %s96
      %p110 = scmp.eq.s32.totalorder %s36, 1
      %p111 = por %p109, %p110
      %p113 = scmp.ne.s32.totalorder %s96, %s112
      %p114 = scmp.eq.s32.totalorder %s36, 0
      %p115 = por %p113, %p114
      %s117 = sadd.s32 %s116, 1
      %p120 = scmp.eq.s32.totalorder %s30, 1
      %p121 = scmp.ne.s32.totalorder %s116, %s118
      %p122 = scmp.eq.s32.totalorder %s30, 0
      %p123 = por %p121, %p122
      %p124 = scmp.ne.s32.totalorder %s116, %s118
      %p125 = scmp.eq.s32.totalorder %s35, 1
      %p126 = por %p124, %p125
      %p127 = scmp.ne.s32.totalorder %s118, %s119
      %p128 = scmp.eq.s32.totalorder %s35, 0
      %p129 = por %p127, %p128
      %p130 = scmp.ne.s32.totalorder %s118, %s119
      %p131 = scmp.eq.s32.totalorder %s36, 1
      %p132 = por %p130, %p131
      %p134 = scmp.ne.s32.totalorder %s119, %s133
      %p135 = scmp.eq.s32.totalorder %s36, 0
      %p136 = por %p134, %p135
      %s138 = sadd.s32 %s137, 1
      %p141 = scmp.eq.s32.totalorder %s30, 1
      %p142 = scmp.ne.s32.totalorder %s137, %s139
      %p143 = scmp.eq.s32.totalorder %s30, 0
      %p144 = por %p142, %p143
      %p145 = scmp.ne.s32.totalorder %s137, %s139
      %p146 = scmp.eq.s32.totalorder %s35, 1
      %p147 = por %p145, %p146
      %p148 = scmp.ne.s32.totalorder %s139, %s140
      %p149 = scmp.eq.s32.totalorder %s35, 0
      %p150 = por %p148, %p149
      %p151 = scmp.ne.s32.totalorder %s139, %s140
      %p152 = scmp.eq.s32.totalorder %s36, 1
      %p153 = por %p151, %p152
      %p155 = scmp.ne.s32.totalorder %s140, %s154
      %p156 = scmp.eq.s32.totalorder %s36, 0
      %p157 = por %p155, %p156
      %s159 = sadd.s32 %s158, 1
      %p162 = scmp.eq.s32.totalorder %s30, 1
      %p163 = scmp.ne.s32.totalorder %s158, %s160
      %p164 = scmp.eq.s32.totalorder %s30, 0
      %p165 = por %p163, %p164
      %p166 = scmp.ne.s32.totalorder %s158, %s160
      %p167 = scmp.eq.s32.totalorder %s35, 1
      %p168 = por %p166, %p167
      %p169 = scmp.ne.s32.totalorder %s160, %s161
      %p170 = scmp.eq.s32.totalorder %s35, 0
      %p171 = por %p169, %p170
      %p172 = scmp.ne.s32.totalorder %s160, %s161
      %p173 = scmp.eq.s32.totalorder %s36, 1
      %p174 = por %p172, %p173
      %p176 = scmp.ne.s32.totalorder %s161, %s175
      %p177 = scmp.eq.s32.totalorder %s36, 0
      %p178 = por %p176, %p177
      %s180 = sadd.s32 %s179, 1
      %p183 = scmp.eq.s32.totalorder %s30, 1
      %p184 = scmp.ne.s32.totalorder %s179, %s181
      %p185 = scmp.eq.s32.totalorder %s30, 0
      %p186 = por %p184, %p185
      %p187 = scmp.ne.s32.totalorder %s179, %s181
      %p188 = scmp.eq.s32.totalorder %s35, 1
      %p189 = por %p187, %p188
      %p190 = scmp.ne.s32.totalorder %s181, %s182
      %p191 = scmp.eq.s32.totalorder %s35, 0
      %p192 = por %p190, %p191
      %p193 = scmp.ne.s32.totalorder %s181, %s182
      %p194 = scmp.eq.s32.totalorder %s36, 1
      %p195 = por %p193, %p194
      %p197 = scmp.ne.s32.totalorder %s182, %s196
      %p198 = scmp.eq.s32.totalorder %s36, 0
      %p199 = por %p197, %p198
      %s201 = sadd.s32 %s200, 1
      %p204 = scmp.eq.s32.totalorder %s30, 1
      %p205 = scmp.ne.s32.totalorder %s200, %s202
      %p206 = scmp.eq.s32.totalorder %s30, 0
      %p207 = por %p205, %p206
      %p208 = scmp.ne.s32.totalorder %s200, %s202
      %p209 = scmp.eq.s32.totalorder %s35, 1
      %p210 = por %p208, %p209
      %p211 = scmp.ne.s32.totalorder %s202, %s203
      %p212 = scmp.eq.s32.totalorder %s35, 0
      %p213 = por %p211, %p212
      %p214 = scmp.ne.s32.totalorder %s202, %s203
      %p215 = scmp.eq.s32.totalorder %s36, 1
      %p216 = por %p214, %p215
      %p218 = scmp.ne.s32.totalorder %s203, %s217
      %p219 = scmp.eq.s32.totalorder %s36, 0
      %p220 = por %p218, %p219
      %s222 = sadd.s32 %s221, 1
      %p225 = scmp.eq.s32.totalorder %s30, 1
      %p226 = scmp.ne.s32.totalorder %s221, %s223
      %p227 = scmp.eq.s32.totalorder %s30, 0
      %p228 = por %p226, %p227
      %p229 = scmp.ne.s32.totalorder %s221, %s223
      %p230 = scmp.eq.s32.totalorder %s35, 1
      %p231 = por %p229, %p230
      %p232 = scmp.ne.s32.totalorder %s223, %s224
      %p233 = scmp.eq.s32.totalorder %s35, 0
      %p234 = por %p232, %p233
      %p235 = scmp.ne.s32.totalorder %s223, %s224
      %p236 = scmp.eq.s32.totalorder %s36, 1
      %p237 = por %p235, %p236
      %p239 = scmp.ne.s32.totalorder %s224, %s238
      %p240 = scmp.eq.s32.totalorder %s36, 0
      %p241 = por %p239, %p240
      %s243 = sadd.s32 %s242, 1
      %p246 = scmp.eq.s32.totalorder %s30, 1
      %p247 = scmp.ne.s32.totalorder %s242, %s244
      %p248 = scmp.eq.s32.totalorder %s30, 0
      %p249 = por %p247, %p248
      %p250 = scmp.ne.s32.totalorder %s242, %s244
      %p251 = scmp.eq.s32.totalorder %s35, 1
      %p252 = por %p250, %p251
      %p253 = scmp.ne.s32.totalorder %s244, %s245
      %p254 = scmp.eq.s32.totalorder %s35, 0
      %p255 = por %p253, %p254
      %p256 = scmp.ne.s32.totalorder %s244, %s245
      %p257 = scmp.eq.s32.totalorder %s36, 1
      %p258 = por %p256, %p257
      %p260 = scmp.ne.s32.totalorder %s245, %s259
      %p261 = scmp.eq.s32.totalorder %s36, 0
      %p262 = por %p260, %p261
      %s264 = sadd.s32 %s263, 1
      %p267 = scmp.eq.s32.totalorder %s30, 1
      %p268 = scmp.ne.s32.totalorder %s263, %s265
      %p269 = scmp.eq.s32.totalorder %s30, 0
      %p270 = por %p268, %p269
      %p271 = scmp.ne.s32.totalorder %s263, %s265
      %p272 = scmp.eq.s32.totalorder %s35, 1
      %p273 = por %p271, %p272
      %p274 = scmp.ne.s32.totalorder %s265, %s266
      %p275 = scmp.eq.s32.totalorder %s35, 0
      %p276 = por %p274, %p275
      %p277 = scmp.ne.s32.totalorder %s265, %s266
      %p278 = scmp.eq.s32.totalorder %s36, 1
      %p279 = por %p277, %p278
      %p281 = scmp.ne.s32.totalorder %s266, %s280
      %p282 = scmp.eq.s32.totalorder %s36, 0
      %p283 = por %p281, %p282
      %s285 = sadd.s32 %s284, 1
      %p288 = scmp.eq.s32.totalorder %s30, 1
      %p289 = scmp.ne.s32.totalorder %s284, %s286
      %p290 = scmp.eq.s32.totalorder %s30, 0
      %p291 = por %p289, %p290
      %p292 = scmp.ne.s32.totalorder %s284, %s286
      %p293 = scmp.eq.s32.totalorder %s35, 1
      %p294 = por %p292, %p293
      %p295 = scmp.ne.s32.totalorder %s286, %s287
      %p296 = scmp.eq.s32.totalorder %s35, 0
      %p297 = por %p295, %p296
      %p298 = scmp.ne.s32.totalorder %s286, %s287
      %p299 = scmp.eq.s32.totalorder %s36, 1
      %p300 = por %p298, %p299
      %p302 = scmp.ne.s32.totalorder %s287, %s301
      %p303 = scmp.eq.s32.totalorder %s36, 0
      %p304 = por %p302, %p303
      %s306 = sadd.s32 %s305, 1
      %p309 = scmp.eq.s32.totalorder %s30, 1
      %p310 = scmp.ne.s32.totalorder %s305, %s307
      %p311 = scmp.eq.s32.totalorder %s30, 0
      %p312 = por %p310, %p311
      %p313 = scmp.ne.s32.totalorder %s305, %s307
      %p314 = scmp.eq.s32.totalorder %s35, 1
      %p315 = por %p313, %p314
      %p316 = scmp.ne.s32.totalorder %s307, %s308
      %p317 = scmp.eq.s32.totalorder %s35, 0
      %p318 = por %p316, %p317
      %p319 = scmp.ne.s32.totalorder %s307, %s308
      %p320 = scmp.eq.s32.totalorder %s36, 1
      %p321 = por %p319, %p320
      %p323 = scmp.ne.s32.totalorder %s308, %s322
      %p324 = scmp.eq.s32.totalorder %s36, 0
      %p325 = por %p323, %p324
      %s326 = ssub.s32 %s30, %s37
      %p327 = scmp.eq.s32.totalorder %s326, 0
      %s329 = sadd.s32 %s328, 1
      %s330 = scalar_select %p327, %s328, %s329
      %p333 = pneg %p327
      %p334 = scmp.eq.s32.totalorder %s30, 1
      %p335 = por %p333, %p334
      %p336 = scmp.ne.s32.totalorder %s328, %s331
      %p337 = scmp.eq.s32.totalorder %s30, 0
      %p338 = por %p336, %p337
      %p339 = scmp.ne.s32.totalorder %s328, %s331
      %p340 = scmp.eq.s32.totalorder %s35, 1
      %p341 = por %p339, %p340
      %p342 = scmp.ne.s32.totalorder %s331, %s332
      %p343 = scmp.eq.s32.totalorder %s35, 0
      %p344 = por %p342, %p343
      %p345 = scmp.ne.s32.totalorder %s331, %s332
      %p346 = scmp.eq.s32.totalorder %s36, 1
      %p347 = por %p345, %p346
      %p349 = scmp.ne.s32.totalorder %s332, %s348
      %p350 = scmp.eq.s32.totalorder %s36, 0
      %p351 = por %p349, %p350
      %p352 = scmp.le.s32.totalorder 1, %s30
      %p353 = scmp.lt.s32.totalorder %s30, 3
      %p354 = pnand %p352, %p353
      %p355 = pneg %p354
      // Predicated region
      $region9: #{tpu_custom_call.1} parent=5 // pred_check
        _
      $region10: #{tpu_custom_call.1} parent=5 // pred_check_branch
        %357 = sbr.rel (%p354) target = $region12
      $region11: #{tpu_custom_call.1} parent=5 // pred_region
        %s358 = ssub.s32 %s30, 1
        // Predicated region
        $region13: #{tpu_custom_call.1} parent=11 // pred_check
          %p359 = pneg %p129
        $region14: #{tpu_custom_call.1} parent=11 // pred_check_branch
          %361 = sbr.rel (%p359) target = $region16
        $region15: #{tpu_custom_call.1} parent=11 // pred_region
          _
        $region16: #{tpu_custom_call.1} parent=11 // pred_fallthru
          _
        // Predicated region
        $region17: #{tpu_custom_call.1} parent=11 // pred_check
          %p362 = pneg %p150
        $region18: #{tpu_custom_call.1} parent=11 // pred_check_branch
          %364 = sbr.rel (%p362) target = $region20
        $region19: #{tpu_custom_call.1} parent=11 // pred_region
          _
        $region20: #{tpu_custom_call.1} parent=11 // pred_fallthru
          _
        // Predicated region
        $region21: #{tpu_custom_call.1} parent=11 // pred_check
          %p365 = pneg %p171
        $region22: #{tpu_custom_call.1} parent=11 // pred_check_branch
          %367 = sbr.rel (%p365) target = $region24
        $region23: #{tpu_custom_call.1} parent=11 // pred_region
          %s369 = ssub.s32 1024, 1024
          %370 = vsyncadd [#allocation6], %s369
          %s371 = sshll.u32 [#allocation7], 4
          %s372 = int_to_ptr.vmem [resolvable:$true] %s371
          %377 = dma.hbm_to_vmem [thread:$0]  %s5, 1024, %s372, [#allocation6], 64, 64, 4
        $region24: #{tpu_custom_call.1} parent=11 // pred_fallthru
          _
        // Predicated region
        $region25: #{tpu_custom_call.1} parent=11 // pred_check
          %p378 = pneg %p192
        $region26: #{tpu_custom_call.1} parent=11 // pred_check_branch
          %380 = sbr.rel (%p378) target = $region28
        $region27: #{tpu_custom_call.1} parent=11 // pred_region
          _
        $region28: #{tpu_custom_call.1} parent=11 // pred_fallthru
          _
        // Predicated region
        $region29: #{tpu_custom_call.1} parent=11 // pred_check
          %p381 = pneg %p213
        $region30: #{tpu_custom_call.1} parent=11 // pred_check_branch
          %383 = sbr.rel (%p381) target = $region32
        $region31: #{tpu_custom_call.1} parent=11 // pred_region
          %s385 = ssub.s32 1024, 1024
          %386 = vsyncadd [#allocation9], %s385
          %s387 = sshll.u32 [#allocation8], 4
          %s388 = int_to_ptr.vmem [resolvable:$true] %s387
          %393 = dma.hbm_to_vmem [thread:$0]  %s7, 1024, %s388, [#allocation9], 64, 64, 4
        $region32: #{tpu_custom_call.1} parent=11 // pred_fallthru
          _
        // Predicated region
        $region33: #{tpu_custom_call.1} parent=11 // pred_check
          %p394 = pneg %p234
        $region34: #{tpu_custom_call.1} parent=11 // pred_check_branch
          %396 = sbr.rel (%p394) target = $region36
        $region35: #{tpu_custom_call.1} parent=11 // pred_region
          _
        $region36: #{tpu_custom_call.1} parent=11 // pred_fallthru
          _
        // Predicated region
        $region37: #{tpu_custom_call.1} parent=11 // pred_check
          %p397 = pneg %p255
        $region38: #{tpu_custom_call.1} parent=11 // pred_check_branch
          %399 = sbr.rel (%p397) target = $region40
        $region39: #{tpu_custom_call.1} parent=11 // pred_region
          %s401 = ssub.s32 1024, 1024
          %402 = vsyncadd [#allocation9], %s401
          %s403 = sshll.u32 [#allocation10], 4
          %s404 = int_to_ptr.vmem [resolvable:$true] %s403
          %409 = dma.hbm_to_vmem [thread:$0]  %s9, 1024, %s404, [#allocation9], 64, 64, 4
        $region40: #{tpu_custom_call.1} parent=11 // pred_fallthru
          _
        // Predicated region
        $region41: #{tpu_custom_call.1} parent=11 // pred_check
          %p410 = pneg %p276
        $region42: #{tpu_custom_call.1} parent=11 // pred_check_branch
          %412 = sbr.rel (%p410) target = $region44
        $region43: #{tpu_custom_call.1} parent=11 // pred_region
          _
        $region44: #{tpu_custom_call.1} parent=11 // pred_fallthru
          _
        // Predicated region
        $region45: #{tpu_custom_call.1} parent=11 // pred_check
          %p413 = pneg %p297
        $region46: #{tpu_custom_call.1} parent=11 // pred_check_branch
          %415 = sbr.rel (%p413) target = $region48
        $region47: #{tpu_custom_call.1} parent=11 // pred_region
          %s417 = ssub.s32 1024, 1024
          %418 = vsyncadd [#allocation12], %s417
          %s419 = sshll.u32 [#allocation11], 4
          %s420 = int_to_ptr.vmem [resolvable:$true] %s419
          %425 = dma.hbm_to_vmem [thread:$0]  %s11, 1024, %s420, [#allocation12], 64, 64, 4
        $region48: #{tpu_custom_call.1} parent=11 // pred_fallthru
          _
        // Predicated region
        $region49: #{tpu_custom_call.1} parent=11 // pred_check
          %p426 = pneg %p318
        $region50: #{tpu_custom_call.1} parent=11 // pred_check_branch
          %428 = sbr.rel (%p426) target = $region52
        $region51: #{tpu_custom_call.1} parent=11 // pred_region
          _
        $region52: #{tpu_custom_call.1} parent=11 // pred_fallthru
          _
      $region12: #{tpu_custom_call.1} parent=5 // pred_fallthru
        _
      %p429 = scmp.lt.s32.totalorder %s30, 2
      // Predicated region
      $region53: #{tpu_custom_call.1} parent=5 // pred_check
        %p430 = pneg %p429
      $region54: #{tpu_custom_call.1} parent=5 // pred_check_branch
        %432 = sbr.rel (%p430) target = $region56
      $region55: #{tpu_custom_call.1} parent=5 // pred_region
        // Predicated region
        $region57: #{tpu_custom_call.1} parent=55 // pred_check
          %p433 = pneg %p50
        $region58: #{tpu_custom_call.1} parent=55 // pred_check_branch
          %435 = sbr.rel (%p433) target = $region60
        $region59: #{tpu_custom_call.1} parent=55 // pred_region
          %s436 = sand.u32 %s40, 1
          %s437 = scalar_lea.sflag [#allocation3], %s436
          %s438 = sand.u32 %s40, 1
          %s439 = smul.addr %s438, 16
          %s440 = scalar_lea.vmem [#allocation2], %s439
          %s441 = smul.u32 2, %s30
          %s443 = ssub.s32 256, 256
          %444 = vsyncadd %s437, %s443
          %s445 = smul.addr %s441, 128
          %s446 = scalar_lea.hbm %s0, %s445
          %s447 = sshll.u32 %s440, 4
          %s448 = int_to_ptr.vmem [resolvable:$true] %s447
          %453 = dma.hbm_to_vmem [thread:$0]  %s446, 256, %s448, %s437, 128, 128, 8
        $region60: #{tpu_custom_call.1} parent=55 // pred_fallthru
          _
        // Predicated region
        $region61: #{tpu_custom_call.1} parent=55 // pred_check
          %p454 = pneg %p76
        $region62: #{tpu_custom_call.1} parent=55 // pred_check_branch
          %456 = sbr.rel (%p454) target = $region64
        $region63: #{tpu_custom_call.1} parent=55 // pred_region
          %s457 = sand.u32 %s30, 1
          %s458 = scalar_lea.sflag [#allocation6], %s457
          %s459 = sand.u32 %s66, 1
          %s460 = smul.addr %s459, 32
          %s461 = scalar_lea.vmem [#allocation5], %s460
          %s462 = smul.u32 2, %s30
          %s464 = ssub.s32 512, 512
          %465 = vsyncadd %s458, %s464
          %s466 = smul.addr %s462, 2
          %s467 = smul.addr %s466, 128
          %s468 = scalar_lea.hbm %s1, %s467
          %s469 = sshll.u32 %s461, 4
          %s470 = int_to_ptr.vmem [resolvable:$true] %s469
          %475 = dma.hbm_to_vmem [thread:$0]  %s468, 512, %s470, %s458, 128, 128, 8
        $region64: #{tpu_custom_call.1} parent=55 // pred_fallthru
          _
        // Predicated region
        $region65: #{tpu_custom_call.1} parent=55 // pred_check
          %p476 = pneg %p102
        $region66: #{tpu_custom_call.1} parent=55 // pred_check_branch
          %478 = sbr.rel (%p476) target = $region68
        $region67: #{tpu_custom_call.1} parent=55 // pred_region
          %s479 = smul.u32 2, %s30
          %p480 = scmp.lt.s32.totalorder %s479, 3
          %s481 = scalar_select %p480, %s479, 3
          %s482 = scalar_lea.vmem %s2, %s481
          %s483 = smul.u32 2, %s30
        $region68: #{tpu_custom_call.1} parent=55 // pred_fallthru
          _
      $region56: #{tpu_custom_call.1} parent=5 // pred_fallthru
        _
      %p484 = scmp.le.s32.totalorder 1, %s30
      %p485 = scmp.lt.s32.totalorder %s30, 3
      %p486 = pnand %p484, %p485
      %p487 = pneg %p486
      // Predicated region
      $region69: #{tpu_custom_call.1} parent=5 // pred_check
        _
      $region70: #{tpu_custom_call.1} parent=5 // pred_check_branch
        %489 = sbr.rel (%p486) target = $region72
      $region71: #{tpu_custom_call.1} parent=5 // pred_region
        %s490 = ssub.s32 %s30, 1
        %s491 = sand.u32 %s43, 1
        %s492 = scalar_lea.sflag [#allocation3], %s491
        %s493 = sand.u32 %s43, 1
        %s494 = smul.addr %s493, 16
        %s495 = scalar_lea.vmem [#allocation2], %s494
        // Predicated region
        $region73: #{tpu_custom_call.1} parent=71 // pred_check
          %p496 = pneg %p56
        $region74: #{tpu_custom_call.1} parent=71 // pred_check_branch
          %498 = sbr.rel (%p496) target = $region76
        $region75: #{tpu_custom_call.1} parent=71 // pred_region
          %499 = dma.done %s492, 256
        $region76: #{tpu_custom_call.1} parent=71 // pred_fallthru
          _
        %s500 = sand.u32 %s35, 1
        %s501 = scalar_lea.sflag [#allocation6], %s500
        %s502 = sand.u32 %s69, 1
        %s503 = smul.addr %s502, 32
        %s504 = scalar_lea.vmem [#allocation5], %s503
        // Predicated region
        $region77: #{tpu_custom_call.1} parent=71 // pred_check
          %p505 = pneg %p82
        $region78: #{tpu_custom_call.1} parent=71 // pred_check_branch
          %507 = sbr.rel (%p505) target = $region80
        $region79: #{tpu_custom_call.1} parent=71 // pred_region
          %508 = dma.done %s501, 512
        $region80: #{tpu_custom_call.1} parent=71 // pred_fallthru
          _
        // Predicated region
        $region81: #{tpu_custom_call.1} parent=71 // pred_check
          %p509 = pneg %p171
        $region82: #{tpu_custom_call.1} parent=71 // pred_check_branch
          %511 = sbr.rel (%p509) target = $region84
        $region83: #{tpu_custom_call.1} parent=71 // pred_region
          %512 = dma.done [#allocation6], 1024
        $region84: #{tpu_custom_call.1} parent=71 // pred_fallthru
          _
        // Predicated region
        $region85: #{tpu_custom_call.1} parent=71 // pred_check
          %p513 = pneg %p213
        $region86: #{tpu_custom_call.1} parent=71 // pred_check_branch
          %515 = sbr.rel (%p513) target = $region88
        $region87: #{tpu_custom_call.1} parent=71 // pred_region
          %516 = dma.done [#allocation9], 1024
        $region88: #{tpu_custom_call.1} parent=71 // pred_fallthru
          _
        // Predicated region
        $region89: #{tpu_custom_call.1} parent=71 // pred_check
          %p517 = pneg %p255
        $region90: #{tpu_custom_call.1} parent=71 // pred_check_branch
          %519 = sbr.rel (%p517) target = $region92
        $region91: #{tpu_custom_call.1} parent=71 // pred_region
          %520 = dma.done [#allocation9], 1024
        $region92: #{tpu_custom_call.1} parent=71 // pred_fallthru
          _
        // Predicated region
        $region93: #{tpu_custom_call.1} parent=71 // pred_check
          %p521 = pneg %p297
        $region94: #{tpu_custom_call.1} parent=71 // pred_check_branch
          %523 = sbr.rel (%p521) target = $region96
        $region95: #{tpu_custom_call.1} parent=71 // pred_region
          %524 = dma.done [#allocation12], 1024
        $region96: #{tpu_custom_call.1} parent=71 // pred_fallthru
          _
        %s525 = sand.u32 %s43, 1
        %s526 = scalar_lea.sflag [#allocation3], %s525
        %s527 = sand.u32 %s43, 1
        %s528 = smul.addr %s527, 16
        %s529 = scalar_lea.vmem [#allocation2], %s528
        %p530 = pneg %p56
        %p531 = pneg %p53
        %s532 = sand.u32 %s35, 1
        %s533 = scalar_lea.sflag [#allocation6], %s532
        %s534 = sand.u32 %s69, 1
        %s535 = smul.addr %s534, 32
        %s536 = scalar_lea.vmem [#allocation5], %s535
        %p537 = pneg %p82
        %p538 = pneg %p79
        %s539 = smul.u32 2, %s35
        %p540 = scmp.lt.s32.totalorder %s539, 3
        %s541 = scalar_select %p540, %s539, 3
        %s542 = scalar_lea.vmem %s2, %s541
        %p543 = pneg %p108
        %p544 = pneg %p105
        %p545 = pneg %p129
        %p546 = pneg %p126
        %p547 = pneg %p150
        %p548 = pneg %p147
        %p549 = pneg %p171
        %p550 = pneg %p168
        %p551 = pneg %p192
        %p552 = pneg %p189
        %p553 = pneg %p213
        %p554 = pneg %p210
        %p555 = pneg %p234
        %p556 = pneg %p231
        %p557 = pneg %p255
        %p558 = pneg %p252
        %p559 = pneg %p276
        %p560 = pneg %p273
        %p561 = pneg %p297
        %p562 = pneg %p294
        %p563 = pneg %p318
        %p564 = pneg %p315
        %p565 = pneg %p344
        %p566 = pneg %p341
        %s567 = sand.u32 %s331, 1
        %s568 = scalar_lea.sflag [#allocation4], %s567
        %s569 = sand.u32 %s331, 1
        %s570 = smul.addr %s569, 16
        %s571 = scalar_lea.vmem [#allocation13], %s570
        %s572 = smul.u32 2, %s35
        %s573 = smul.u32 2, %s35
        %s574 = smul.u32 2, %s35
        %p575 = scmp.lt.s32.totalorder %s574, 3
        %s576 = scalar_select %p575, %s574, 3
        %s577 = scalar_lea.vmem %s2, %s576
        %s578 = smul.u32 2, %s35
        %s579 = smul.u32 2, %s35
        %v581 = vld [vmem:[%s504] sm:$0xff]
        %v582 = vld [vmem:[%s504 + $0x8] sm:$0xff]
        %v583 = vld [vmem:[%s504 + $0x10] sm:$0xff]
        %v584 = vld [vmem:[%s504 + $0x18] sm:$0xff]
        %585 = vadd.xlane.f32.xlu0 %v581
        %v586 = vpop.xlane.xlu0 %585
        %587 = vadd.xlane.f32.xlu0 %v582
        %v588 = vpop.xlane.xlu0 %587
        %589 = vadd.xlane.f32.xlu0 %v583
        %v590 = vpop.xlane.xlu0 %589
        %591 = vadd.xlane.f32.xlu0 %v584
        %v592 = vpop.xlane.xlu0 %591
        %v593 = vrcp.pop 128.0
        %v594 = vmul.f32 %v586, %v593
        %v595 = vmul.f32 %v588, %v593
        %v596 = vmul.f32 %v590, %v593
        %v597 = vmul.f32 %v592, %v593
        %v598 = vmul.f32 %v581, %v581
        %v599 = vmul.f32 %v582, %v582
        %v600 = vmul.f32 %v583, %v583
        %v601 = vmul.f32 %v584, %v584
        %602 = vadd.xlane.f32.xlu0 %v598
        %v603 = vpop.xlane.xlu0 %602
        %604 = vadd.xlane.f32.xlu0 %v599
        %v605 = vpop.xlane.xlu0 %604
        %606 = vadd.xlane.f32.xlu0 %v600
        %v607 = vpop.xlane.xlu0 %606
        %608 = vadd.xlane.f32.xlu0 %v601
        %v609 = vpop.xlane.xlu0 %608
        %v610 = vmul.f32 %v603, %v593
        %v611 = vmul.f32 %v605, %v593
        %v612 = vmul.f32 %v607, %v593
        %v613 = vmul.f32 %v609, %v593
        %v614 = vmul.f32 %v594, %v594
        %v615 = vmul.f32 %v595, %v595
        %v616 = vmul.f32 %v596, %v596
        %v617 = vmul.f32 %v597, %v597
        %v618 = vsub.f32 %v610, %v614
        %v619 = vsub.f32 %v611, %v615
        %v620 = vsub.f32 %v612, %v616
        %v621 = vsub.f32 %v613, %v617
        %v622 = vsub.f32 %v581, %v594
        %v623 = vsub.f32 %v582, %v595
        %v624 = vsub.f32 %v583, %v596
        %v625 = vsub.f32 %v584, %v597
        %v626 = vadd.f32 %v618, 1e-05
        %v627 = vadd.f32 %v619, 1e-05
        %v628 = vadd.f32 %v620, 1e-05
        %v629 = vadd.f32 %v621, 1e-05
        %v630 = vrsqrt.pop %v626
        %v631 = vrsqrt.pop %v627
        %v632 = vrsqrt.pop %v628
        %v633 = vrsqrt.pop %v629
        %v634 = vmul.f32 %v622, %v630
        %v635 = vmul.f32 %v623, %v631
        %v636 = vmul.f32 %v624, %v632
        %v637 = vmul.f32 %v625, %v633
        %v638 = vld [vmem:[%s3] sm:$0x1]
        %v640 = vlaneseq
        %v641 = vshrl.u32 %v640, 7
        %v642 = vsub.s32 0, %v641
        %v643 = vrot.slane %v638, %v642
        %v645 = vmul.f32 %v634, %v643
        %v646 = vmul.f32 %v635, %v643
        %v647 = vmul.f32 %v636, %v643
        %v648 = vmul.f32 %v637, %v643
        %v649 = vld [vmem:[%s4] sm:$0x1]
        %v651 = vlaneseq
        %v652 = vshrl.u32 %v651, 7
        %v653 = vsub.s32 0, %v652
        %v654 = vrot.slane %v649, %v653
        %v656 = vadd.f32 %v645, %v654
        %v657 = vadd.f32 %v646, %v654
        %v658 = vadd.f32 %v647, %v654
        %v659 = vadd.f32 %v648, %v654
        %v660 = vld [vmem:[%s495] sm:$0xff]
        %v661 = vld [vmem:[%s495 + $0x8] sm:$0xff]
        %v662 = vpack.c.bf16 %v661, %v660
        %v663 = vld [vmem:[#allocation7] sm:$0xf]
        %v664 = vld [vmem:[#allocation7 + $0x4] sm:$0xf]
        %v665 = vld [vmem:[#allocation7 + $0x8] sm:$0xf]
        %v666 = vld [vmem:[#allocation7 + $0xc] sm:$0xf]
        %v667 = vld [vmem:[#allocation7 + $0x10] sm:$0xf]
        %v668 = vld [vmem:[#allocation7 + $0x14] sm:$0xf]
        %v669 = vld [vmem:[#allocation7 + $0x18] sm:$0xf]
        %v670 = vld [vmem:[#allocation7 + $0x1c] sm:$0xf]
        %v671 = vld [vmem:[#allocation7 + $0x20] sm:$0xf]
        %v672 = vld [vmem:[#allocation7 + $0x24] sm:$0xf]
        %v673 = vld [vmem:[#allocation7 + $0x28] sm:$0xf]
        %v674 = vld [vmem:[#allocation7 + $0x2c] sm:$0xf]
        %v675 = vld [vmem:[#allocation7 + $0x30] sm:$0xf]
        %v676 = vld [vmem:[#allocation7 + $0x34] sm:$0xf]
        %v677 = vld [vmem:[#allocation7 + $0x38] sm:$0xf]
        %v678 = vld [vmem:[#allocation7 + $0x3c] sm:$0xf]
        %v679 = vld [vmem:[%s6] sm:$0x1]
        %v681 = vlaneseq
        %v682 = vshrl.u32 %v681, 7
        %v683 = vsub.s32 0, %v682
        %v684 = vrot.slane %v679, %v683
        %v702 = vunpack.c.l.b16 %v663
        %v703 = vunpack.c.l.b16 %v664
        %v704 = vunpack.c.l.b16 %v665
        %v705 = vunpack.c.l.b16 %v666
        %v706 = vunpack.c.l.b16 %v667
        %v707 = vunpack.c.l.b16 %v668
        %v708 = vunpack.c.l.b16 %v669
        %v709 = vunpack.c.l.b16 %v670
        %v710 = vunpack.c.l.b16 %v671
        %v711 = vunpack.c.l.b16 %v672
        %v712 = vunpack.c.l.b16 %v673
        %v713 = vunpack.c.l.b16 %v674
        %v714 = vunpack.c.l.b16 %v675
        %v715 = vunpack.c.l.b16 %v676
        %v716 = vunpack.c.l.b16 %v677
        %v717 = vunpack.c.l.b16 %v678
        %v718 = vpack.c.b16 %v703, %v702
        %v719 = vpack.c.b16 %v705, %v704
        %v720 = vpack.c.b16 %v707, %v706
        %v721 = vpack.c.b16 %v709, %v708
        %v722 = vpack.c.b16 %v711, %v710
        %v723 = vpack.c.b16 %v713, %v712
        %v724 = vpack.c.b16 %v715, %v714
        %v725 = vpack.c.b16 %v717, %v716
        %734 = vmatprep.subr.bf16.mxu0 0
        %735 = vmatpush1.bf16.msra.mxu0 %v718
        %736 = vmatprep.subr.bf16.mxu0 0
        %737 = vmatpush1.bf16.msra.mxu0 %v719
        %738 = vmatprep.subr.bf16.mxu0 0
        %739 = vmatpush1.bf16.msra.mxu0 %v720
        %740 = vmatprep.subr.bf16.mxu0 0
        %741 = vmatpush1.bf16.msra.mxu0 %v721
        %742 = vmatprep.subr.bf16.mxu0 0
        %743 = vmatpush1.bf16.msra.mxu0 %v722
        %744 = vmatprep.subr.bf16.mxu0 0
        %745 = vmatpush1.bf16.msra.mxu0 %v723
        %746 = vmatprep.subr.bf16.mxu0 0
        %747 = vmatpush1.bf16.msra.mxu0 %v724
        %748 = vmatprep.subr.bf16.mxu0 0
        %749 = vmatpush1.bf16.msra.mxu0 %v725
        %750 = vmatprep.subr.bf16.mxu0 0
        %751 = vmatpush1.bf16.msra.mxu0 0
        %752 = vmatprep.subr.bf16.mxu0 0
        %753 = vmatpush1.bf16.msra.mxu0 0
        %754 = vmatprep.subr.bf16.mxu0 0
        %755 = vmatpush1.bf16.msra.mxu0 0
        %756 = vmatprep.subr.bf16.mxu0 0
        %757 = vmatpush1.bf16.msra.mxu0 0
        %758 = vmatprep.subr.bf16.mxu0 0
        %759 = vmatpush1.bf16.msra.mxu0 0
        %760 = vmatprep.subr.bf16.mxu0 0
        %761 = vmatpush1.bf16.msra.mxu0 0
        %762 = vmatprep.subr.bf16.mxu0 0
        %763 = vmatpush1.bf16.msra.mxu0 0
        %764 = vmatprep.subr.bf16.mxu0 0
        %765 = vmatpush1.bf16.msra.mxu0 0
        %766 = vmatprep.mubr.bf16.mxu0 0
        %767 = vmatmul.mubr.bf16.gmra.mrb[0].mxu0 %v662
        %v768 = vpop.f32.mrb[0].mxu0
        %v769 = vadd.f32 %v684, %v768
        %v770 = vpop.f32.mrb[0].mxu0
        %v771 = vpop.f32.mrb[0].mxu0
        %v772 = vadd.f32 %v684, %v771
        %v773 = vpop.f32.mrb[0].mxu0
        %774 = vdwg.mxu0
        %v775 = vpack.c.bf16 %v657, %v656
        %v776 = vpack.c.bf16 %v659, %v658
        %v777 = vld [vmem:[#allocation8] sm:$0xf]
        %v778 = vld [vmem:[#allocation8 + $0x4] sm:$0xf]
        %v779 = vld [vmem:[#allocation8 + $0x8] sm:$0xf]
        %v780 = vld [vmem:[#allocation8 + $0xc] sm:$0xf]
        %v781 = vld [vmem:[#allocation8 + $0x10] sm:$0xf]
        %v782 = vld [vmem:[#allocation8 + $0x14] sm:$0xf]
        %v783 = vld [vmem:[#allocation8 + $0x18] sm:$0xf]
        %v784 = vld [vmem:[#allocation8 + $0x1c] sm:$0xf]
        %v785 = vld [vmem:[#allocation8 + $0x20] sm:$0xf]
        %v786 = vld [vmem:[#allocation8 + $0x24] sm:$0xf]
        %v787 = vld [vmem:[#allocation8 + $0x28] sm:$0xf]
        %v788 = vld [vmem:[#allocation8 + $0x2c] sm:$0xf]
        %v789 = vld [vmem:[#allocation8 + $0x30] sm:$0xf]
        %v790 = vld [vmem:[#allocation8 + $0x34] sm:$0xf]
        %v791 = vld [vmem:[#allocation8 + $0x38] sm:$0xf]
        %v792 = vld [vmem:[#allocation8 + $0x3c] sm:$0xf]
        %v793 = vld [vmem:[%s8] sm:$0x1]
        %v795 = vlaneseq
        %v796 = vshrl.u32 %v795, 7
        %v797 = vsub.s32 0, %v796
        %v798 = vrot.slane %v793, %v797
        %v816 = vunpack.c.l.b16 %v777
        %v817 = vunpack.c.l.b16 %v778
        %v818 = vunpack.c.l.b16 %v779
        %v819 = vunpack.c.l.b16 %v780
        %v820 = vunpack.c.l.b16 %v781
        %v821 = vunpack.c.l.b16 %v782
        %v822 = vunpack.c.l.b16 %v783
        %v823 = vunpack.c.l.b16 %v784
        %v824 = vunpack.c.l.b16 %v785
        %v825 = vunpack.c.l.b16 %v786
        %v826 = vunpack.c.l.b16 %v787
        %v827 = vunpack.c.l.b16 %v788
        %v828 = vunpack.c.l.b16 %v789
        %v829 = vunpack.c.l.b16 %v790
        %v830 = vunpack.c.l.b16 %v791
        %v831 = vunpack.c.l.b16 %v792
        %v832 = vpack.c.b16 %v817, %v816
        %v833 = vpack.c.b16 %v819, %v818
        %v834 = vpack.c.b16 %v821, %v820
        %v835 = vpack.c.b16 %v823, %v822
        %v836 = vpack.c.b16 %v825, %v824
        %v837 = vpack.c.b16 %v827, %v826
        %v838 = vpack.c.b16 %v829, %v828
        %v839 = vpack.c.b16 %v831, %v830
        %848 = vmatprep.subr.bf16.mxu0 0
        %849 = vmatpush1.bf16.msra.mxu0 %v832
        %850 = vmatprep.subr.bf16.mxu0 0
        %851 = vmatpush1.bf16.msra.mxu0 %v833
        %852 = vmatprep.subr.bf16.mxu0 0
        %853 = vmatpush1.bf16.msra.mxu0 %v834
        %854 = vmatprep.subr.bf16.mxu0 0
        %855 = vmatpush1.bf16.msra.mxu0 %v835
        %856 = vmatprep.subr.bf16.mxu0 0
        %857 = vmatpush1.bf16.msra.mxu0 %v836
        %858 = vmatprep.subr.bf16.mxu0 0
        %859 = vmatpush1.bf16.msra.mxu0 %v837
        %860 = vmatprep.subr.bf16.mxu0 0
        %861 = vmatpush1.bf16.msra.mxu0 %v838
        %862 = vmatprep.subr.bf16.mxu0 0
        %863 = vmatpush1.bf16.msra.mxu0 %v839
        %864 = vmatprep.subr.bf16.mxu0 0
        %865 = vmatpush1.bf16.msra.mxu0 0
        %866 = vmatprep.subr.bf16.mxu0 0
        %867 = vmatpush1.bf16.msra.mxu0 0
        %868 = vmatprep.subr.bf16.mxu0 0
        %869 = vmatpush1.bf16.msra.mxu0 0
        %870 = vmatprep.subr.bf16.mxu0 0
        %871 = vmatpush1.bf16.msra.mxu0 0
        %872 = vmatprep.subr.bf16.mxu0 0
        %873 = vmatpush1.bf16.msra.mxu0 0
        %874 = vmatprep.subr.bf16.mxu0 0
        %875 = vmatpush1.bf16.msra.mxu0 0
        %876 = vmatprep.subr.bf16.mxu0 0
        %877 = vmatpush1.bf16.msra.mxu0 0
        %878 = vmatprep.subr.bf16.mxu0 0
        %879 = vmatpush1.bf16.msra.mxu0 0
        %880 = vmatprep.mubr.bf16.mxu0 0
        %881 = vmatmul.mubr.bf16.gmra.mrb[0].mxu0 %v775
        %v882 = vpop.f32.mrb[0].mxu0
        %v883 = vadd.f32 %v798, %v882
        %v884 = vpop.f32.mrb[0].mxu0
        %v885 = vpop.f32.mrb[0].mxu0
        %v886 = vadd.f32 %v798, %v885
        %v887 = vpop.f32.mrb[0].mxu0
        %888 = vmatprep.mubr.bf16.mxu0 0
        %889 = vmatmul.mubr.bf16.gmra.mrb[0].mxu0 %v776
        %v890 = vpop.f32.mrb[0].mxu0
        %v891 = vadd.f32 %v798, %v890
        %v892 = vpop.f32.mrb[0].mxu0
        %v893 = vpop.f32.mrb[0].mxu0
        %v894 = vadd.f32 %v798, %v893
        %v895 = vpop.f32.mrb[0].mxu0
        %896 = vdwg.mxu0
        %v897 = vld [vmem:[#allocation10] sm:$0xf]
        %v898 = vld [vmem:[#allocation10 + $0x4] sm:$0xf]
        %v899 = vld [vmem:[#allocation10 + $0x8] sm:$0xf]
        %v900 = vld [vmem:[#allocation10 + $0xc] sm:$0xf]
        %v901 = vld [vmem:[#allocation10 + $0x10] sm:$0xf]
        %v902 = vld [vmem:[#allocation10 + $0x14] sm:$0xf]
        %v903 = vld [vmem:[#allocation10 + $0x18] sm:$0xf]
        %v904 = vld [vmem:[#allocation10 + $0x1c] sm:$0xf]
        %v905 = vld [vmem:[#allocation10 + $0x20] sm:$0xf]
        %v906 = vld [vmem:[#allocation10 + $0x24] sm:$0xf]
        %v907 = vld [vmem:[#allocation10 + $0x28] sm:$0xf]
        %v908 = vld [vmem:[#allocation10 + $0x2c] sm:$0xf]
        %v909 = vld [vmem:[#allocation10 + $0x30] sm:$0xf]
        %v910 = vld [vmem:[#allocation10 + $0x34] sm:$0xf]
        %v911 = vld [vmem:[#allocation10 + $0x38] sm:$0xf]
        %v912 = vld [vmem:[#allocation10 + $0x3c] sm:$0xf]
        %v913 = vld [vmem:[%s10] sm:$0x1]
        %v915 = vlaneseq
        %v916 = vshrl.u32 %v915, 7
        %v917 = vsub.s32 0, %v916
        %v918 = vrot.slane %v913, %v917
        %v936 = vunpack.c.l.b16 %v897
        %v937 = vunpack.c.l.b16 %v898
        %v938 = vunpack.c.l.b16 %v899
        %v939 = vunpack.c.l.b16 %v900
        %v940 = vunpack.c.l.b16 %v901
        %v941 = vunpack.c.l.b16 %v902
        %v942 = vunpack.c.l.b16 %v903
        %v943 = vunpack.c.l.b16 %v904
        %v944 = vunpack.c.l.b16 %v905
        %v945 = vunpack.c.l.b16 %v906
        %v946 = vunpack.c.l.b16 %v907
        %v947 = vunpack.c.l.b16 %v908
        %v948 = vunpack.c.l.b16 %v909
        %v949 = vunpack.c.l.b16 %v910
        %v950 = vunpack.c.l.b16 %v911
        %v951 = vunpack.c.l.b16 %v912
        %v952 = vpack.c.b16 %v937, %v936
        %v953 = vpack.c.b16 %v939, %v938
        %v954 = vpack.c.b16 %v941, %v940
        %v955 = vpack.c.b16 %v943, %v942
        %v956 = vpack.c.b16 %v945, %v944
        %v957 = vpack.c.b16 %v947, %v946
        %v958 = vpack.c.b16 %v949, %v948
        %v959 = vpack.c.b16 %v951, %v950
        %968 = vmatprep.subr.bf16.mxu0 0
        %969 = vmatpush1.bf16.msra.mxu0 %v952
        %970 = vmatprep.subr.bf16.mxu0 0
        %971 = vmatpush1.bf16.msra.mxu0 %v953
        %972 = vmatprep.subr.bf16.mxu0 0
        %973 = vmatpush1.bf16.msra.mxu0 %v954
        %974 = vmatprep.subr.bf16.mxu0 0
        %975 = vmatpush1.bf16.msra.mxu0 %v955
        %976 = vmatprep.subr.bf16.mxu0 0
        %977 = vmatpush1.bf16.msra.mxu0 %v956
        %978 = vmatprep.subr.bf16.mxu0 0
        %979 = vmatpush1.bf16.msra.mxu0 %v957
        %980 = vmatprep.subr.bf16.mxu0 0
        %981 = vmatpush1.bf16.msra.mxu0 %v958
        %982 = vmatprep.subr.bf16.mxu0 0
        %983 = vmatpush1.bf16.msra.mxu0 %v959
        %984 = vmatprep.subr.bf16.mxu0 0
        %985 = vmatpush1.bf16.msra.mxu0 0
        %986 = vmatprep.subr.bf16.mxu0 0
        %987 = vmatpush1.bf16.msra.mxu0 0
        %988 = vmatprep.subr.bf16.mxu0 0
        %989 = vmatpush1.bf16.msra.mxu0 0
        %990 = vmatprep.subr.bf16.mxu0 0
        %991 = vmatpush1.bf16.msra.mxu0 0
        %992 = vmatprep.subr.bf16.mxu0 0
        %993 = vmatpush1.bf16.msra.mxu0 0
        %994 = vmatprep.subr.bf16.mxu0 0
        %995 = vmatpush1.bf16.msra.mxu0 0
        %996 = vmatprep.subr.bf16.mxu0 0
        %997 = vmatpush1.bf16.msra.mxu0 0
        %998 = vmatprep.subr.bf16.mxu0 0
        %999 = vmatpush1.bf16.msra.mxu0 0
        %1000 = vmatprep.mubr.bf16.mxu0 0
        %1001 = vmatmul.mubr.bf16.gmra.mrb[0].mxu0 %v775
        %v1002 = vpop.f32.mrb[0].mxu0
        %v1003 = vadd.f32 %v918, %v1002
        %v1004 = vpop.f32.mrb[0].mxu0
        %v1005 = vpop.f32.mrb[0].mxu0
        %v1006 = vadd.f32 %v918, %v1005
        %v1007 = vpop.f32.mrb[0].mxu0
        %1008 = vmatprep.mubr.bf16.mxu0 0
        %1009 = vmatmul.mubr.bf16.gmra.mrb[0].mxu0 %v776
        %v1010 = vpop.f32.mrb[0].mxu0
        %v1011 = vadd.f32 %v918, %v1010
        %v1012 = vpop.f32.mrb[0].mxu0
        %v1013 = vpop.f32.mrb[0].mxu0
        %v1014 = vadd.f32 %v918, %v1013
        %v1015 = vpop.f32.mrb[0].mxu0
        %1016 = vdwg.mxu0
        %v1017 = vpack.c.bf16 %v772, %v769
        %v1018 = vpack.c.bf16 %v886, %v883
        %v1019 = vpack.c.bf16 %v894, %v891
        %v1020 = vpack.c.bf16 %v1006, %v1003
        %v1021 = vpack.c.bf16 %v1014, %v1011
        %v1022 = vld [vmem:[%s577] sm:$0x1]
        %v1023 = vld [vmem:[%s577 + $0x1] sm:$0x1]
        %vm1024 = vcmask 261120
        %v1026 = vsel %vm1024, %v1017, 0
        %v1029 = vsel %vm1024, %v1018, 0
        %1031 = vmatprep.subr.bf16.mxu0 0
        %1032 = vmatpush1.bf16.xpose.msra.mxu0 %v1029
        %1033 = vmatprep.subr.bf16.mxu0 0
        %1034 = vmatpush1.bf16.xpose.msra.mxu0 0
        %1035 = vmatprep.subr.bf16.mxu0 0
        %1036 = vmatpush1.bf16.xpose.msra.mxu0 0
        %1037 = vmatprep.subr.bf16.mxu0 0
        %1038 = vmatpush1.bf16.xpose.msra.mxu0 0
        %1039 = vmatprep.subr.bf16.mxu0 0
        %1040 = vmatpush1.bf16.xpose.msra.mxu0 0
        %1041 = vmatprep.subr.bf16.mxu0 0
        %1042 = vmatpush1.bf16.xpose.msra.mxu0 0
        %1043 = vmatprep.subr.bf16.mxu0 0
        %1044 = vmatpush1.bf16.xpose.msra.mxu0 0
        %1045 = vmatprep.subr.bf16.mxu0 0
        %1046 = vmatpush1.bf16.xpose.msra.mxu0 0
        %1047 = vmatprep.subr.bf16.mxu0 0
        %1048 = vmatpush1.bf16.xpose.msra.mxu0 0
        %1049 = vmatprep.subr.bf16.mxu0 0
        %1050 = vmatpush1.bf16.xpose.msra.mxu0 0
        %1051 = vmatprep.subr.bf16.mxu0 0
        %1052 = vmatpush1.bf16.xpose.msra.mxu0 0
        %1053 = vmatprep.subr.bf16.mxu0 0
        %1054 = vmatpush1.bf16.xpose.msra.mxu0 0
        %1055 = vmatprep.subr.bf16.mxu0 0
        %1056 = vmatpush1.bf16.xpose.msra.mxu0 0
        %1057 = vmatprep.subr.bf16.mxu0 0
        %1058 = vmatpush1.bf16.xpose.msra.mxu0 0
        %1059 = vmatprep.subr.bf16.mxu0 0
        %1060 = vmatpush1.bf16.xpose.msra.mxu0 0
        %1061 = vmatprep.subr.bf16.mxu0 0
        %1062 = vmatpush1.bf16.xpose.msra.mxu0 0
        %1063 = vmatprep.mubr.bf16.mxu0 0
        %1064 = vmatmul.mubr.bf16.gmra.mrb[0].mxu0 %v1026
        %v1065 = vpop.f32.mrb[0].mxu0
        %v1066 = vadd.f32 0.0, %v1065
        %v1067 = vpop.f32.mrb[0].mxu0
        %v1068 = vpop.f32.mrb[0].mxu0
        %v1069 = vpop.f32.mrb[0].mxu0
        %1070 = vdwg.mxu0
        %v1071 = vmul.f32 %v1066, 0.17677669
        %v1073 = vlaneseq
        %v1074 = vshrl.u32 %v1073, 7
        %v1075 = vsub.s32 0, %v1074
        %v1076 = vrot.slane %v1022, %v1075
        %v1078 = vmul.f32 %v1071, %v1076
        %v1079 = vsub.f32 1.0, %v1022
        %v1080 = vmul.f32 %v1079, 100000.0
        %v1082 = vlaneseq
        %v1083 = vshrl.u32 %v1082, 7
        %v1084 = vsub.s32 0, %v1083
        %v1085 = vrot.slane %v1080, %v1084
        %v1087 = vsub.f32 %v1078, %v1085
        %vm1088 = vcmask 130048
        %v1089 = vsel %vm1088, %v1087, -inf
        %1090 = vmax.xlane.f32.xlu0 %v1089
        %v1091 = vpop.xlane.xlu0 %1090
        %v1092 = vsub.f32 %v1087, %v1091
        %v1093 = vmul.f32 %v1092, 1.442695
        %v1094 = vpow.pop %v1093
        %v1095 = vsel %vm1088, %v1094, 0.0
        %1096 = vadd.xlane.f32.xlu0 %v1095
        %v1097 = vpop.xlane.xlu0 %1096
        %v1098 = vrcp.pop %v1097
        %v1099 = vmul.f32 %v1094, %v1098
        %v1100 = vpack.c.bf16 %v1099, %v1099
        %v1102 = vsel %vm1088, %v1100, 0
        %1104 = vmatprep.subr.bf16.mxu0 0
        %1105 = vmatpush1.bf16.msra.mxu0 %v1020
        %1106 = vmatprep.subr.bf16.mxu0 0
        %1107 = vmatpush1.bf16.msra.mxu0 0
        %1108 = vmatprep.subr.bf16.mxu0 0
        %1109 = vmatpush1.bf16.msra.mxu0 0
        %1110 = vmatprep.subr.bf16.mxu0 0
        %1111 = vmatpush1.bf16.msra.mxu0 0
        %1112 = vmatprep.subr.bf16.mxu0 0
        %1113 = vmatpush1.bf16.msra.mxu0 0
        %1114 = vmatprep.subr.bf16.mxu0 0
        %1115 = vmatpush1.bf16.msra.mxu0 0
        %1116 = vmatprep.subr.bf16.mxu0 0
        %1117 = vmatpush1.bf16.msra.mxu0 0
        %1118 = vmatprep.subr.bf16.mxu0 0
        %1119 = vmatpush1.bf16.msra.mxu0 0
        %1120 = vmatprep.subr.bf16.mxu0 0
        %1121 = vmatpush1.bf16.msra.mxu0 0
        %1122 = vmatprep.subr.bf16.mxu0 0
        %1123 = vmatpush1.bf16.msra.mxu0 0
        %1124 = vmatprep.subr.bf16.mxu0 0
        %1125 = vmatpush1.bf16.msra.mxu0 0
        %1126 = vmatprep.subr.bf16.mxu0 0
        %1127 = vmatpush1.bf16.msra.mxu0 0
        %1128 = vmatprep.subr.bf16.mxu0 0
        %1129 = vmatpush1.bf16.msra.mxu0 0
        %1130 = vmatprep.subr.bf16.mxu0 0
        %1131 = vmatpush1.bf16.msra.mxu0 0
        %1132 = vmatprep.subr.bf16.mxu0 0
        %1133 = vmatpush1.bf16.msra.mxu0 0
        %1134 = vmatprep.subr.bf16.mxu0 0
        %1135 = vmatpush1.bf16.msra.mxu0 0
        %1136 = vmatprep.mubr.bf16.mxu0 0
        %1137 = vmatmul.mubr.bf16.gmra.mrb[0].mxu0 %v1102
        %v1138 = vpop.f32.mrb[0].mxu0
        %v1139 = vadd.f32 0.0, %v1138
        %v1140 = vpop.f32.mrb[0].mxu0
        %v1141 = vpop.f32.mrb[0].mxu0
        %v1142 = vpop.f32.mrb[0].mxu0
        %1143 = vdwg.mxu0
        %v1144 = vpack.c.bf16 %v1139, %v1139
        %v1145 = vld [vmem:[#allocation11] sm:$0xf]
        %v1146 = vld [vmem:[#allocation11 + $0x4] sm:$0xf]
        %v1147 = vld [vmem:[#allocation11 + $0x8] sm:$0xf]
        %v1148 = vld [vmem:[#allocation11 + $0xc] sm:$0xf]
        %1150 = vrot.lane.b32.xlu0 %v1017, 96
        %v1151 = vpop.permute.xlu0 %1150
        %1153 = vrot.lane.b32.xlu0 %v1018, 96
        %v1154 = vpop.permute.xlu0 %1153
        %v1156 = vsel %vm1024, %v1151, 0
        %v1159 = vsel %vm1024, %v1154, 0
        %1161 = vmatprep.subr.bf16.mxu0 0
        %1162 = vmatpush1.bf16.xpose.msra.mxu0 %v1159
        %1163 = vmatprep.subr.bf16.mxu0 0
        %1164 = vmatpush1.bf16.xpose.msra.mxu0 0
        %1165 = vmatprep.subr.bf16.mxu0 0
        %1166 = vmatpush1.bf16.xpose.msra.mxu0 0
        %1167 = vmatprep.subr.bf16.mxu0 0
        %1168 = vmatpush1.bf16.xpose.msra.mxu0 0
        %1169 = vmatprep.subr.bf16.mxu0 0
        %1170 = vmatpush1.bf16.xpose.msra.mxu0 0
        %1171 = vmatprep.subr.bf16.mxu0 0
        %1172 = vmatpush1.bf16.xpose.msra.mxu0 0
        %1173 = vmatprep.subr.bf16.mxu0 0
        %1174 = vmatpush1.bf16.xpose.msra.mxu0 0
        %1175 = vmatprep.subr.bf16.mxu0 0
        %1176 = vmatpush1.bf16.xpose.msra.mxu0 0
        %1177 = vmatprep.subr.bf16.mxu0 0
        %1178 = vmatpush1.bf16.xpose.msra.mxu0 0
        %1179 = vmatprep.subr.bf16.mxu0 0
        %1180 = vmatpush1.bf16.xpose.msra.mxu0 0
        %1181 = vmatprep.subr.bf16.mxu0 0
        %1182 = vmatpush1.bf16.xpose.msra.mxu0 0
        %1183 = vmatprep.subr.bf16.mxu0 0
        %1184 = vmatpush1.bf16.xpose.msra.mxu0 0
        %1185 = vmatprep.subr.bf16.mxu0 0
        %1186 = vmatpush1.bf16.xpose.msra.mxu0 0
        %1187 = vmatprep.subr.bf16.mxu0 0
        %1188 = vmatpush1.bf16.xpose.msra.mxu0 0
        %1189 = vmatprep.subr.bf16.mxu0 0
        %1190 = vmatpush1.bf16.xpose.msra.mxu0 0
        %1191 = vmatprep.subr.bf16.mxu0 0
        %1192 = vmatpush1.bf16.xpose.msra.mxu0 0
        %1193 = vmatprep.mubr.bf16.mxu0 0
        %1194 = vmatmul.mubr.bf16.gmra.mrb[0].mxu0 %v1156
        %v1195 = vpop.f32.mrb[0].mxu0
        %v1196 = vadd.f32 0.0, %v1195
        %v1197 = vpop.f32.mrb[0].mxu0
        %v1198 = vpop.f32.mrb[0].mxu0
        %v1199 = vpop.f32.mrb[0].mxu0
        %1200 = vdwg.mxu0
        %v1201 = vmul.f32 %v1196, 0.17677669
        %v1202 = vmul.f32 %v1201, %v1076
        %v1203 = vsub.f32 %v1202, %v1085
        %v1204 = vsel %vm1088, %v1203, -inf
        %1205 = vmax.xlane.f32.xlu0 %v1204
        %v1206 = vpop.xlane.xlu0 %1205
        %v1207 = vsub.f32 %v1203, %v1206
        %v1208 = vmul.f32 %v1207, 1.442695
        %v1209 = vpow.pop %v1208
        %v1210 = vsel %vm1088, %v1209, 0.0
        %1211 = vadd.xlane.f32.xlu0 %v1210
        %v1212 = vpop.xlane.xlu0 %1211
        %v1213 = vrcp.pop %v1212
        %v1214 = vmul.f32 %v1209, %v1213
        %v1215 = vpack.c.bf16 %v1214, %v1214
        %1217 = vrot.lane.b32.xlu0 %v1020, 96
        %v1218 = vpop.permute.xlu0 %1217
        %v1221 = vsel %vm1088, %v1215, 0
        %1223 = vmatprep.subr.bf16.mxu0 0
        %1224 = vmatpush1.bf16.msra.mxu0 %v1218
        %1225 = vmatprep.subr.bf16.mxu0 0
        %1226 = vmatpush1.bf16.msra.mxu0 0
        %1227 = vmatprep.subr.bf16.mxu0 0
        %1228 = vmatpush1.bf16.msra.mxu0 0
        %1229 = vmatprep.subr.bf16.mxu0 0
        %1230 = vmatpush1.bf16.msra.mxu0 0
        %1231 = vmatprep.subr.bf16.mxu0 0
        %1232 = vmatpush1.bf16.msra.mxu0 0
        %1233 = vmatprep.subr.bf16.mxu0 0
        %1234 = vmatpush1.bf16.msra.mxu0 0
        %1235 = vmatprep.subr.bf16.mxu0 0
        %1236 = vmatpush1.bf16.msra.mxu0 0
        %1237 = vmatprep.subr.bf16.mxu0 0
        %1238 = vmatpush1.bf16.msra.mxu0 0
        %1239 = vmatprep.subr.bf16.mxu0 0
        %1240 = vmatpush1.bf16.msra.mxu0 0
        %1241 = vmatprep.subr.bf16.mxu0 0
        %1242 = vmatpush1.bf16.msra.mxu0 0
        %1243 = vmatprep.subr.bf16.mxu0 0
        %1244 = vmatpush1.bf16.msra.mxu0 0
        %1245 = vmatprep.subr.bf16.mxu0 0
        %1246 = vmatpush1.bf16.msra.mxu0 0
        %1247 = vmatprep.subr.bf16.mxu0 0
        %1248 = vmatpush1.bf16.msra.mxu0 0
        %1249 = vmatprep.subr.bf16.mxu0 0
        %1250 = vmatpush1.bf16.msra.mxu0 0
        %1251 = vmatprep.subr.bf16.mxu0 0
        %1252 = vmatpush1.bf16.msra.mxu0 0
        %1253 = vmatprep.subr.bf16.mxu0 0
        %1254 = vmatpush1.bf16.msra.mxu0 0
        %1255 = vmatprep.mubr.bf16.mxu0 0
        %1256 = vmatmul.mubr.bf16.gmra.mrb[0].mxu0 %v1221
        %v1257 = vpop.f32.mrb[0].mxu0
        %v1258 = vadd.f32 0.0, %v1257
        %v1259 = vpop.f32.mrb[0].mxu0
        %v1260 = vpop.f32.mrb[0].mxu0
        %v1261 = vpop.f32.mrb[0].mxu0
        %1262 = vdwg.mxu0
        %v1263 = vpack.c.bf16 %v1258, %v1258
        %v1264 = vld [vmem:[#allocation11 + $0x10] sm:$0xf]
        %v1265 = vld [vmem:[#allocation11 + $0x14] sm:$0xf]
        %v1266 = vld [vmem:[#allocation11 + $0x18] sm:$0xf]
        %v1267 = vld [vmem:[#allocation11 + $0x1c] sm:$0xf]
        %v1272 = vunpack.c.l.b16 %v1264
        %v1273 = vunpack.c.l.b16 %v1265
        %v1274 = vunpack.c.l.b16 %v1266
        %v1275 = vunpack.c.l.b16 %v1267
        %v1276 = vpack.c.b16 %v1273, %v1272
        %v1277 = vpack.c.b16 %v1275, %v1274
        %v1281 = vsel %vm1024, %v1263, 0
        %1283 = vmatprep.subr.bf16.mxu0 0
        %1284 = vmatpush1.bf16.msra.mxu0 %v1276
        %1285 = vmatprep.subr.bf16.mxu0 0
        %1286 = vmatpush1.bf16.msra.mxu0 %v1277
        %1287 = vmatprep.subr.bf16.mxu0 0
        %1288 = vmatpush1.bf16.msra.mxu0 0
        %1289 = vmatprep.subr.bf16.mxu0 0
        %1290 = vmatpush1.bf16.msra.mxu0 0
        %1291 = vmatprep.subr.bf16.mxu0 0
        %1292 = vmatpush1.bf16.msra.mxu0 0
        %1293 = vmatprep.subr.bf16.mxu0 0
        %1294 = vmatpush1.bf16.msra.mxu0 0
        %1295 = vmatprep.subr.bf16.mxu0 0
        %1296 = vmatpush1.bf16.msra.mxu0 0
        %1297 = vmatprep.subr.bf16.mxu0 0
        %1298 = vmatpush1.bf16.msra.mxu0 0
        %1299 = vmatprep.subr.bf16.mxu0 0
        %1300 = vmatpush1.bf16.msra.mxu0 0
        %1301 = vmatprep.subr.bf16.mxu0 0
        %1302 = vmatpush1.bf16.msra.mxu0 0
        %1303 = vmatprep.subr.bf16.mxu0 0
        %1304 = vmatpush1.bf16.msra.mxu0 0
        %1305 = vmatprep.subr.bf16.mxu0 0
        %1306 = vmatpush1.bf16.msra.mxu0 0
        %1307 = vmatprep.subr.bf16.mxu0 0
        %1308 = vmatpush1.bf16.msra.mxu0 0
        %1309 = vmatprep.subr.bf16.mxu0 0
        %1310 = vmatpush1.bf16.msra.mxu0 0
        %1311 = vmatprep.subr.bf16.mxu0 0
        %1312 = vmatpush1.bf16.msra.mxu0 0
        %1313 = vmatprep.subr.bf16.mxu0 0
        %1314 = vmatpush1.bf16.msra.mxu0 0
        %1315 = vmatprep.mubr.bf16.mxu0 0
        %1316 = vmatmul.mubr.bf16.gmra.mrb[0].mxu0 %v1281
        %v1317 = vpop.f32.mrb[0].mxu0
        %v1318 = vadd.f32 0.0, %v1317
        %v1319 = vpop.f32.mrb[0].mxu0
        %v1320 = vpop.f32.mrb[0].mxu0
        %v1321 = vpop.f32.mrb[0].mxu0
        %1322 = vdwg.mxu0
        %v1327 = vunpack.c.l.b16 %v1145
        %v1328 = vunpack.c.l.b16 %v1146
        %v1329 = vunpack.c.l.b16 %v1147
        %v1330 = vunpack.c.l.b16 %v1148
        %v1331 = vpack.c.b16 %v1328, %v1327
        %v1332 = vpack.c.b16 %v1330, %v1329
        %v1336 = vsel %vm1024, %v1144, 0
        %1338 = vmatprep.subr.bf16.mxu0 0
        %1339 = vmatpush1.bf16.msra.mxu0 %v1331
        %1340 = vmatprep.subr.bf16.mxu0 0
        %1341 = vmatpush1.bf16.msra.mxu0 %v1332
        %1342 = vmatprep.subr.bf16.mxu0 0
        %1343 = vmatpush1.bf16.msra.mxu0 0
        %1344 = vmatprep.subr.bf16.mxu0 0
        %1345 = vmatpush1.bf16.msra.mxu0 0
        %1346 = vmatprep.subr.bf16.mxu0 0
        %1347 = vmatpush1.bf16.msra.mxu0 0
        %1348 = vmatprep.subr.bf16.mxu0 0
        %1349 = vmatpush1.bf16.msra.mxu0 0
        %1350 = vmatprep.subr.bf16.mxu0 0
        %1351 = vmatpush1.bf16.msra.mxu0 0
        %1352 = vmatprep.subr.bf16.mxu0 0
        %1353 = vmatpush1.bf16.msra.mxu0 0
        %1354 = vmatprep.subr.bf16.mxu0 0
        %1355 = vmatpush1.bf16.msra.mxu0 0
        %1356 = vmatprep.subr.bf16.mxu0 0
        %1357 = vmatpush1.bf16.msra.mxu0 0
        %1358 = vmatprep.subr.bf16.mxu0 0
        %1359 = vmatpush1.bf16.msra.mxu0 0
        %1360 = vmatprep.subr.bf16.mxu0 0
        %1361 = vmatpush1.bf16.msra.mxu0 0
        %1362 = vmatprep.subr.bf16.mxu0 0
        %1363 = vmatpush1.bf16.msra.mxu0 0
        %1364 = vmatprep.subr.bf16.mxu0 0
        %1365 = vmatpush1.bf16.msra.mxu0 0
        %1366 = vmatprep.subr.bf16.mxu0 0
        %1367 = vmatpush1.bf16.msra.mxu0 0
        %1368 = vmatprep.subr.bf16.mxu0 0
        %1369 = vmatpush1.bf16.msra.mxu0 0
        %1370 = vmatprep.mubr.bf16.mxu0 0
        %1371 = vmatmul.mubr.bf16.gmra.mrb[0].mxu0 %v1336
        %v1372 = vpop.f32.mrb[0].mxu0
        %v1373 = vadd.f32 %v1318, %v1372
        %v1374 = vpop.f32.mrb[0].mxu0
        %v1375 = vpop.f32.mrb[0].mxu0
        %v1376 = vpop.f32.mrb[0].mxu0
        %1377 = vdwg.mxu0
        %1378 = vrot.lane.b32.xlu0 %v1017, 64
        %v1379 = vpop.permute.xlu0 %1378
        %1380 = vrot.lane.b32.xlu0 %v1018, 64
        %v1381 = vpop.permute.xlu0 %1380
        %v1383 = vsel %vm1024, %v1379, 0
        %v1386 = vsel %vm1024, %v1381, 0
        %1388 = vmatprep.subr.bf16.mxu0 0
        %1389 = vmatpush1.bf16.xpose.msra.mxu0 %v1386
        %1390 = vmatprep.subr.bf16.mxu0 0
        %1391 = vmatpush1.bf16.xpose.msra.mxu0 0
        %1392 = vmatprep.subr.bf16.mxu0 0
        %1393 = vmatpush1.bf16.xpose.msra.mxu0 0
        %1394 = vmatprep.subr.bf16.mxu0 0
        %1395 = vmatpush1.bf16.xpose.msra.mxu0 0
        %1396 = vmatprep.subr.bf16.mxu0 0
        %1397 = vmatpush1.bf16.xpose.msra.mxu0 0
        %1398 = vmatprep.subr.bf16.mxu0 0
        %1399 = vmatpush1.bf16.xpose.msra.mxu0 0
        %1400 = vmatprep.subr.bf16.mxu0 0
        %1401 = vmatpush1.bf16.xpose.msra.mxu0 0
        %1402 = vmatprep.subr.bf16.mxu0 0
        %1403 = vmatpush1.bf16.xpose.msra.mxu0 0
        %1404 = vmatprep.subr.bf16.mxu0 0
        %1405 = vmatpush1.bf16.xpose.msra.mxu0 0
        %1406 = vmatprep.subr.bf16.mxu0 0
        %1407 = vmatpush1.bf16.xpose.msra.mxu0 0
        %1408 = vmatprep.subr.bf16.mxu0 0
        %1409 = vmatpush1.bf16.xpose.msra.mxu0 0
        %1410 = vmatprep.subr.bf16.mxu0 0
        %1411 = vmatpush1.bf16.xpose.msra.mxu0 0
        %1412 = vmatprep.subr.bf16.mxu0 0
        %1413 = vmatpush1.bf16.xpose.msra.mxu0 0
        %1414 = vmatprep.subr.bf16.mxu0 0
        %1415 = vmatpush1.bf16.xpose.msra.mxu0 0
        %1416 = vmatprep.subr.bf16.mxu0 0
        %1417 = vmatpush1.bf16.xpose.msra.mxu0 0
        %1418 = vmatprep.subr.bf16.mxu0 0
        %1419 = vmatpush1.bf16.xpose.msra.mxu0 0
        %1420 = vmatprep.mubr.bf16.mxu0 0
        %1421 = vmatmul.mubr.bf16.gmra.mrb[0].mxu0 %v1383
        %v1422 = vpop.f32.mrb[0].mxu0
        %v1423 = vadd.f32 0.0, %v1422
        %v1424 = vpop.f32.mrb[0].mxu0
        %v1425 = vpop.f32.mrb[0].mxu0
        %v1426 = vpop.f32.mrb[0].mxu0
        %1427 = vdwg.mxu0
        %v1428 = vmul.f32 %v1423, 0.17677669
        %v1429 = vmul.f32 %v1428, %v1076
        %v1430 = vsub.f32 %v1429, %v1085
        %v1431 = vsel %vm1088, %v1430, -inf
        %1432 = vmax.xlane.f32.xlu0 %v1431
        %v1433 = vpop.xlane.xlu0 %1432
        %v1434 = vsub.f32 %v1430, %v1433
        %v1435 = vmul.f32 %v1434, 1.442695
        %v1436 = vpow.pop %v1435
        %v1437 = vsel %vm1088, %v1436, 0.0
        %1438 = vadd.xlane.f32.xlu0 %v1437
        %v1439 = vpop.xlane.xlu0 %1438
        %v1440 = vrcp.pop %v1439
        %v1441 = vmul.f32 %v1436, %v1440
        %v1442 = vpack.c.bf16 %v1441, %v1441
        %1443 = vrot.lane.b32.xlu0 %v1020, 64
        %v1444 = vpop.permute.xlu0 %1443
        %v1447 = vsel %vm1088, %v1442, 0
        %1449 = vmatprep.subr.bf16.mxu0 0
        %1450 = vmatpush1.bf16.msra.mxu0 %v1444
        %1451 = vmatprep.subr.bf16.mxu0 0
        %1452 = vmatpush1.bf16.msra.mxu0 0
        %1453 = vmatprep.subr.bf16.mxu0 0
        %1454 = vmatpush1.bf16.msra.mxu0 0
        %1455 = vmatprep.subr.bf16.mxu0 0
        %1456 = vmatpush1.bf16.msra.mxu0 0
        %1457 = vmatprep.subr.bf16.mxu0 0
        %1458 = vmatpush1.bf16.msra.mxu0 0
        %1459 = vmatprep.subr.bf16.mxu0 0
        %1460 = vmatpush1.bf16.msra.mxu0 0
        %1461 = vmatprep.subr.bf16.mxu0 0
        %1462 = vmatpush1.bf16.msra.mxu0 0
        %1463 = vmatprep.subr.bf16.mxu0 0
        %1464 = vmatpush1.bf16.msra.mxu0 0
        %1465 = vmatprep.subr.bf16.mxu0 0
        %1466 = vmatpush1.bf16.msra.mxu0 0
        %1467 = vmatprep.subr.bf16.mxu0 0
        %1468 = vmatpush1.bf16.msra.mxu0 0
        %1469 = vmatprep.subr.bf16.mxu0 0
        %1470 = vmatpush1.bf16.msra.mxu0 0
        %1471 = vmatprep.subr.bf16.mxu0 0
        %1472 = vmatpush1.bf16.msra.mxu0 0
        %1473 = vmatprep.subr.bf16.mxu0 0
        %1474 = vmatpush1.bf16.msra.mxu0 0
        %1475 = vmatprep.subr.bf16.mxu0 0
        %1476 = vmatpush1.bf16.msra.mxu0 0
        %1477 = vmatprep.subr.bf16.mxu0 0
        %1478 = vmatpush1.bf16.msra.mxu0 0
        %1479 = vmatprep.subr.bf16.mxu0 0
        %1480 = vmatpush1.bf16.msra.mxu0 0
        %1481 = vmatprep.mubr.bf16.mxu0 0
        %1482 = vmatmul.mubr.bf16.gmra.mrb[0].mxu0 %v1447
        %v1483 = vpop.f32.mrb[0].mxu0
        %v1484 = vadd.f32 0.0, %v1483
        %v1485 = vpop.f32.mrb[0].mxu0
        %v1486 = vpop.f32.mrb[0].mxu0
        %v1487 = vpop.f32.mrb[0].mxu0
        %1488 = vdwg.mxu0
        %v1489 = vpack.c.bf16 %v1484, %v1484
        %v1490 = vld [vmem:[#allocation11 + $0x20] sm:$0xf]
        %v1491 = vld [vmem:[#allocation11 + $0x24] sm:$0xf]
        %v1492 = vld [vmem:[#allocation11 + $0x28] sm:$0xf]
        %v1493 = vld [vmem:[#allocation11 + $0x2c] sm:$0xf]
        %v1498 = vunpack.c.l.b16 %v1490
        %v1499 = vunpack.c.l.b16 %v1491
        %v1500 = vunpack.c.l.b16 %v1492
        %v1501 = vunpack.c.l.b16 %v1493
        %v1502 = vpack.c.b16 %v1499, %v1498
        %v1503 = vpack.c.b16 %v1501, %v1500
        %v1507 = vsel %vm1024, %v1489, 0
        %1509 = vmatprep.subr.bf16.mxu0 0
        %1510 = vmatpush1.bf16.msra.mxu0 %v1502
        %1511 = vmatprep.subr.bf16.mxu0 0
        %1512 = vmatpush1.bf16.msra.mxu0 %v1503
        %1513 = vmatprep.subr.bf16.mxu0 0
        %1514 = vmatpush1.bf16.msra.mxu0 0
        %1515 = vmatprep.subr.bf16.mxu0 0
        %1516 = vmatpush1.bf16.msra.mxu0 0
        %1517 = vmatprep.subr.bf16.mxu0 0
        %1518 = vmatpush1.bf16.msra.mxu0 0
        %1519 = vmatprep.subr.bf16.mxu0 0
        %1520 = vmatpush1.bf16.msra.mxu0 0
        %1521 = vmatprep.subr.bf16.mxu0 0
        %1522 = vmatpush1.bf16.msra.mxu0 0
        %1523 = vmatprep.subr.bf16.mxu0 0
        %1524 = vmatpush1.bf16.msra.mxu0 0
        %1525 = vmatprep.subr.bf16.mxu0 0
        %1526 = vmatpush1.bf16.msra.mxu0 0
        %1527 = vmatprep.subr.bf16.mxu0 0
        %1528 = vmatpush1.bf16.msra.mxu0 0
        %1529 = vmatprep.subr.bf16.mxu0 0
        %1530 = vmatpush1.bf16.msra.mxu0 0
        %1531 = vmatprep.subr.bf16.mxu0 0
        %1532 = vmatpush1.bf16.msra.mxu0 0
        %1533 = vmatprep.subr.bf16.mxu0 0
        %1534 = vmatpush1.bf16.msra.mxu0 0
        %1535 = vmatprep.subr.bf16.mxu0 0
        %1536 = vmatpush1.bf16.msra.mxu0 0
        %1537 = vmatprep.subr.bf16.mxu0 0
        %1538 = vmatpush1.bf16.msra.mxu0 0
        %1539 = vmatprep.subr.bf16.mxu0 0
        %1540 = vmatpush1.bf16.msra.mxu0 0
        %1541 = vmatprep.mubr.bf16.mxu0 0
        %1542 = vmatmul.mubr.bf16.gmra.mrb[0].mxu0 %v1507
        %v1543 = vpop.f32.mrb[0].mxu0
        %v1544 = vadd.f32 0.0, %v1543
        %v1545 = vpop.f32.mrb[0].mxu0
        %v1546 = vpop.f32.mrb[0].mxu0
        %v1547 = vpop.f32.mrb[0].mxu0
        %1548 = vdwg.mxu0
        %v1549 = vadd.f32 %v1373, %v1544
        %1550 = vrot.lane.b32.xlu0 %v1017, 32
        %v1551 = vpop.permute.xlu0 %1550
        %1552 = vrot.lane.b32.xlu0 %v1018, 32
        %v1553 = vpop.permute.xlu0 %1552
        %v1555 = vsel %vm1024, %v1551, 0
        %v1558 = vsel %vm1024, %v1553, 0
        %1560 = vmatprep.subr.bf16.mxu0 0
        %1561 = vmatpush1.bf16.xpose.msra.mxu0 %v1558
        %1562 = vmatprep.subr.bf16.mxu0 0
        %1563 = vmatpush1.bf16.xpose.msra.mxu0 0
        %1564 = vmatprep.subr.bf16.mxu0 0
        %1565 = vmatpush1.bf16.xpose.msra.mxu0 0
        %1566 = vmatprep.subr.bf16.mxu0 0
        %1567 = vmatpush1.bf16.xpose.msra.mxu0 0
        %1568 = vmatprep.subr.bf16.mxu0 0
        %1569 = vmatpush1.bf16.xpose.msra.mxu0 0
        %1570 = vmatprep.subr.bf16.mxu0 0
        %1571 = vmatpush1.bf16.xpose.msra.mxu0 0
        %1572 = vmatprep.subr.bf16.mxu0 0
        %1573 = vmatpush1.bf16.xpose.msra.mxu0 0
        %1574 = vmatprep.subr.bf16.mxu0 0
        %1575 = vmatpush1.bf16.xpose.msra.mxu0 0
        %1576 = vmatprep.subr.bf16.mxu0 0
        %1577 = vmatpush1.bf16.xpose.msra.mxu0 0
        %1578 = vmatprep.subr.bf16.mxu0 0
        %1579 = vmatpush1.bf16.xpose.msra.mxu0 0
        %1580 = vmatprep.subr.bf16.mxu0 0
        %1581 = vmatpush1.bf16.xpose.msra.mxu0 0
        %1582 = vmatprep.subr.bf16.mxu0 0
        %1583 = vmatpush1.bf16.xpose.msra.mxu0 0
        %1584 = vmatprep.subr.bf16.mxu0 0
        %1585 = vmatpush1.bf16.xpose.msra.mxu0 0
        %1586 = vmatprep.subr.bf16.mxu0 0
        %1587 = vmatpush1.bf16.xpose.msra.mxu0 0
        %1588 = vmatprep.subr.bf16.mxu0 0
        %1589 = vmatpush1.bf16.xpose.msra.mxu0 0
        %1590 = vmatprep.subr.bf16.mxu0 0
        %1591 = vmatpush1.bf16.xpose.msra.mxu0 0
        %1592 = vmatprep.mubr.bf16.mxu0 0
        %1593 = vmatmul.mubr.bf16.gmra.mrb[0].mxu0 %v1555
        %v1594 = vpop.f32.mrb[0].mxu0
        %v1595 = vadd.f32 0.0, %v1594
        %v1596 = vpop.f32.mrb[0].mxu0
        %v1597 = vpop.f32.mrb[0].mxu0
        %v1598 = vpop.f32.mrb[0].mxu0
        %1599 = vdwg.mxu0
        %v1600 = vmul.f32 %v1595, 0.17677669
        %v1601 = vmul.f32 %v1600, %v1076
        %v1602 = vsub.f32 %v1601, %v1085
        %v1603 = vsel %vm1088, %v1602, -inf
        %1604 = vmax.xlane.f32.xlu0 %v1603
        %v1605 = vpop.xlane.xlu0 %1604
        %v1606 = vsub.f32 %v1602, %v1605
        %v1607 = vmul.f32 %v1606, 1.442695
        %v1608 = vpow.pop %v1607
        %v1609 = vsel %vm1088, %v1608, 0.0
        %1610 = vadd.xlane.f32.xlu0 %v1609
        %v1611 = vpop.xlane.xlu0 %1610
        %v1612 = vrcp.pop %v1611
        %v1613 = vmul.f32 %v1608, %v1612
        %v1614 = vpack.c.bf16 %v1613, %v1613
        %1615 = vrot.lane.b32.xlu0 %v1020, 32
        %v1616 = vpop.permute.xlu0 %1615
        %v1619 = vsel %vm1088, %v1614, 0
        %1621 = vmatprep.subr.bf16.mxu0 0
        %1622 = vmatpush1.bf16.msra.mxu0 %v1616
        %1623 = vmatprep.subr.bf16.mxu0 0
        %1624 = vmatpush1.bf16.msra.mxu0 0
        %1625 = vmatprep.subr.bf16.mxu0 0
        %1626 = vmatpush1.bf16.msra.mxu0 0
        %1627 = vmatprep.subr.bf16.mxu0 0
        %1628 = vmatpush1.bf16.msra.mxu0 0
        %1629 = vmatprep.subr.bf16.mxu0 0
        %1630 = vmatpush1.bf16.msra.mxu0 0
        %1631 = vmatprep.subr.bf16.mxu0 0
        %1632 = vmatpush1.bf16.msra.mxu0 0
        %1633 = vmatprep.subr.bf16.mxu0 0
        %1634 = vmatpush1.bf16.msra.mxu0 0
        %1635 = vmatprep.subr.bf16.mxu0 0
        %1636 = vmatpush1.bf16.msra.mxu0 0
        %1637 = vmatprep.subr.bf16.mxu0 0
        %1638 = vmatpush1.bf16.msra.mxu0 0
        %1639 = vmatprep.subr.bf16.mxu0 0
        %1640 = vmatpush1.bf16.msra.mxu0 0
        %1641 = vmatprep.subr.bf16.mxu0 0
        %1642 = vmatpush1.bf16.msra.mxu0 0
        %1643 = vmatprep.subr.bf16.mxu0 0
        %1644 = vmatpush1.bf16.msra.mxu0 0
        %1645 = vmatprep.subr.bf16.mxu0 0
        %1646 = vmatpush1.bf16.msra.mxu0 0
        %1647 = vmatprep.subr.bf16.mxu0 0
        %1648 = vmatpush1.bf16.msra.mxu0 0
        %1649 = vmatprep.subr.bf16.mxu0 0
        %1650 = vmatpush1.bf16.msra.mxu0 0
        %1651 = vmatprep.subr.bf16.mxu0 0
        %1652 = vmatpush1.bf16.msra.mxu0 0
        %1653 = vmatprep.mubr.bf16.mxu0 0
        %1654 = vmatmul.mubr.bf16.gmra.mrb[0].mxu0 %v1619
        %v1655 = vpop.f32.mrb[0].mxu0
        %v1656 = vadd.f32 0.0, %v1655
        %v1657 = vpop.f32.mrb[0].mxu0
        %v1658 = vpop.f32.mrb[0].mxu0
        %v1659 = vpop.f32.mrb[0].mxu0
        %1660 = vdwg.mxu0
        %v1661 = vpack.c.bf16 %v1656, %v1656
        %v1662 = vld [vmem:[#allocation11 + $0x30] sm:$0xf]
        %v1663 = vld [vmem:[#allocation11 + $0x34] sm:$0xf]
        %v1664 = vld [vmem:[#allocation11 + $0x38] sm:$0xf]
        %v1665 = vld [vmem:[#allocation11 + $0x3c] sm:$0xf]
        %v1670 = vunpack.c.l.b16 %v1662
        %v1671 = vunpack.c.l.b16 %v1663
        %v1672 = vunpack.c.l.b16 %v1664
        %v1673 = vunpack.c.l.b16 %v1665
        %v1674 = vpack.c.b16 %v1671, %v1670
        %v1675 = vpack.c.b16 %v1673, %v1672
        %v1679 = vsel %vm1024, %v1661, 0
        %1681 = vmatprep.subr.bf16.mxu0 0
        %1682 = vmatpush1.bf16.msra.mxu0 %v1674
        %1683 = vmatprep.subr.bf16.mxu0 0
        %1684 = vmatpush1.bf16.msra.mxu0 %v1675
        %1685 = vmatprep.subr.bf16.mxu0 0
        %1686 = vmatpush1.bf16.msra.mxu0 0
        %1687 = vmatprep.subr.bf16.mxu0 0
        %1688 = vmatpush1.bf16.msra.mxu0 0
        %1689 = vmatprep.subr.bf16.mxu0 0
        %1690 = vmatpush1.bf16.msra.mxu0 0
        %1691 = vmatprep.subr.bf16.mxu0 0
        %1692 = vmatpush1.bf16.msra.mxu0 0
        %1693 = vmatprep.subr.bf16.mxu0 0
        %1694 = vmatpush1.bf16.msra.mxu0 0
        %1695 = vmatprep.subr.bf16.mxu0 0
        %1696 = vmatpush1.bf16.msra.mxu0 0
        %1697 = vmatprep.subr.bf16.mxu0 0
        %1698 = vmatpush1.bf16.msra.mxu0 0
        %1699 = vmatprep.subr.bf16.mxu0 0
        %1700 = vmatpush1.bf16.msra.mxu0 0
        %1701 = vmatprep.subr.bf16.mxu0 0
        %1702 = vmatpush1.bf16.msra.mxu0 0
        %1703 = vmatprep.subr.bf16.mxu0 0
        %1704 = vmatpush1.bf16.msra.mxu0 0
        %1705 = vmatprep.subr.bf16.mxu0 0
        %1706 = vmatpush1.bf16.msra.mxu0 0
        %1707 = vmatprep.subr.bf16.mxu0 0
        %1708 = vmatpush1.bf16.msra.mxu0 0
        %1709 = vmatprep.subr.bf16.mxu0 0
        %1710 = vmatpush1.bf16.msra.mxu0 0
        %1711 = vmatprep.subr.bf16.mxu0 0
        %1712 = vmatpush1.bf16.msra.mxu0 0
        %1713 = vmatprep.mubr.bf16.mxu0 0
        %1714 = vmatmul.mubr.bf16.gmra.mrb[0].mxu0 %v1679
        %v1715 = vpop.f32.mrb[0].mxu0
        %v1716 = vadd.f32 0.0, %v1715
        %v1717 = vpop.f32.mrb[0].mxu0
        %v1718 = vpop.f32.mrb[0].mxu0
        %v1719 = vpop.f32.mrb[0].mxu0
        %1720 = vdwg.mxu0
        %v1721 = vadd.f32 %v1549, %v1716
        %v1722 = vld [vmem:[%s12] sm:$0x1]
        %v1724 = vlaneseq
        %v1725 = vshrl.u32 %v1724, 7
        %v1726 = vsub.s32 0, %v1725
        %v1727 = vrot.slane %v1722, %v1726
        %v1729 = vadd.f32 %v1721, %v1727
        %1730 = vst [vmem:[%s571] sm:$0xff] %v1729
        %v1731 = vrot.slane %v1017, 4
        %v1733 = vsel %vm1024, %v1731, 0
        %v1736 = vsel %vm1024, %v1019, 0
        %1738 = vmatprep.subr.bf16.mxu0 0
        %1739 = vmatpush1.bf16.xpose.msra.mxu0 %v1736
        %1740 = vmatprep.subr.bf16.mxu0 0
        %1741 = vmatpush1.bf16.xpose.msra.mxu0 0
        %1742 = vmatprep.subr.bf16.mxu0 0
        %1743 = vmatpush1.bf16.xpose.msra.mxu0 0
        %1744 = vmatprep.subr.bf16.mxu0 0
        %1745 = vmatpush1.bf16.xpose.msra.mxu0 0
        %1746 = vmatprep.subr.bf16.mxu0 0
        %1747 = vmatpush1.bf16.xpose.msra.mxu0 0
        %1748 = vmatprep.subr.bf16.mxu0 0
        %1749 = vmatpush1.bf16.xpose.msra.mxu0 0
        %1750 = vmatprep.subr.bf16.mxu0 0
        %1751 = vmatpush1.bf16.xpose.msra.mxu0 0
        %1752 = vmatprep.subr.bf16.mxu0 0
        %1753 = vmatpush1.bf16.xpose.msra.mxu0 0
        %1754 = vmatprep.subr.bf16.mxu0 0
        %1755 = vmatpush1.bf16.xpose.msra.mxu0 0
        %1756 = vmatprep.subr.bf16.mxu0 0
        %1757 = vmatpush1.bf16.xpose.msra.mxu0 0
        %1758 = vmatprep.subr.bf16.mxu0 0
        %1759 = vmatpush1.bf16.xpose.msra.mxu0 0
        %1760 = vmatprep.subr.bf16.mxu0 0
        %1761 = vmatpush1.bf16.xpose.msra.mxu0 0
        %1762 = vmatprep.subr.bf16.mxu0 0
        %1763 = vmatpush1.bf16.xpose.msra.mxu0 0
        %1764 = vmatprep.subr.bf16.mxu0 0
        %1765 = vmatpush1.bf16.xpose.msra.mxu0 0
        %1766 = vmatprep.subr.bf16.mxu0 0
        %1767 = vmatpush1.bf16.xpose.msra.mxu0 0
        %1768 = vmatprep.subr.bf16.mxu0 0
        %1769 = vmatpush1.bf16.xpose.msra.mxu0 0
        %1770 = vmatprep.mubr.bf16.mxu0 0
        %1771 = vmatmul.mubr.bf16.gmra.mrb[0].mxu0 %v1733
        %v1772 = vpop.f32.mrb[0].mxu0
        %v1773 = vadd.f32 0.0, %v1772
        %v1774 = vpop.f32.mrb[0].mxu0
        %v1775 = vpop.f32.mrb[0].mxu0
        %v1776 = vpop.f32.mrb[0].mxu0
        %1777 = vdwg.mxu0
        %v1778 = vmul.f32 %v1773, 0.17677669
        %v1780 = vlaneseq
        %v1781 = vshrl.u32 %v1780, 7
        %v1782 = vsub.s32 0, %v1781
        %v1783 = vrot.slane %v1023, %v1782
        %v1785 = vmul.f32 %v1778, %v1783
        %v1786 = vsub.f32 1.0, %v1023
        %v1787 = vmul.f32 %v1786, 100000.0
        %v1789 = vlaneseq
        %v1790 = vshrl.u32 %v1789, 7
        %v1791 = vsub.s32 0, %v1790
        %v1792 = vrot.slane %v1787, %v1791
        %v1794 = vsub.f32 %v1785, %v1792
        %v1795 = vsel %vm1088, %v1794, -inf
        %1796 = vmax.xlane.f32.xlu0 %v1795
        %v1797 = vpop.xlane.xlu0 %1796
        %v1798 = vsub.f32 %v1794, %v1797
        %v1799 = vmul.f32 %v1798, 1.442695
        %v1800 = vpow.pop %v1799
        %v1801 = vsel %vm1088, %v1800, 0.0
        %1802 = vadd.xlane.f32.xlu0 %v1801
        %v1803 = vpop.xlane.xlu0 %1802
        %v1804 = vrcp.pop %v1803
        %v1805 = vmul.f32 %v1800, %v1804
        %v1806 = vpack.c.bf16 %v1805, %v1805
        %v1808 = vsel %vm1088, %v1806, 0
        %1810 = vmatprep.subr.bf16.mxu0 0
        %1811 = vmatpush1.bf16.msra.mxu0 %v1021
        %1812 = vmatprep.subr.bf16.mxu0 0
        %1813 = vmatpush1.bf16.msra.mxu0 0
        %1814 = vmatprep.subr.bf16.mxu0 0
        %1815 = vmatpush1.bf16.msra.mxu0 0
        %1816 = vmatprep.subr.bf16.mxu0 0
        %1817 = vmatpush1.bf16.msra.mxu0 0
        %1818 = vmatprep.subr.bf16.mxu0 0
        %1819 = vmatpush1.bf16.msra.mxu0 0
        %1820 = vmatprep.subr.bf16.mxu0 0
        %1821 = vmatpush1.bf16.msra.mxu0 0
        %1822 = vmatprep.subr.bf16.mxu0 0
        %1823 = vmatpush1.bf16.msra.mxu0 0
        %1824 = vmatprep.subr.bf16.mxu0 0
        %1825 = vmatpush1.bf16.msra.mxu0 0
        %1826 = vmatprep.subr.bf16.mxu0 0
        %1827 = vmatpush1.bf16.msra.mxu0 0
        %1828 = vmatprep.subr.bf16.mxu0 0
        %1829 = vmatpush1.bf16.msra.mxu0 0
        %1830 = vmatprep.subr.bf16.mxu0 0
        %1831 = vmatpush1.bf16.msra.mxu0 0
        %1832 = vmatprep.subr.bf16.mxu0 0
        %1833 = vmatpush1.bf16.msra.mxu0 0
        %1834 = vmatprep.subr.bf16.mxu0 0
        %1835 = vmatpush1.bf16.msra.mxu0 0
        %1836 = vmatprep.subr.bf16.mxu0 0
        %1837 = vmatpush1.bf16.msra.mxu0 0
        %1838 = vmatprep.subr.bf16.mxu0 0
        %1839 = vmatpush1.bf16.msra.mxu0 0
        %1840 = vmatprep.subr.bf16.mxu0 0
        %1841 = vmatpush1.bf16.msra.mxu0 0
        %1842 = vmatprep.mubr.bf16.mxu0 0
        %1843 = vmatmul.mubr.bf16.gmra.mrb[0].mxu0 %v1808
        %v1844 = vpop.f32.mrb[0].mxu0
        %v1845 = vadd.f32 0.0, %v1844
        %v1846 = vpop.f32.mrb[0].mxu0
        %v1847 = vpop.f32.mrb[0].mxu0
        %v1848 = vpop.f32.mrb[0].mxu0
        %1849 = vdwg.mxu0
        %v1850 = vpack.c.bf16 %v1845, %v1845
        %v1851 = vld [vmem:[#allocation11] sm:$0xf]
        %v1852 = vld [vmem:[#allocation11 + $0x4] sm:$0xf]
        %v1853 = vld [vmem:[#allocation11 + $0x8] sm:$0xf]
        %v1854 = vld [vmem:[#allocation11 + $0xc] sm:$0xf]
        %1855 = vrot.lane.b32.xlu0 %v1731, 96
        %v1856 = vpop.permute.xlu0 %1855
        %1858 = vrot.lane.b32.xlu0 %v1019, 96
        %v1859 = vpop.permute.xlu0 %1858
        %v1861 = vsel %vm1024, %v1856, 0
        %v1864 = vsel %vm1024, %v1859, 0
        %1866 = vmatprep.subr.bf16.mxu0 0
        %1867 = vmatpush1.bf16.xpose.msra.mxu0 %v1864
        %1868 = vmatprep.subr.bf16.mxu0 0
        %1869 = vmatpush1.bf16.xpose.msra.mxu0 0
        %1870 = vmatprep.subr.bf16.mxu0 0
        %1871 = vmatpush1.bf16.xpose.msra.mxu0 0
        %1872 = vmatprep.subr.bf16.mxu0 0
        %1873 = vmatpush1.bf16.xpose.msra.mxu0 0
        %1874 = vmatprep.subr.bf16.mxu0 0
        %1875 = vmatpush1.bf16.xpose.msra.mxu0 0
        %1876 = vmatprep.subr.bf16.mxu0 0
        %1877 = vmatpush1.bf16.xpose.msra.mxu0 0
        %1878 = vmatprep.subr.bf16.mxu0 0
        %1879 = vmatpush1.bf16.xpose.msra.mxu0 0
        %1880 = vmatprep.subr.bf16.mxu0 0
        %1881 = vmatpush1.bf16.xpose.msra.mxu0 0
        %1882 = vmatprep.subr.bf16.mxu0 0
        %1883 = vmatpush1.bf16.xpose.msra.mxu0 0
        %1884 = vmatprep.subr.bf16.mxu0 0
        %1885 = vmatpush1.bf16.xpose.msra.mxu0 0
        %1886 = vmatprep.subr.bf16.mxu0 0
        %1887 = vmatpush1.bf16.xpose.msra.mxu0 0
        %1888 = vmatprep.subr.bf16.mxu0 0
        %1889 = vmatpush1.bf16.xpose.msra.mxu0 0
        %1890 = vmatprep.subr.bf16.mxu0 0
        %1891 = vmatpush1.bf16.xpose.msra.mxu0 0
        %1892 = vmatprep.subr.bf16.mxu0 0
        %1893 = vmatpush1.bf16.xpose.msra.mxu0 0
        %1894 = vmatprep.subr.bf16.mxu0 0
        %1895 = vmatpush1.bf16.xpose.msra.mxu0 0
        %1896 = vmatprep.subr.bf16.mxu0 0
        %1897 = vmatpush1.bf16.xpose.msra.mxu0 0
        %1898 = vmatprep.mubr.bf16.mxu0 0
        %1899 = vmatmul.mubr.bf16.gmra.mrb[0].mxu0 %v1861
        %v1900 = vpop.f32.mrb[0].mxu0
        %v1901 = vadd.f32 0.0, %v1900
        %v1902 = vpop.f32.mrb[0].mxu0
        %v1903 = vpop.f32.mrb[0].mxu0
        %v1904 = vpop.f32.mrb[0].mxu0
        %1905 = vdwg.mxu0
        %v1906 = vmul.f32 %v1901, 0.17677669
        %v1907 = vmul.f32 %v1906, %v1783
        %v1908 = vsub.f32 %v1907, %v1792
        %v1909 = vsel %vm1088, %v1908, -inf
        %1910 = vmax.xlane.f32.xlu0 %v1909
        %v1911 = vpop.xlane.xlu0 %1910
        %v1912 = vsub.f32 %v1908, %v1911
        %v1913 = vmul.f32 %v1912, 1.442695
        %v1914 = vpow.pop %v1913
        %v1915 = vsel %vm1088, %v1914, 0.0
        %1916 = vadd.xlane.f32.xlu0 %v1915
        %v1917 = vpop.xlane.xlu0 %1916
        %v1918 = vrcp.pop %v1917
        %v1919 = vmul.f32 %v1914, %v1918
        %v1920 = vpack.c.bf16 %v1919, %v1919
        %1922 = vrot.lane.b32.xlu0 %v1021, 96
        %v1923 = vpop.permute.xlu0 %1922
        %v1926 = vsel %vm1088, %v1920, 0
        %1928 = vmatprep.subr.bf16.mxu0 0
        %1929 = vmatpush1.bf16.msra.mxu0 %v1923
        %1930 = vmatprep.subr.bf16.mxu0 0
        %1931 = vmatpush1.bf16.msra.mxu0 0
        %1932 = vmatprep.subr.bf16.mxu0 0
        %1933 = vmatpush1.bf16.msra.mxu0 0
        %1934 = vmatprep.subr.bf16.mxu0 0
        %1935 = vmatpush1.bf16.msra.mxu0 0
        %1936 = vmatprep.subr.bf16.mxu0 0
        %1937 = vmatpush1.bf16.msra.mxu0 0
        %1938 = vmatprep.subr.bf16.mxu0 0
        %1939 = vmatpush1.bf16.msra.mxu0 0
        %1940 = vmatprep.subr.bf16.mxu0 0
        %1941 = vmatpush1.bf16.msra.mxu0 0
        %1942 = vmatprep.subr.bf16.mxu0 0
        %1943 = vmatpush1.bf16.msra.mxu0 0
        %1944 = vmatprep.subr.bf16.mxu0 0
        %1945 = vmatpush1.bf16.msra.mxu0 0
        %1946 = vmatprep.subr.bf16.mxu0 0
        %1947 = vmatpush1.bf16.msra.mxu0 0
        %1948 = vmatprep.subr.bf16.mxu0 0
        %1949 = vmatpush1.bf16.msra.mxu0 0
        %1950 = vmatprep.subr.bf16.mxu0 0
        %1951 = vmatpush1.bf16.msra.mxu0 0
        %1952 = vmatprep.subr.bf16.mxu0 0
        %1953 = vmatpush1.bf16.msra.mxu0 0
        %1954 = vmatprep.subr.bf16.mxu0 0
        %1955 = vmatpush1.bf16.msra.mxu0 0
        %1956 = vmatprep.subr.bf16.mxu0 0
        %1957 = vmatpush1.bf16.msra.mxu0 0
        %1958 = vmatprep.subr.bf16.mxu0 0
        %1959 = vmatpush1.bf16.msra.mxu0 0
        %1960 = vmatprep.mubr.bf16.mxu0 0
        %1961 = vmatmul.mubr.bf16.gmra.mrb[0].mxu0 %v1926
        %v1962 = vpop.f32.mrb[0].mxu0
        %v1963 = vadd.f32 0.0, %v1962
        %v1964 = vpop.f32.mrb[0].mxu0
        %v1965 = vpop.f32.mrb[0].mxu0
        %v1966 = vpop.f32.mrb[0].mxu0
        %1967 = vdwg.mxu0
        %v1968 = vpack.c.bf16 %v1963, %v1963
        %v1969 = vld [vmem:[#allocation11 + $0x10] sm:$0xf]
        %v1970 = vld [vmem:[#allocation11 + $0x14] sm:$0xf]
        %v1971 = vld [vmem:[#allocation11 + $0x18] sm:$0xf]
        %v1972 = vld [vmem:[#allocation11 + $0x1c] sm:$0xf]
        %v1977 = vunpack.c.l.b16 %v1969
        %v1978 = vunpack.c.l.b16 %v1970
        %v1979 = vunpack.c.l.b16 %v1971
        %v1980 = vunpack.c.l.b16 %v1972
        %v1981 = vpack.c.b16 %v1978, %v1977
        %v1982 = vpack.c.b16 %v1980, %v1979
        %v1986 = vsel %vm1024, %v1968, 0
        %1988 = vmatprep.subr.bf16.mxu0 0
        %1989 = vmatpush1.bf16.msra.mxu0 %v1981
        %1990 = vmatprep.subr.bf16.mxu0 0
        %1991 = vmatpush1.bf16.msra.mxu0 %v1982
        %1992 = vmatprep.subr.bf16.mxu0 0
        %1993 = vmatpush1.bf16.msra.mxu0 0
        %1994 = vmatprep.subr.bf16.mxu0 0
        %1995 = vmatpush1.bf16.msra.mxu0 0
        %1996 = vmatprep.subr.bf16.mxu0 0
        %1997 = vmatpush1.bf16.msra.mxu0 0
        %1998 = vmatprep.subr.bf16.mxu0 0
        %1999 = vmatpush1.bf16.msra.mxu0 0
        %2000 = vmatprep.subr.bf16.mxu0 0
        %2001 = vmatpush1.bf16.msra.mxu0 0
        %2002 = vmatprep.subr.bf16.mxu0 0
        %2003 = vmatpush1.bf16.msra.mxu0 0
        %2004 = vmatprep.subr.bf16.mxu0 0
        %2005 = vmatpush1.bf16.msra.mxu0 0
        %2006 = vmatprep.subr.bf16.mxu0 0
        %2007 = vmatpush1.bf16.msra.mxu0 0
        %2008 = vmatprep.subr.bf16.mxu0 0
        %2009 = vmatpush1.bf16.msra.mxu0 0
        %2010 = vmatprep.subr.bf16.mxu0 0
        %2011 = vmatpush1.bf16.msra.mxu0 0
        %2012 = vmatprep.subr.bf16.mxu0 0
        %2013 = vmatpush1.bf16.msra.mxu0 0
        %2014 = vmatprep.subr.bf16.mxu0 0
        %2015 = vmatpush1.bf16.msra.mxu0 0
        %2016 = vmatprep.subr.bf16.mxu0 0
        %2017 = vmatpush1.bf16.msra.mxu0 0
        %2018 = vmatprep.subr.bf16.mxu0 0
        %2019 = vmatpush1.bf16.msra.mxu0 0
        %2020 = vmatprep.mubr.bf16.mxu0 0
        %2021 = vmatmul.mubr.bf16.gmra.mrb[0].mxu0 %v1986
        %v2022 = vpop.f32.mrb[0].mxu0
        %v2023 = vadd.f32 0.0, %v2022
        %v2024 = vpop.f32.mrb[0].mxu0
        %v2025 = vpop.f32.mrb[0].mxu0
        %v2026 = vpop.f32.mrb[0].mxu0
        %2027 = vdwg.mxu0
        %v2032 = vunpack.c.l.b16 %v1851
        %v2033 = vunpack.c.l.b16 %v1852
        %v2034 = vunpack.c.l.b16 %v1853
        %v2035 = vunpack.c.l.b16 %v1854
        %v2036 = vpack.c.b16 %v2033, %v2032
        %v2037 = vpack.c.b16 %v2035, %v2034
        %v2041 = vsel %vm1024, %v1850, 0
        %2043 = vmatprep.subr.bf16.mxu0 0
        %2044 = vmatpush1.bf16.msra.mxu0 %v2036
        %2045 = vmatprep.subr.bf16.mxu0 0
        %2046 = vmatpush1.bf16.msra.mxu0 %v2037
        %2047 = vmatprep.subr.bf16.mxu0 0
        %2048 = vmatpush1.bf16.msra.mxu0 0
        %2049 = vmatprep.subr.bf16.mxu0 0
        %2050 = vmatpush1.bf16.msra.mxu0 0
        %2051 = vmatprep.subr.bf16.mxu0 0
        %2052 = vmatpush1.bf16.msra.mxu0 0
        %2053 = vmatprep.subr.bf16.mxu0 0
        %2054 = vmatpush1.bf16.msra.mxu0 0
        %2055 = vmatprep.subr.bf16.mxu0 0
        %2056 = vmatpush1.bf16.msra.mxu0 0
        %2057 = vmatprep.subr.bf16.mxu0 0
        %2058 = vmatpush1.bf16.msra.mxu0 0
        %2059 = vmatprep.subr.bf16.mxu0 0
        %2060 = vmatpush1.bf16.msra.mxu0 0
        %2061 = vmatprep.subr.bf16.mxu0 0
        %2062 = vmatpush1.bf16.msra.mxu0 0
        %2063 = vmatprep.subr.bf16.mxu0 0
        %2064 = vmatpush1.bf16.msra.mxu0 0
        %2065 = vmatprep.subr.bf16.mxu0 0
        %2066 = vmatpush1.bf16.msra.mxu0 0
        %2067 = vmatprep.subr.bf16.mxu0 0
        %2068 = vmatpush1.bf16.msra.mxu0 0
        %2069 = vmatprep.subr.bf16.mxu0 0
        %2070 = vmatpush1.bf16.msra.mxu0 0
        %2071 = vmatprep.subr.bf16.mxu0 0
        %2072 = vmatpush1.bf16.msra.mxu0 0
        %2073 = vmatprep.subr.bf16.mxu0 0
        %2074 = vmatpush1.bf16.msra.mxu0 0
        %2075 = vmatprep.mubr.bf16.mxu0 0
        %2076 = vmatmul.mubr.bf16.gmra.mrb[0].mxu0 %v2041
        %v2077 = vpop.f32.mrb[0].mxu0
        %v2078 = vadd.f32 %v2023, %v2077
        %v2079 = vpop.f32.mrb[0].mxu0
        %v2080 = vpop.f32.mrb[0].mxu0
        %v2081 = vpop.f32.mrb[0].mxu0
        %2082 = vdwg.mxu0
        %2083 = vrot.lane.b32.xlu0 %v1731, 64
        %v2084 = vpop.permute.xlu0 %2083
        %2085 = vrot.lane.b32.xlu0 %v1019, 64
        %v2086 = vpop.permute.xlu0 %2085
        %v2088 = vsel %vm1024, %v2084, 0
        %v2091 = vsel %vm1024, %v2086, 0
        %2093 = vmatprep.subr.bf16.mxu0 0
        %2094 = vmatpush1.bf16.xpose.msra.mxu0 %v2091
        %2095 = vmatprep.subr.bf16.mxu0 0
        %2096 = vmatpush1.bf16.xpose.msra.mxu0 0
        %2097 = vmatprep.subr.bf16.mxu0 0
        %2098 = vmatpush1.bf16.xpose.msra.mxu0 0
        %2099 = vmatprep.subr.bf16.mxu0 0
        %2100 = vmatpush1.bf16.xpose.msra.mxu0 0
        %2101 = vmatprep.subr.bf16.mxu0 0
        %2102 = vmatpush1.bf16.xpose.msra.mxu0 0
        %2103 = vmatprep.subr.bf16.mxu0 0
        %2104 = vmatpush1.bf16.xpose.msra.mxu0 0
        %2105 = vmatprep.subr.bf16.mxu0 0
        %2106 = vmatpush1.bf16.xpose.msra.mxu0 0
        %2107 = vmatprep.subr.bf16.mxu0 0
        %2108 = vmatpush1.bf16.xpose.msra.mxu0 0
        %2109 = vmatprep.subr.bf16.mxu0 0
        %2110 = vmatpush1.bf16.xpose.msra.mxu0 0
        %2111 = vmatprep.subr.bf16.mxu0 0
        %2112 = vmatpush1.bf16.xpose.msra.mxu0 0
        %2113 = vmatprep.subr.bf16.mxu0 0
        %2114 = vmatpush1.bf16.xpose.msra.mxu0 0
        %2115 = vmatprep.subr.bf16.mxu0 0
        %2116 = vmatpush1.bf16.xpose.msra.mxu0 0
        %2117 = vmatprep.subr.bf16.mxu0 0
        %2118 = vmatpush1.bf16.xpose.msra.mxu0 0
        %2119 = vmatprep.subr.bf16.mxu0 0
        %2120 = vmatpush1.bf16.xpose.msra.mxu0 0
        %2121 = vmatprep.subr.bf16.mxu0 0
        %2122 = vmatpush1.bf16.xpose.msra.mxu0 0
        %2123 = vmatprep.subr.bf16.mxu0 0
        %2124 = vmatpush1.bf16.xpose.msra.mxu0 0
        %2125 = vmatprep.mubr.bf16.mxu0 0
        %2126 = vmatmul.mubr.bf16.gmra.mrb[0].mxu0 %v2088
        %v2127 = vpop.f32.mrb[0].mxu0
        %v2128 = vadd.f32 0.0, %v2127
        %v2129 = vpop.f32.mrb[0].mxu0
        %v2130 = vpop.f32.mrb[0].mxu0
        %v2131 = vpop.f32.mrb[0].mxu0
        %2132 = vdwg.mxu0
        %v2133 = vmul.f32 %v2128, 0.17677669
        %v2134 = vmul.f32 %v2133, %v1783
        %v2135 = vsub.f32 %v2134, %v1792
        %v2136 = vsel %vm1088, %v2135, -inf
        %2137 = vmax.xlane.f32.xlu0 %v2136
        %v2138 = vpop.xlane.xlu0 %2137
        %v2139 = vsub.f32 %v2135, %v2138
        %v2140 = vmul.f32 %v2139, 1.442695
        %v2141 = vpow.pop %v2140
        %v2142 = vsel %vm1088, %v2141, 0.0
        %2143 = vadd.xlane.f32.xlu0 %v2142
        %v2144 = vpop.xlane.xlu0 %2143
        %v2145 = vrcp.pop %v2144
        %v2146 = vmul.f32 %v2141, %v2145
        %v2147 = vpack.c.bf16 %v2146, %v2146
        %2148 = vrot.lane.b32.xlu0 %v1021, 64
        %v2149 = vpop.permute.xlu0 %2148
        %v2152 = vsel %vm1088, %v2147, 0
        %2154 = vmatprep.subr.bf16.mxu0 0
        %2155 = vmatpush1.bf16.msra.mxu0 %v2149
        %2156 = vmatprep.subr.bf16.mxu0 0
        %2157 = vmatpush1.bf16.msra.mxu0 0
        %2158 = vmatprep.subr.bf16.mxu0 0
        %2159 = vmatpush1.bf16.msra.mxu0 0
        %2160 = vmatprep.subr.bf16.mxu0 0
        %2161 = vmatpush1.bf16.msra.mxu0 0
        %2162 = vmatprep.subr.bf16.mxu0 0
        %2163 = vmatpush1.bf16.msra.mxu0 0
        %2164 = vmatprep.subr.bf16.mxu0 0
        %2165 = vmatpush1.bf16.msra.mxu0 0
        %2166 = vmatprep.subr.bf16.mxu0 0
        %2167 = vmatpush1.bf16.msra.mxu0 0
        %2168 = vmatprep.subr.bf16.mxu0 0
        %2169 = vmatpush1.bf16.msra.mxu0 0
        %2170 = vmatprep.subr.bf16.mxu0 0
        %2171 = vmatpush1.bf16.msra.mxu0 0
        %2172 = vmatprep.subr.bf16.mxu0 0
        %2173 = vmatpush1.bf16.msra.mxu0 0
        %2174 = vmatprep.subr.bf16.mxu0 0
        %2175 = vmatpush1.bf16.msra.mxu0 0
        %2176 = vmatprep.subr.bf16.mxu0 0
        %2177 = vmatpush1.bf16.msra.mxu0 0
        %2178 = vmatprep.subr.bf16.mxu0 0
        %2179 = vmatpush1.bf16.msra.mxu0 0
        %2180 = vmatprep.subr.bf16.mxu0 0
        %2181 = vmatpush1.bf16.msra.mxu0 0
        %2182 = vmatprep.subr.bf16.mxu0 0
        %2183 = vmatpush1.bf16.msra.mxu0 0
        %2184 = vmatprep.subr.bf16.mxu0 0
        %2185 = vmatpush1.bf16.msra.mxu0 0
        %2186 = vmatprep.mubr.bf16.mxu0 0
        %2187 = vmatmul.mubr.bf16.gmra.mrb[0].mxu0 %v2152
        %v2188 = vpop.f32.mrb[0].mxu0
        %v2189 = vadd.f32 0.0, %v2188
        %v2190 = vpop.f32.mrb[0].mxu0
        %v2191 = vpop.f32.mrb[0].mxu0
        %v2192 = vpop.f32.mrb[0].mxu0
        %2193 = vdwg.mxu0
        %v2194 = vpack.c.bf16 %v2189, %v2189
        %v2195 = vld [vmem:[#allocation11 + $0x20] sm:$0xf]
        %v2196 = vld [vmem:[#allocation11 + $0x24] sm:$0xf]
        %v2197 = vld [vmem:[#allocation11 + $0x28] sm:$0xf]
        %v2198 = vld [vmem:[#allocation11 + $0x2c] sm:$0xf]
        %v2203 = vunpack.c.l.b16 %v2195
        %v2204 = vunpack.c.l.b16 %v2196
        %v2205 = vunpack.c.l.b16 %v2197
        %v2206 = vunpack.c.l.b16 %v2198
        %v2207 = vpack.c.b16 %v2204, %v2203
        %v2208 = vpack.c.b16 %v2206, %v2205
        %v2212 = vsel %vm1024, %v2194, 0
        %2214 = vmatprep.subr.bf16.mxu0 0
        %2215 = vmatpush1.bf16.msra.mxu0 %v2207
        %2216 = vmatprep.subr.bf16.mxu0 0
        %2217 = vmatpush1.bf16.msra.mxu0 %v2208
        %2218 = vmatprep.subr.bf16.mxu0 0
        %2219 = vmatpush1.bf16.msra.mxu0 0
        %2220 = vmatprep.subr.bf16.mxu0 0
        %2221 = vmatpush1.bf16.msra.mxu0 0
        %2222 = vmatprep.subr.bf16.mxu0 0
        %2223 = vmatpush1.bf16.msra.mxu0 0
        %2224 = vmatprep.subr.bf16.mxu0 0
        %2225 = vmatpush1.bf16.msra.mxu0 0
        %2226 = vmatprep.subr.bf16.mxu0 0
        %2227 = vmatpush1.bf16.msra.mxu0 0
        %2228 = vmatprep.subr.bf16.mxu0 0
        %2229 = vmatpush1.bf16.msra.mxu0 0
        %2230 = vmatprep.subr.bf16.mxu0 0
        %2231 = vmatpush1.bf16.msra.mxu0 0
        %2232 = vmatprep.subr.bf16.mxu0 0
        %2233 = vmatpush1.bf16.msra.mxu0 0
        %2234 = vmatprep.subr.bf16.mxu0 0
        %2235 = vmatpush1.bf16.msra.mxu0 0
        %2236 = vmatprep.subr.bf16.mxu0 0
        %2237 = vmatpush1.bf16.msra.mxu0 0
        %2238 = vmatprep.subr.bf16.mxu0 0
        %2239 = vmatpush1.bf16.msra.mxu0 0
        %2240 = vmatprep.subr.bf16.mxu0 0
        %2241 = vmatpush1.bf16.msra.mxu0 0
        %2242 = vmatprep.subr.bf16.mxu0 0
        %2243 = vmatpush1.bf16.msra.mxu0 0
        %2244 = vmatprep.subr.bf16.mxu0 0
        %2245 = vmatpush1.bf16.msra.mxu0 0
        %2246 = vmatprep.mubr.bf16.mxu0 0
        %2247 = vmatmul.mubr.bf16.gmra.mrb[0].mxu0 %v2212
        %v2248 = vpop.f32.mrb[0].mxu0
        %v2249 = vadd.f32 0.0, %v2248
        %v2250 = vpop.f32.mrb[0].mxu0
        %v2251 = vpop.f32.mrb[0].mxu0
        %v2252 = vpop.f32.mrb[0].mxu0
        %2253 = vdwg.mxu0
        %v2254 = vadd.f32 %v2078, %v2249
        %2255 = vrot.lane.b32.xlu0 %v1731, 32
        %v2256 = vpop.permute.xlu0 %2255
        %2257 = vrot.lane.b32.xlu0 %v1019, 32
        %v2258 = vpop.permute.xlu0 %2257
        %v2260 = vsel %vm1024, %v2256, 0
        %v2263 = vsel %vm1024, %v2258, 0
        %2265 = vmatprep.subr.bf16.mxu0 0
        %2266 = vmatpush1.bf16.xpose.msra.mxu0 %v2263
        %2267 = vmatprep.subr.bf16.mxu0 0
        %2268 = vmatpush1.bf16.xpose.msra.mxu0 0
        %2269 = vmatprep.subr.bf16.mxu0 0
        %2270 = vmatpush1.bf16.xpose.msra.mxu0 0
        %2271 = vmatprep.subr.bf16.mxu0 0
        %2272 = vmatpush1.bf16.xpose.msra.mxu0 0
        %2273 = vmatprep.subr.bf16.mxu0 0
        %2274 = vmatpush1.bf16.xpose.msra.mxu0 0
        %2275 = vmatprep.subr.bf16.mxu0 0
        %2276 = vmatpush1.bf16.xpose.msra.mxu0 0
        %2277 = vmatprep.subr.bf16.mxu0 0
        %2278 = vmatpush1.bf16.xpose.msra.mxu0 0
        %2279 = vmatprep.subr.bf16.mxu0 0
        %2280 = vmatpush1.bf16.xpose.msra.mxu0 0
        %2281 = vmatprep.subr.bf16.mxu0 0
        %2282 = vmatpush1.bf16.xpose.msra.mxu0 0
        %2283 = vmatprep.subr.bf16.mxu0 0
        %2284 = vmatpush1.bf16.xpose.msra.mxu0 0
        %2285 = vmatprep.subr.bf16.mxu0 0
        %2286 = vmatpush1.bf16.xpose.msra.mxu0 0
        %2287 = vmatprep.subr.bf16.mxu0 0
        %2288 = vmatpush1.bf16.xpose.msra.mxu0 0
        %2289 = vmatprep.subr.bf16.mxu0 0
        %2290 = vmatpush1.bf16.xpose.msra.mxu0 0
        %2291 = vmatprep.subr.bf16.mxu0 0
        %2292 = vmatpush1.bf16.xpose.msra.mxu0 0
        %2293 = vmatprep.subr.bf16.mxu0 0
        %2294 = vmatpush1.bf16.xpose.msra.mxu0 0
        %2295 = vmatprep.subr.bf16.mxu0 0
        %2296 = vmatpush1.bf16.xpose.msra.mxu0 0
        %2297 = vmatprep.mubr.bf16.mxu0 0
        %2298 = vmatmul.mubr.bf16.gmra.mrb[0].mxu0 %v2260
        %v2299 = vpop.f32.mrb[0].mxu0
        %v2300 = vadd.f32 0.0, %v2299
        %v2301 = vpop.f32.mrb[0].mxu0
        %v2302 = vpop.f32.mrb[0].mxu0
        %v2303 = vpop.f32.mrb[0].mxu0
        %2304 = vdwg.mxu0
        %v2305 = vmul.f32 %v2300, 0.17677669
        %v2306 = vmul.f32 %v2305, %v1783
        %v2307 = vsub.f32 %v2306, %v1792
        %v2308 = vsel %vm1088, %v2307, -inf
        %2309 = vmax.xlane.f32.xlu0 %v2308
        %v2310 = vpop.xlane.xlu0 %2309
        %v2311 = vsub.f32 %v2307, %v2310
        %v2312 = vmul.f32 %v2311, 1.442695
        %v2313 = vpow.pop %v2312
        %v2314 = vsel %vm1088, %v2313, 0.0
        %2315 = vadd.xlane.f32.xlu0 %v2314
        %v2316 = vpop.xlane.xlu0 %2315
        %v2317 = vrcp.pop %v2316
        %v2318 = vmul.f32 %v2313, %v2317
        %v2319 = vpack.c.bf16 %v2318, %v2318
        %2320 = vrot.lane.b32.xlu0 %v1021, 32
        %v2321 = vpop.permute.xlu0 %2320
        %v2324 = vsel %vm1088, %v2319, 0
        %2326 = vmatprep.subr.bf16.mxu0 0
        %2327 = vmatpush1.bf16.msra.mxu0 %v2321
        %2328 = vmatprep.subr.bf16.mxu0 0
        %2329 = vmatpush1.bf16.msra.mxu0 0
        %2330 = vmatprep.subr.bf16.mxu0 0
        %2331 = vmatpush1.bf16.msra.mxu0 0
        %2332 = vmatprep.subr.bf16.mxu0 0
        %2333 = vmatpush1.bf16.msra.mxu0 0
        %2334 = vmatprep.subr.bf16.mxu0 0
        %2335 = vmatpush1.bf16.msra.mxu0 0
        %2336 = vmatprep.subr.bf16.mxu0 0
        %2337 = vmatpush1.bf16.msra.mxu0 0
        %2338 = vmatprep.subr.bf16.mxu0 0
        %2339 = vmatpush1.bf16.msra.mxu0 0
        %2340 = vmatprep.subr.bf16.mxu0 0
        %2341 = vmatpush1.bf16.msra.mxu0 0
        %2342 = vmatprep.subr.bf16.mxu0 0
        %2343 = vmatpush1.bf16.msra.mxu0 0
        %2344 = vmatprep.subr.bf16.mxu0 0
        %2345 = vmatpush1.bf16.msra.mxu0 0
        %2346 = vmatprep.subr.bf16.mxu0 0
        %2347 = vmatpush1.bf16.msra.mxu0 0
        %2348 = vmatprep.subr.bf16.mxu0 0
        %2349 = vmatpush1.bf16.msra.mxu0 0
        %2350 = vmatprep.subr.bf16.mxu0 0
        %2351 = vmatpush1.bf16.msra.mxu0 0
        %2352 = vmatprep.subr.bf16.mxu0 0
        %2353 = vmatpush1.bf16.msra.mxu0 0
        %2354 = vmatprep.subr.bf16.mxu0 0
        %2355 = vmatpush1.bf16.msra.mxu0 0
        %2356 = vmatprep.subr.bf16.mxu0 0
        %2357 = vmatpush1.bf16.msra.mxu0 0
        %2358 = vmatprep.mubr.bf16.mxu0 0
        %2359 = vmatmul.mubr.bf16.gmra.mrb[0].mxu0 %v2324
        %v2360 = vpop.f32.mrb[0].mxu0
        %v2361 = vadd.f32 0.0, %v2360
        %v2362 = vpop.f32.mrb[0].mxu0
        %v2363 = vpop.f32.mrb[0].mxu0
        %v2364 = vpop.f32.mrb[0].mxu0
        %2365 = vdwg.mxu0
        %v2366 = vpack.c.bf16 %v2361, %v2361
        %v2367 = vld [vmem:[#allocation11 + $0x30] sm:$0xf]
        %v2368 = vld [vmem:[#allocation11 + $0x34] sm:$0xf]
        %v2369 = vld [vmem:[#allocation11 + $0x38] sm:$0xf]
        %v2370 = vld [vmem:[#allocation11 + $0x3c] sm:$0xf]
        %v2375 = vunpack.c.l.b16 %v2367
        %v2376 = vunpack.c.l.b16 %v2368
        %v2377 = vunpack.c.l.b16 %v2369
        %v2378 = vunpack.c.l.b16 %v2370
        %v2379 = vpack.c.b16 %v2376, %v2375
        %v2380 = vpack.c.b16 %v2378, %v2377
        %v2384 = vsel %vm1024, %v2366, 0
        %2386 = vmatprep.subr.bf16.mxu0 0
        %2387 = vmatpush1.bf16.msra.mxu0 %v2379
        %2388 = vmatprep.subr.bf16.mxu0 0
        %2389 = vmatpush1.bf16.msra.mxu0 %v2380
        %2390 = vmatprep.subr.bf16.mxu0 0
        %2391 = vmatpush1.bf16.msra.mxu0 0
        %2392 = vmatprep.subr.bf16.mxu0 0
        %2393 = vmatpush1.bf16.msra.mxu0 0
        %2394 = vmatprep.subr.bf16.mxu0 0
        %2395 = vmatpush1.bf16.msra.mxu0 0
        %2396 = vmatprep.subr.bf16.mxu0 0
        %2397 = vmatpush1.bf16.msra.mxu0 0
        %2398 = vmatprep.subr.bf16.mxu0 0
        %2399 = vmatpush1.bf16.msra.mxu0 0
        %2400 = vmatprep.subr.bf16.mxu0 0
        %2401 = vmatpush1.bf16.msra.mxu0 0
        %2402 = vmatprep.subr.bf16.mxu0 0
        %2403 = vmatpush1.bf16.msra.mxu0 0
        %2404 = vmatprep.subr.bf16.mxu0 0
        %2405 = vmatpush1.bf16.msra.mxu0 0
        %2406 = vmatprep.subr.bf16.mxu0 0
        %2407 = vmatpush1.bf16.msra.mxu0 0
        %2408 = vmatprep.subr.bf16.mxu0 0
        %2409 = vmatpush1.bf16.msra.mxu0 0
        %2410 = vmatprep.subr.bf16.mxu0 0
        %2411 = vmatpush1.bf16.msra.mxu0 0
        %2412 = vmatprep.subr.bf16.mxu0 0
        %2413 = vmatpush1.bf16.msra.mxu0 0
        %2414 = vmatprep.subr.bf16.mxu0 0
        %2415 = vmatpush1.bf16.msra.mxu0 0
        %2416 = vmatprep.subr.bf16.mxu0 0
        %2417 = vmatpush1.bf16.msra.mxu0 0
        %2418 = vmatprep.mubr.bf16.mxu0 0
        %2419 = vmatmul.mubr.bf16.gmra.mrb[0].mxu0 %v2384
        %v2420 = vpop.f32.mrb[0].mxu0
        %v2421 = vadd.f32 0.0, %v2420
        %v2422 = vpop.f32.mrb[0].mxu0
        %v2423 = vpop.f32.mrb[0].mxu0
        %v2424 = vpop.f32.mrb[0].mxu0
        %2425 = vdwg.mxu0
        %v2426 = vadd.f32 %v2254, %v2421
        %v2427 = vld [vmem:[%s12] sm:$0x1]
        %v2429 = vlaneseq
        %v2430 = vshrl.u32 %v2429, 7
        %v2431 = vsub.s32 0, %v2430
        %v2432 = vrot.slane %v2427, %v2431
        %v2434 = vadd.f32 %v2426, %v2432
        %s2435 = scalar_lea.vmem %s571, 8 [#allocation13]
        %2436 = vst [vmem:[%s2435] sm:$0xff] %v2434
        %s2437 = sand.u32 %s331, 1
        %s2438 = scalar_lea.sflag [#allocation4], %s2437
        %s2439 = sand.u32 %s331, 1
        %s2440 = smul.addr %s2439, 16
        %s2441 = scalar_lea.vmem [#allocation13], %s2440
        // Predicated region
        $region97: #{tpu_custom_call.1} parent=71 // pred_check
          %p2442 = pneg %p341
        $region98: #{tpu_custom_call.1} parent=71 // pred_check_branch
          %2444 = sbr.rel (%p2442) target = $region100
        $region99: #{tpu_custom_call.1} parent=71 // pred_region
          %s2445 = smul.u32 2, %s35
          %s2447 = ssub.s32 256, 256
          %2448 = vsyncadd %s2438, %s2447
          %s2449 = smul.addr %s2445, 128
          %s2450 = scalar_lea.hbm %s13, %s2449
          %s2451 = sshll.u32 %s2441, 4
          %s2452 = int_to_ptr.vmem [resolvable:$true] %s2451
          %2457 = dma.vmem_to_hbm [thread:$0]  %s2452, 256, %s2450, %s2438, 128, 128, 8
        $region100: #{tpu_custom_call.1} parent=71 // pred_fallthru
          _
      $region72: #{tpu_custom_call.1} parent=5 // pred_fallthru
        _
      %p2458 = scmp.le.s32.totalorder 2, %s30
      // Predicated region
      $region101: #{tpu_custom_call.1} parent=5 // pred_check
        %p2459 = pneg %p2458
      $region102: #{tpu_custom_call.1} parent=5 // pred_check_branch
        %2461 = sbr.rel (%p2459) target = $region104
      $region103: #{tpu_custom_call.1} parent=5 // pred_region
        %s2462 = ssub.s32 %s30, 2
        // Predicated region
        $region105: #{tpu_custom_call.1} parent=103 // pred_check
          %p2463 = pneg %p347
        $region106: #{tpu_custom_call.1} parent=103 // pred_check_branch
          %2465 = sbr.rel (%p2463) target = $region108
        $region107: #{tpu_custom_call.1} parent=103 // pred_region
          %s2466 = sand.u32 %s332, 1
          %s2467 = scalar_lea.sflag [#allocation4], %s2466
          %s2468 = sand.u32 %s332, 1
          %s2469 = smul.addr %s2468, 16
          %s2470 = scalar_lea.vmem [#allocation13], %s2469
          %2471 = dma.done %s2467, 256
        $region108: #{tpu_custom_call.1} parent=103 // pred_fallthru
          _
      $region104: #{tpu_custom_call.1} parent=5 // pred_fallthru
        _
    $region6: #{tpu_custom_call.1} parent=1 // loop_footer
      %s34 = sadd.s32 1, %s30
    $region7: #{tpu_custom_call.1} parent=1 // loop_footer_branch
      %29 = sbr.rel target = $region3
    $region8: #{tpu_custom_call.1} parent=1 // loop_exit
      _
    %2472 = vsyncpa [#allocation3], 1
    %s2473 = scalar_lea.sflag [#allocation3], 1
    %2474 = vsyncpa %s2473, 1
    %2475 = vsyncpa [#allocation6], 1
    %s2476 = scalar_lea.sflag [#allocation6], 1
    %2477 = vsyncpa %s2476, 1
    %2478 = vsyncpa [#allocation9], 1
    %2479 = vsyncpa [#allocation12], 1
    %2480 = vsyncpa [#allocation4], 1
    %s2481 = scalar_lea.sflag [#allocation4], 1
    %2482 = vsyncpa %s2481, 1

</llo_original>
